<compile_context>
chip_gen: v7x
topology: tpu7x:2x2x1
jax: 0.10.0
libtpu: 0.0.40
codegen_flags: <defaults>
</compile_context>

<pallas_src>
import jax
import jax.numpy as jnp
from jax import lax
from jax.experimental import pallas as pl
from jax.experimental.pallas import tpu as pltpu

EPS = 1e-5  # PyTorch BatchNorm2d default eps


# ----------------------------- Pallas kernel --------------------------------

def _make_fused_block_kernel(NB, H, W, Cin, Cout, has_proj):
    """Fused pre-activation BasicBlock kernel for one batch tile of NB images."""
    P = NB * H * W

    def kernel(*refs):
        if has_proj:
            (x_ref, s1_ref, t1_ref, w1_ref, cb1_ref,
             s2_ref, t2_ref, w2_ref, cb2_ref, wsc_ref, bsc_ref,
             out_ref, pad1_ref, slab1_ref, pad2_ref, slab2_ref) = refs
        else:
            (x_ref, s1_ref, t1_ref, w1_ref, cb1_ref,
             s2_ref, t2_ref, w2_ref, cb2_ref,
             out_ref, pad1_ref, slab1_ref, pad2_ref, slab2_ref) = refs

        def conv3x3(y, pad_ref, slab_ref, w_ref, b_ref, C):
            """y: (NB, H, W, C) f32 post-(bn+relu) activations -> (P, Cout) f32."""
            # Zero only the 1-pixel halo (not the whole padded buffer).
            pad_ref[:, 0:1, :, :] = jnp.zeros((NB, 1, W + 2, C), jnp.float32)
            pad_ref[:, H + 1:H + 2, :, :] = jnp.zeros((NB, 1, W + 2, C), jnp.float32)
            pad_ref[:, :, 0:1, :] = jnp.zeros((NB, H + 2, 1, C), jnp.float32)
            pad_ref[:, :, W + 1:W + 2, :] = jnp.zeros((NB, H + 2, 1, C), jnp.float32)
            pad_ref[:, 1:H + 1, 1:W + 1, :] = y

            # Build the im2col slab once (bf16 for the MXU), then ONE matmul.
            for kh in range(3):
                for kw in range(3):
                    tap = kh * 3 + kw
                    slab_ref[:, :, :, tap * C:(tap + 1) * C] = (
                        pad_ref[:, kh:kh + H, kw:kw + W, :].astype(jnp.bfloat16))

            acc = jnp.dot(slab_ref[...].reshape(P, 9 * C), w_ref[...],
                          preferred_element_type=jnp.float32)
            return acc + b_ref[...]

        # ---- bn1 (folded, eval) + relu + conv1 (3x3, pad 1, stride 1) ----
        x = x_ref[...].astype(jnp.float32)
        y1 = jnp.maximum(x * s1_ref[...].reshape(1, 1, 1, Cin)
                         + t1_ref[...].reshape(1, 1, 1, Cin), 0.0)
        h = conv3x3(y1, pad1_ref, slab1_ref, w1_ref, cb1_ref, Cin)      # (P, Cout)

        # TODO(synk): F.dropout(p=0.3) is identity in eval mode; training-mode
        # dropout (pltpu.prng_seed / prng_random_bits) is not implemented here.

        # ---- bn2 (folded, eval) + relu + conv2 (3x3, pad 1, stride 1) ----
        h = h.reshape(NB, H, W, Cout)
        y2 = jnp.maximum(h * s2_ref[...].reshape(1, 1, 1, Cout)
                         + t2_ref[...].reshape(1, 1, 1, Cout), 0.0)
        acc = conv3x3(y2, pad2_ref, slab2_ref, w2_ref, cb2_ref, Cout)   # (P, Cout)

        # ---- shortcut (input_changer) ----
        if has_proj:
            sc = jnp.dot(x.reshape(P, Cin).astype(jnp.bfloat16), wsc_ref[...],
                         preferred_element_type=jnp.float32) + bsc_ref[...]
            acc = acc + sc
        else:
            acc = acc + x.reshape(P, Cout)  # identity shortcut: plain VPU add

        out_ref[...] = acc.reshape(NB, H, W, Cout).astype(out_ref.dtype)

    return kernel


# ----------------------------- wrapper (glue) --------------------------------

def basic_block_forward(x_nchw, p, *, batch_tile=1):
    """Eval-mode forward of BasicBlock. Input/output are NCHW (PyTorch convention).

    TODO(synk): stride > 1 variant not implemented in the Pallas path
    (module default stride=1).
    """
    N, Cin, H, W = x_nchw.shape
    Cout = p["w1"].shape[-1]
    has_proj = "wsc" in p  # trace-time branch: identity shortcut skips the matmul

    x = jnp.transpose(x_nchw, (0, 2, 3, 1))  # NCHW -> NHWC

    # Fold eval-mode BatchNorm (running stats) into per-channel scale/shift.
    s1 = p["g1"] / jnp.sqrt(p["v1"] + EPS)
    t1 = p["b1"] - p["m1"] * s1
    s2 = p["g2"] / jnp.sqrt(p["v2"] + EPS)
    t2 = p["b2"] - p["m2"] * s2

    # 3x3 weights as tap-major im2col matrices, bf16 for the MXU.
    w1 = p["w1"].reshape(9 * Cin, Cout).astype(jnp.bfloat16)
    w2 = p["w2"].reshape(9 * Cout, Cout).astype(jnp.bfloat16)

    NB = min(batch_tile, N)
    assert N % NB == 0, "batch_tile must divide the batch"
    grid = (N // NB,)

    img_map = lambda b: (b, 0, 0, 0)
    par_map = lambda b: (0, 0)

    in_arrays = [x,
                 s1.reshape(1, Cin), t1.reshape(1, Cin), w1, p["cb1"].reshape(1, Cout),
                 s2.reshape(1, Cout), t2.reshape(1, Cout), w2, p["cb2"].reshape(1, Cout)]
    in_specs = [pl.BlockSpec((NB, H, W, Cin), img_map),
                pl.BlockSpec((1, Cin), par_map), pl.BlockSpec((1, Cin), par_map),
                pl.BlockSpec((9 * Cin, Cout), par_map), pl.BlockSpec((1, Cout), par_map),
                pl.BlockSpec((1, Cout), par_map), pl.BlockSpec((1, Cout), par_map),
                pl.BlockSpec((9 * Cout, Cout), par_map), pl.BlockSpec((1, Cout), par_map)]
    if has_proj:
        in_arrays += [p["wsc"].astype(jnp.bfloat16), p["bsc"].reshape(1, Cout)]
        in_specs += [pl.BlockSpec((Cin, Cout), par_map), pl.BlockSpec((1, Cout), par_map)]

    kernel = _make_fused_block_kernel(NB, H, W, Cin, Cout, has_proj)

    # Per grid step the live VMEM is: input tile + output tile (double-buffered
    # by Pallas) + two padded f32 buffers + two bf16 im2col slabs.  batch_tile
    # is the knob to keep this inside 64 MiB on v7x (larger tiles OK on v5e/v6e).
    out = pl.pallas_call(
        kernel,
        out_shape=jax.ShapeDtypeStruct((N, H, W, Cout), jnp.float32),
        grid_spec=pltpu.PrefetchScalarGridSpec(
            num_scalar_prefetch=0,
            grid=grid,
            in_specs=in_specs,
            out_specs=pl.BlockSpec((NB, H, W, Cout), img_map),
            scratch_shapes=[
                pltpu.VMEM((NB, H + 2, W + 2, Cin), jnp.float32),   # pad1
                pltpu.VMEM((NB, H, W, 9 * Cin), jnp.bfloat16),      # im2col slab 1
                pltpu.VMEM((NB, H + 2, W + 2, Cout), jnp.float32),  # pad2
                pltpu.VMEM((NB, H, W, 9 * Cout), jnp.bfloat16),     # im2col slab 2
            ]),
        compiler_params=pltpu.CompilerParams(
            dimension_semantics=("parallel",),   # batch tiles shard across v7x's 2 TCs
            vmem_limit_bytes=32 * 1024 * 1024),
    )(*in_arrays)

    return jnp.transpose(out, (0, 3, 1, 2))  # NHWC -> NCHW


# ----------------------------- params & reference ----------------------------

def init_params(key, cin, cout, stride=1):
    ks = jax.random.split(key, 12)
    p = {
        # bn1 (over in_channels)
        "g1": jax.random.uniform(ks[0], (cin,), jnp.float32, 0.5, 1.5),
        "b1": 0.1 * jax.random.normal(ks[1], (cin,), jnp.float32),
        "m1": 0.1 * jax.random.normal(ks[2], (cin,), jnp.float32),
        "v1": jax.random.uniform(ks[3], (cin,), jnp.float32, 0.5, 1.5),
        # conv1: 3x3, cin -> cout  (stored HWIO)
        "w1": jax.random.normal(ks[4], (3, 3, cin, cout), jnp.float32) / jnp.sqrt(9.0 * cin),
        "cb1": 0.1 * jax.random.normal(ks[5], (cout,), jnp.float32),
        # bn2 (over out_channels)
        "g2": jax.random.uniform(ks[6], (cout,), jnp.float32, 0.5, 1.5),
        "b2": 0.1 * jax.random.normal(ks[7], (cout,), jnp.float32),
        "m2": 0.1 * jax.random.normal(ks[8], (cout,), jnp.float32),
        "v2": jax.random.uniform(ks[9], (cout,), jnp.float32, 0.5, 1.5),
        # conv2: 3x3, cout -> cout
        "w2": jax.random.normal(ks[10], (3, 3, cout, cout), jnp.float32) / jnp.sqrt(9.0 * cout),
        "cb2": 0.1 * jax.random.normal(ks[11], (cout,), jnp.float32),
    }
    if stride != 1 or cin != cout:
        ksc = jax.random.split(ks[11], 2)
        p["wsc"] = jax.random.normal(ksc[0], (cin, cout), jnp.float32) / jnp.sqrt(float(cin))
        p["bsc"] = 0.1 * jax.random.normal(ksc[1], (cout,), jnp.float32)
    # identity shortcut: no "wsc"/"bsc" entries -> kernel emits a plain add
    return p


def ref_basic_block(x, p):
    """Pure-JAX (XLA, f32) reference, NCHW, eval-mode."""
    def bn(x, g, b, m, v):
        s = g / jnp.sqrt(v + EPS)
        return x * s[None, :, None, None] + (b - m * s)[None, :, None, None]

    def conv(x, w_hwio, b, pad):
        w_oihw = jnp.transpose(w_hwio, (3, 2, 0, 1))
        y = lax.conv_general_dilated(x, w_oihw, (1, 1), [(pad, pad), (pad, pad)],
                                     dimension_numbers=("NCHW", "OIHW", "NCHW"))
        return y + b[None, :, None, None]

    y = conv(jax.nn.relu(bn(x, p["g1"], p["b1"], p["m1"], p["v1"])), p["w1"], p["cb1"], 1)
    y = conv(jax.nn.relu(bn(y, p["g2"], p["b2"], p["m2"], p["v2"])), p["w2"], p["cb2"], 1)
    if "wsc" in p:
        sc = conv(x, p["wsc"].reshape(1, 1, *p["wsc"].shape), p["bsc"], 0)
    else:
        sc = x
    return y + sc


# ---------------------------------- main --------------------------------------

if __name__ == "__main__":
    key = jax.random.PRNGKey(0)
    kx, kp = jax.random.split(key)

    N, Cin, H, W = 2, 4, 16, 16
    Cout = 8  # in_channels != out_channels -> input_changer is a 1x1 conv

    x = jax.random.normal(kx, (N, Cin, H, W), jnp.float32)  # NCHW, like PyTorch
    params = init_params(kp, Cin, Cout, stride=1)

    out = jax.block_until_ready(basic_block_forward(x, params))

    ref = ref_basic_block(x, params)
    assert out.shape == (N, Cout, H, W), out.shape
    max_err = float(jnp.max(jnp.abs(out - ref)))
    # bf16 MXU operands with f32 accumulation -> looser tolerance than pure f32.
    assert max_err < 5e-2, f"mismatch vs reference: {max_err}"

    print("KERNEL_OK")
</pallas_src>

<mosaic_0001>
module attributes {stable_mosaic.version = 11 : i64} {
  func.func @kernel(%arg0: i32, %arg1: memref<1x16x16x4xf32, #tpu.memory_space<vmem>>, %arg2: memref<1x4xf32, #tpu.memory_space<vmem>>, %arg3: memref<1x4xf32, #tpu.memory_space<vmem>>, %arg4: memref<36x8xbf16, #tpu.memory_space<vmem>>, %arg5: memref<1x8xf32, #tpu.memory_space<vmem>>, %arg6: memref<1x8xf32, #tpu.memory_space<vmem>>, %arg7: memref<1x8xf32, #tpu.memory_space<vmem>>, %arg8: memref<72x8xbf16, #tpu.memory_space<vmem>>, %arg9: memref<1x8xf32, #tpu.memory_space<vmem>>, %arg10: memref<4x8xbf16, #tpu.memory_space<vmem>>, %arg11: memref<1x8xf32, #tpu.memory_space<vmem>>, %arg12: memref<1x16x16x8xf32, #tpu.memory_space<vmem>>, %arg13: memref<1x18x18x4xf32, #tpu.memory_space<vmem>>, %arg14: memref<1x16x16x36xbf16, #tpu.memory_space<vmem>>, %arg15: memref<1x18x18x8xf32, #tpu.memory_space<vmem>>, %arg16: memref<1x16x16x72xbf16, #tpu.memory_space<vmem>>) attributes {dimension_semantics = [#tpu.dimension_semantics<parallel>], iteration_bounds = array<i64: 2>, scalar_prefetch = 0 : i64, scratch_operands = 4 : i64, tpu.core_type = #tpu.core_type<tc>, window_params = [{transform_indices = @transform_0, window_bounds = array<i64: 1, 16, 16, 4>}, {pipeline_mode = #tpu.pipeline_mode<synchronous>, transform_indices = @transform_1, window_bounds = array<i64: 1, 4>}, {pipeline_mode = #tpu.pipeline_mode<synchronous>, transform_indices = @transform_2, window_bounds = array<i64: 1, 4>}, {pipeline_mode = #tpu.pipeline_mode<synchronous>, transform_indices = @transform_3, window_bounds = array<i64: 36, 8>}, {pipeline_mode = #tpu.pipeline_mode<synchronous>, transform_indices = @transform_4, window_bounds = array<i64: 1, 8>}, {pipeline_mode = #tpu.pipeline_mode<synchronous>, transform_indices = @transform_5, window_bounds = array<i64: 1, 8>}, {pipeline_mode = #tpu.pipeline_mode<synchronous>, transform_indices = @transform_6, window_bounds = array<i64: 1, 8>}, {pipeline_mode = #tpu.pipeline_mode<synchronous>, transform_indices = @transform_7, window_bounds = array<i64: 72, 8>}, {pipeline_mode = #tpu.pipeline_mode<synchronous>, transform_indices = @transform_8, window_bounds = array<i64: 1, 8>}, {pipeline_mode = #tpu.pipeline_mode<synchronous>, transform_indices = @transform_9, window_bounds = array<i64: 4, 8>}, {pipeline_mode = #tpu.pipeline_mode<synchronous>, transform_indices = @transform_10, window_bounds = array<i64: 1, 8>}, {transform_indices = @transform_11, window_bounds = array<i64: 1, 16, 16, 8>}]} {
    %c0 = arith.constant 0 : index
    %c0_0 = arith.constant 0 : index
    %c0_1 = arith.constant 0 : index
    %c0_2 = arith.constant 0 : index
    %0 = vector.load %arg1[%c0, %c0_0, %c0_1, %c0_2] : memref<1x16x16x4xf32, #tpu.memory_space<vmem>>, vector<1x16x16x4xf32>
    %c0_3 = arith.constant 0 : index
    %c0_4 = arith.constant 0 : index
    %1 = vector.load %arg2[%c0_3, %c0_4] : memref<1x4xf32, #tpu.memory_space<vmem>>, vector<1x4xf32>
    %2 = vector.shape_cast %1 : vector<1x4xf32> to vector<1x1x1x4xf32>
    %3 = vector.broadcast %2 : vector<1x1x1x4xf32> to vector<1x16x16x4xf32>
    %4 = arith.mulf %0, %3 : vector<1x16x16x4xf32>
    %c0_5 = arith.constant 0 : index
    %c0_6 = arith.constant 0 : index
    %5 = vector.load %arg3[%c0_5, %c0_6] : memref<1x4xf32, #tpu.memory_space<vmem>>, vector<1x4xf32>
    %6 = vector.shape_cast %5 : vector<1x4xf32> to vector<1x1x1x4xf32>
    %7 = vector.broadcast %6 : vector<1x1x1x4xf32> to vector<1x16x16x4xf32>
    %8 = arith.addf %4, %7 : vector<1x16x16x4xf32>
    %cst = arith.constant 0.000000e+00 : f32
    %9 = vector.broadcast %cst : f32 to vector<1x16x16x4xf32>
    %10 = arith.maximumf %8, %9 : vector<1x16x16x4xf32>
    %cst_7 = arith.constant 0.000000e+00 : f32
    %11 = vector.broadcast %cst_7 : f32 to vector<1x1x18x4xf32>
    %c0_8 = arith.constant 0 : index
    %c0_9 = arith.constant 0 : index
    %c0_10 = arith.constant 0 : index
    %c0_11 = arith.constant 0 : index
    %12 = vector.load %arg13[%c0_8, %c0_9, %c0_10, %c0_11] : memref<1x18x18x4xf32, #tpu.memory_space<vmem>>, vector<1x1x18x4xf32>
    tpu.vector_store %arg13[%c0_8, %c0_9, %c0_10, %c0_11], %11 {strides = array<i32>} : memref<1x18x18x4xf32, #tpu.memory_space<vmem>>, vector<1x1x18x4xf32>,
    %cst_12 = arith.constant 0.000000e+00 : f32
    %13 = vector.broadcast %cst_12 : f32 to vector<1x1x18x4xf32>
    %c0_13 = arith.constant 0 : index
    %c17 = arith.constant 17 : index
    %c0_14 = arith.constant 0 : index
    %c0_15 = arith.constant 0 : index
    %14 = vector.load %arg13[%c0_13, %c17, %c0_14, %c0_15] : memref<1x18x18x4xf32, #tpu.memory_space<vmem>>, vector<1x1x18x4xf32>
    tpu.vector_store %arg13[%c0_13, %c17, %c0_14, %c0_15], %13 {strides = array<i32>} : memref<1x18x18x4xf32, #tpu.memory_space<vmem>>, vector<1x1x18x4xf32>,
    %cst_16 = arith.constant 0.000000e+00 : f32
    %15 = vector.broadcast %cst_16 : f32 to vector<1x18x1x4xf32>
    %c0_17 = arith.constant 0 : index
    %c0_18 = arith.constant 0 : index
    %c0_19 = arith.constant 0 : index
    %c0_20 = arith.constant 0 : index
    %16 = vector.load %arg13[%c0_17, %c0_18, %c0_19, %c0_20] : memref<1x18x18x4xf32, #tpu.memory_space<vmem>>, vector<1x18x1x4xf32>
    tpu.vector_store %arg13[%c0_17, %c0_18, %c0_19, %c0_20], %15 {strides = array<i32>} : memref<1x18x18x4xf32, #tpu.memory_space<vmem>>, vector<1x18x1x4xf32>,
    %cst_21 = arith.constant 0.000000e+00 : f32
    %17 = vector.broadcast %cst_21 : f32 to vector<1x18x1x4xf32>
    %c0_22 = arith.constant 0 : index
    %c0_23 = arith.constant 0 : index
    %c17_24 = arith.constant 17 : index
    %c0_25 = arith.constant 0 : index
    %18 = vector.load %arg13[%c0_22, %c0_23, %c17_24, %c0_25] : memref<1x18x18x4xf32, #tpu.memory_space<vmem>>, vector<1x18x1x4xf32>
    tpu.vector_store %arg13[%c0_22, %c0_23, %c17_24, %c0_25], %17 {strides = array<i32>} : memref<1x18x18x4xf32, #tpu.memory_space<vmem>>, vector<1x18x1x4xf32>,
    %c0_26 = arith.constant 0 : index
    %c1 = arith.constant 1 : index
    %c1_27 = arith.constant 1 : index
    %c0_28 = arith.constant 0 : index
    %19 = vector.load %arg13[%c0_26, %c1, %c1_27, %c0_28] : memref<1x18x18x4xf32, #tpu.memory_space<vmem>>, vector<1x16x16x4xf32>
    tpu.vector_store %arg13[%c0_26, %c1, %c1_27, %c0_28], %10 {strides = array<i32>} : memref<1x18x18x4xf32, #tpu.memory_space<vmem>>, vector<1x16x16x4xf32>,
    %c0_29 = arith.constant 0 : index
    %c0_30 = arith.constant 0 : index
    %c0_31 = arith.constant 0 : index
    %c0_32 = arith.constant 0 : index
    %20 = vector.load %arg13[%c0_29, %c0_30, %c0_31, %c0_32] : memref<1x18x18x4xf32, #tpu.memory_space<vmem>>, vector<1x16x16x4xf32>
    %21 = arith.truncf %20 : vector<1x16x16x4xf32> to vector<1x16x16x4xbf16>
    %c0_33 = arith.constant 0 : index
    %c0_34 = arith.constant 0 : index
    %c0_35 = arith.constant 0 : index
    %c0_36 = arith.constant 0 : index
    %22 = vector.load %arg14[%c0_33, %c0_34, %c0_35, %c0_36] : memref<1x16x16x36xbf16, #tpu.memory_space<vmem>>, vector<1x16x16x4xbf16>
    tpu.vector_store %arg14[%c0_33, %c0_34, %c0_35, %c0_36], %21 {strides = array<i32>} : memref<1x16x16x36xbf16, #tpu.memory_space<vmem>>, vector<1x16x16x4xbf16>,
    %c0_37 = arith.constant 0 : index
    %c0_38 = arith.constant 0 : index
    %c1_39 = arith.constant 1 : index
    %c0_40 = arith.constant 0 : index
    %23 = vector.load %arg13[%c0_37, %c0_38, %c1_39, %c0_40] : memref<1x18x18x4xf32, #tpu.memory_space<vmem>>, vector<1x16x16x4xf32>
    %24 = arith.truncf %23 : vector<1x16x16x4xf32> to vector<1x16x16x4xbf16>
    %c0_41 = arith.constant 0 : index
    %c0_42 = arith.constant 0 : index
    %c0_43 = arith.constant 0 : index
    %c4 = arith.constant 4 : index
    %25 = vector.load %arg14[%c0_41, %c0_42, %c0_43, %c4] : memref<1x16x16x36xbf16, #tpu.memory_space<vmem>>, vector<1x16x16x4xbf16>
    tpu.vector_store %arg14[%c0_41, %c0_42, %c0_43, %c4], %24 {strides = array<i32>} : memref<1x16x16x36xbf16, #tpu.memory_space<vmem>>, vector<1x16x16x4xbf16>,
    %c0_44 = arith.constant 0 : index
    %c0_45 = arith.constant 0 : index
    %c2 = arith.constant 2 : index
    %c0_46 = arith.constant 0 : index
    %26 = vector.load %arg13[%c0_44, %c0_45, %c2, %c0_46] : memref<1x18x18x4xf32, #tpu.memory_space<vmem>>, vector<1x16x16x4xf32>
    %27 = arith.truncf %26 : vector<1x16x16x4xf32> to vector<1x16x16x4xbf16>
    %c0_47 = arith.constant 0 : index
    %c0_48 = arith.constant 0 : index
    %c0_49 = arith.constant 0 : index
    %c8 = arith.constant 8 : index
    %28 = vector.load %arg14[%c0_47, %c0_48, %c0_49, %c8] : memref<1x16x16x36xbf16, #tpu.memory_space<vmem>>, vector<1x16x16x4xbf16>
    tpu.vector_store %arg14[%c0_47, %c0_48, %c0_49, %c8], %27 {strides = array<i32>} : memref<1x16x16x36xbf16, #tpu.memory_space<vmem>>, vector<1x16x16x4xbf16>,
    %c0_50 = arith.constant 0 : index
    %c1_51 = arith.constant 1 : index
    %c0_52 = arith.constant 0 : index
    %c0_53 = arith.constant 0 : index
    %29 = vector.load %arg13[%c0_50, %c1_51, %c0_52, %c0_53] : memref<1x18x18x4xf32, #tpu.memory_space<vmem>>, vector<1x16x16x4xf32>
    %30 = arith.truncf %29 : vector<1x16x16x4xf32> to vector<1x16x16x4xbf16>
    %c0_54 = arith.constant 0 : index
    %c0_55 = arith.constant 0 : index
    %c0_56 = arith.constant 0 : index
    %c12 = arith.constant 12 : index
    %31 = vector.load %arg14[%c0_54, %c0_55, %c0_56, %c12] : memref<1x16x16x36xbf16, #tpu.memory_space<vmem>>, vector<1x16x16x4xbf16>
    tpu.vector_store %arg14[%c0_54, %c0_55, %c0_56, %c12], %30 {strides = array<i32>} : memref<1x16x16x36xbf16, #tpu.memory_space<vmem>>, vector<1x16x16x4xbf16>,
    %c0_57 = arith.constant 0 : index
    %c1_58 = arith.constant 1 : index
    %c1_59 = arith.constant 1 : index
    %c0_60 = arith.constant 0 : index
    %32 = vector.load %arg13[%c0_57, %c1_58, %c1_59, %c0_60] : memref<1x18x18x4xf32, #tpu.memory_space<vmem>>, vector<1x16x16x4xf32>
    %33 = arith.truncf %32 : vector<1x16x16x4xf32> to vector<1x16x16x4xbf16>
    %c0_61 = arith.constant 0 : index
    %c0_62 = arith.constant 0 : index
    %c0_63 = arith.constant 0 : index
    %c16 = arith.constant 16 : index
    %34 = vector.load %arg14[%c0_61, %c0_62, %c0_63, %c16] : memref<1x16x16x36xbf16, #tpu.memory_space<vmem>>, vector<1x16x16x4xbf16>
    tpu.vector_store %arg14[%c0_61, %c0_62, %c0_63, %c16], %33 {strides = array<i32>} : memref<1x16x16x36xbf16, #tpu.memory_space<vmem>>, vector<1x16x16x4xbf16>,
    %c0_64 = arith.constant 0 : index
    %c1_65 = arith.constant 1 : index
    %c2_66 = arith.constant 2 : index
    %c0_67 = arith.constant 0 : index
    %35 = vector.load %arg13[%c0_64, %c1_65, %c2_66, %c0_67] : memref<1x18x18x4xf32, #tpu.memory_space<vmem>>, vector<1x16x16x4xf32>
    %36 = arith.truncf %35 : vector<1x16x16x4xf32> to vector<1x16x16x4xbf16>
    %c0_68 = arith.constant 0 : index
    %c0_69 = arith.constant 0 : index
    %c0_70 = arith.constant 0 : index
    %c20 = arith.constant 20 : index
    %37 = vector.load %arg14[%c0_68, %c0_69, %c0_70, %c20] : memref<1x16x16x36xbf16, #tpu.memory_space<vmem>>, vector<1x16x16x4xbf16>
    tpu.vector_store %arg14[%c0_68, %c0_69, %c0_70, %c20], %36 {strides = array<i32>} : memref<1x16x16x36xbf16, #tpu.memory_space<vmem>>, vector<1x16x16x4xbf16>,
    %c0_71 = arith.constant 0 : index
    %c2_72 = arith.constant 2 : index
    %c0_73 = arith.constant 0 : index
    %c0_74 = arith.constant 0 : index
    %38 = vector.load %arg13[%c0_71, %c2_72, %c0_73, %c0_74] : memref<1x18x18x4xf32, #tpu.memory_space<vmem>>, vector<1x16x16x4xf32>
    %39 = arith.truncf %38 : vector<1x16x16x4xf32> to vector<1x16x16x4xbf16>
    %c0_75 = arith.constant 0 : index
    %c0_76 = arith.constant 0 : index
    %c0_77 = arith.constant 0 : index
    %c24 = arith.constant 24 : index
    %40 = vector.load %arg14[%c0_75, %c0_76, %c0_77, %c24] : memref<1x16x16x36xbf16, #tpu.memory_space<vmem>>, vector<1x16x16x4xbf16>
    tpu.vector_store %arg14[%c0_75, %c0_76, %c0_77, %c24], %39 {strides = array<i32>} : memref<1x16x16x36xbf16, #tpu.memory_space<vmem>>, vector<1x16x16x4xbf16>,
    %c0_78 = arith.constant 0 : index
    %c2_79 = arith.constant 2 : index
    %c1_80 = arith.constant 1 : index
    %c0_81 = arith.constant 0 : index
    %41 = vector.load %arg13[%c0_78, %c2_79, %c1_80, %c0_81] : memref<1x18x18x4xf32, #tpu.memory_space<vmem>>, vector<1x16x16x4xf32>
    %42 = arith.truncf %41 : vector<1x16x16x4xf32> to vector<1x16x16x4xbf16>
    %c0_82 = arith.constant 0 : index
    %c0_83 = arith.constant 0 : index
    %c0_84 = arith.constant 0 : index
    %c28 = arith.constant 28 : index
    %43 = vector.load %arg14[%c0_82, %c0_83, %c0_84, %c28] : memref<1x16x16x36xbf16, #tpu.memory_space<vmem>>, vector<1x16x16x4xbf16>
    tpu.vector_store %arg14[%c0_82, %c0_83, %c0_84, %c28], %42 {strides = array<i32>} : memref<1x16x16x36xbf16, #tpu.memory_space<vmem>>, vector<1x16x16x4xbf16>,
    %c0_85 = arith.constant 0 : index
    %c2_86 = arith.constant 2 : index
    %c2_87 = arith.constant 2 : index
    %c0_88 = arith.constant 0 : index
    %44 = vector.load %arg13[%c0_85, %c2_86, %c2_87, %c0_88] : memref<1x18x18x4xf32, #tpu.memory_space<vmem>>, vector<1x16x16x4xf32>
    %45 = arith.truncf %44 : vector<1x16x16x4xf32> to vector<1x16x16x4xbf16>
    %c0_89 = arith.constant 0 : index
    %c0_90 = arith.constant 0 : index
    %c0_91 = arith.constant 0 : index
    %c32 = arith.constant 32 : index
    %46 = vector.load %arg14[%c0_89, %c0_90, %c0_91, %c32] : memref<1x16x16x36xbf16, #tpu.memory_space<vmem>>, vector<1x16x16x4xbf16>
    tpu.vector_store %arg14[%c0_89, %c0_90, %c0_91, %c32], %45 {strides = array<i32>} : memref<1x16x16x36xbf16, #tpu.memory_space<vmem>>, vector<1x16x16x4xbf16>,
    %c0_92 = arith.constant 0 : index
    %c0_93 = arith.constant 0 : index
    %c0_94 = arith.constant 0 : index
    %c0_95 = arith.constant 0 : index
    %47 = vector.load %arg14[%c0_92, %c0_93, %c0_94, %c0_95] : memref<1x16x16x36xbf16, #tpu.memory_space<vmem>>, vector<1x16x16x36xbf16>
    %48 = vector.shape_cast %47 : vector<1x16x16x36xbf16> to vector<256x36xbf16>
    %c0_96 = arith.constant 0 : index
    %c0_97 = arith.constant 0 : index
    %49 = vector.load %arg4[%c0_96, %c0_97] : memref<36x8xbf16, #tpu.memory_space<vmem>>, vector<36x8xbf16>
    %cst_98 = arith.constant dense<0.000000e+00> : vector<256x8xf32>
    %50 = tpu.matmul %48, %49, %cst_98 {dimension_numbers = #tpu.dot_dimension_numbers<[1], [0], [0], [1], [0, 0, 1, 1], [], []>} : vector<256x36xbf16>, vector<36x8xbf16>, vector<256x8xf32> -> vector<256x8xf32>
    %c0_99 = arith.constant 0 : index
    %c0_100 = arith.constant 0 : index
    %51 = vector.load %arg5[%c0_99, %c0_100] : memref<1x8xf32, #tpu.memory_space<vmem>>, vector<1x8xf32>
    %52 = vector.broadcast %51 : vector<1x8xf32> to vector<256x8xf32>
    %53 = arith.addf %50, %52 : vector<256x8xf32>
    %54 = vector.shape_cast %53 : vector<256x8xf32> to vector<1x16x16x8xf32>
    %c0_101 = arith.constant 0 : index
    %c0_102 = arith.constant 0 : index
    %55 = vector.load %arg6[%c0_101, %c0_102] : memref<1x8xf32, #tpu.memory_space<vmem>>, vector<1x8xf32>
    %56 = vector.shape_cast %55 : vector<1x8xf32> to vector<1x1x1x8xf32>
    %57 = vector.broadcast %56 : vector<1x1x1x8xf32> to vector<1x16x16x8xf32>
    %58 = arith.mulf %54, %57 : vector<1x16x16x8xf32>
    %c0_103 = arith.constant 0 : index
    %c0_104 = arith.constant 0 : index
    %59 = vector.load %arg7[%c0_103, %c0_104] : memref<1x8xf32, #tpu.memory_space<vmem>>, vector<1x8xf32>
    %60 = vector.shape_cast %59 : vector<1x8xf32> to vector<1x1x1x8xf32>
    %61 = vector.broadcast %60 : vector<1x1x1x8xf32> to vector<1x16x16x8xf32>
    %62 = arith.addf %58, %61 : vector<1x16x16x8xf32>
    %cst_105 = arith.constant 0.000000e+00 : f32
    %63 = vector.broadcast %cst_105 : f32 to vector<1x16x16x8xf32>
    %64 = arith.maximumf %62, %63 : vector<1x16x16x8xf32>
    %cst_106 = arith.constant 0.000000e+00 : f32
    %65 = vector.broadcast %cst_106 : f32 to vector<1x1x18x8xf32>
    %c0_107 = arith.constant 0 : index
    %c0_108 = arith.constant 0 : index
    %c0_109 = arith.constant 0 : index
    %c0_110 = arith.constant 0 : index
    %66 = vector.load %arg15[%c0_107, %c0_108, %c0_109, %c0_110] : memref<1x18x18x8xf32, #tpu.memory_space<vmem>>, vector<1x1x18x8xf32>
    tpu.vector_store %arg15[%c0_107, %c0_108, %c0_109, %c0_110], %65 {strides = array<i32>} : memref<1x18x18x8xf32, #tpu.memory_space<vmem>>, vector<1x1x18x8xf32>,
    %cst_111 = arith.constant 0.000000e+00 : f32
    %67 = vector.broadcast %cst_111 : f32 to vector<1x1x18x8xf32>
    %c0_112 = arith.constant 0 : index
    %c17_113 = arith.constant 17 : index
    %c0_114 = arith.constant 0 : index
    %c0_115 = arith.constant 0 : index
    %68 = vector.load %arg15[%c0_112, %c17_113, %c0_114, %c0_115] : memref<1x18x18x8xf32, #tpu.memory_space<vmem>>, vector<1x1x18x8xf32>
    tpu.vector_store %arg15[%c0_112, %c17_113, %c0_114, %c0_115], %67 {strides = array<i32>} : memref<1x18x18x8xf32, #tpu.memory_space<vmem>>, vector<1x1x18x8xf32>,
    %cst_116 = arith.constant 0.000000e+00 : f32
    %69 = vector.broadcast %cst_116 : f32 to vector<1x18x1x8xf32>
    %c0_117 = arith.constant 0 : index
    %c0_118 = arith.constant 0 : index
    %c0_119 = arith.constant 0 : index
    %c0_120 = arith.constant 0 : index
    %70 = vector.load %arg15[%c0_117, %c0_118, %c0_119, %c0_120] : memref<1x18x18x8xf32, #tpu.memory_space<vmem>>, vector<1x18x1x8xf32>
    tpu.vector_store %arg15[%c0_117, %c0_118, %c0_119, %c0_120], %69 {strides = array<i32>} : memref<1x18x18x8xf32, #tpu.memory_space<vmem>>, vector<1x18x1x8xf32>,
    %cst_121 = arith.constant 0.000000e+00 : f32
    %71 = vector.broadcast %cst_121 : f32 to vector<1x18x1x8xf32>
    %c0_122 = arith.constant 0 : index
    %c0_123 = arith.constant 0 : index
    %c17_124 = arith.constant 17 : index
    %c0_125 = arith.constant 0 : index
    %72 = vector.load %arg15[%c0_122, %c0_123, %c17_124, %c0_125] : memref<1x18x18x8xf32, #tpu.memory_space<vmem>>, vector<1x18x1x8xf32>
    tpu.vector_store %arg15[%c0_122, %c0_123, %c17_124, %c0_125], %71 {strides = array<i32>} : memref<1x18x18x8xf32, #tpu.memory_space<vmem>>, vector<1x18x1x8xf32>,
    %c0_126 = arith.constant 0 : index
    %c1_127 = arith.constant 1 : index
    %c1_128 = arith.constant 1 : index
    %c0_129 = arith.constant 0 : index
    %73 = vector.load %arg15[%c0_126, %c1_127, %c1_128, %c0_129] : memref<1x18x18x8xf32, #tpu.memory_space<vmem>>, vector<1x16x16x8xf32>
    tpu.vector_store %arg15[%c0_126, %c1_127, %c1_128, %c0_129], %64 {strides = array<i32>} : memref<1x18x18x8xf32, #tpu.memory_space<vmem>>, vector<1x16x16x8xf32>,
    %c0_130 = arith.constant 0 : index
    %c0_131 = arith.constant 0 : index
    %c0_132 = arith.constant 0 : index
    %c0_133 = arith.constant 0 : index
    %74 = vector.load %arg15[%c0_130, %c0_131, %c0_132, %c0_133] : memref<1x18x18x8xf32, #tpu.memory_space<vmem>>, vector<1x16x16x8xf32>
    %75 = arith.truncf %74 : vector<1x16x16x8xf32> to vector<1x16x16x8xbf16>
    %c0_134 = arith.constant 0 : index
    %c0_135 = arith.constant 0 : index
    %c0_136 = arith.constant 0 : index
    %c0_137 = arith.constant 0 : index
    %76 = vector.load %arg16[%c0_134, %c0_135, %c0_136, %c0_137] : memref<1x16x16x72xbf16, #tpu.memory_space<vmem>>, vector<1x16x16x8xbf16>
    tpu.vector_store %arg16[%c0_134, %c0_135, %c0_136, %c0_137], %75 {strides = array<i32>} : memref<1x16x16x72xbf16, #tpu.memory_space<vmem>>, vector<1x16x16x8xbf16>,
    %c0_138 = arith.constant 0 : index
    %c0_139 = arith.constant 0 : index
    %c1_140 = arith.constant 1 : index
    %c0_141 = arith.constant 0 : index
    %77 = vector.load %arg15[%c0_138, %c0_139, %c1_140, %c0_141] : memref<1x18x18x8xf32, #tpu.memory_space<vmem>>, vector<1x16x16x8xf32>
    %78 = arith.truncf %77 : vector<1x16x16x8xf32> to vector<1x16x16x8xbf16>
    %c0_142 = arith.constant 0 : index
    %c0_143 = arith.constant 0 : index
    %c0_144 = arith.constant 0 : index
    %c8_145 = arith.constant 8 : index
    %79 = vector.load %arg16[%c0_142, %c0_143, %c0_144, %c8_145] : memref<1x16x16x72xbf16, #tpu.memory_space<vmem>>, vector<1x16x16x8xbf16>
    tpu.vector_store %arg16[%c0_142, %c0_143, %c0_144, %c8_145], %78 {strides = array<i32>} : memref<1x16x16x72xbf16, #tpu.memory_space<vmem>>, vector<1x16x16x8xbf16>,
    %c0_146 = arith.constant 0 : index
    %c0_147 = arith.constant 0 : index
    %c2_148 = arith.constant 2 : index
    %c0_149 = arith.constant 0 : index
    %80 = vector.load %arg15[%c0_146, %c0_147, %c2_148, %c0_149] : memref<1x18x18x8xf32, #tpu.memory_space<vmem>>, vector<1x16x16x8xf32>
    %81 = arith.truncf %80 : vector<1x16x16x8xf32> to vector<1x16x16x8xbf16>
    %c0_150 = arith.constant 0 : index
    %c0_151 = arith.constant 0 : index
    %c0_152 = arith.constant 0 : index
    %c16_153 = arith.constant 16 : index
    %82 = vector.load %arg16[%c0_150, %c0_151, %c0_152, %c16_153] : memref<1x16x16x72xbf16, #tpu.memory_space<vmem>>, vector<1x16x16x8xbf16>
    tpu.vector_store %arg16[%c0_150, %c0_151, %c0_152, %c16_153], %81 {strides = array<i32>} : memref<1x16x16x72xbf16, #tpu.memory_space<vmem>>, vector<1x16x16x8xbf16>,
    %c0_154 = arith.constant 0 : index
    %c1_155 = arith.constant 1 : index
    %c0_156 = arith.constant 0 : index
    %c0_157 = arith.constant 0 : index
    %83 = vector.load %arg15[%c0_154, %c1_155, %c0_156, %c0_157] : memref<1x18x18x8xf32, #tpu.memory_space<vmem>>, vector<1x16x16x8xf32>
    %84 = arith.truncf %83 : vector<1x16x16x8xf32> to vector<1x16x16x8xbf16>
    %c0_158 = arith.constant 0 : index
    %c0_159 = arith.constant 0 : index
    %c0_160 = arith.constant 0 : index
    %c24_161 = arith.constant 24 : index
    %85 = vector.load %arg16[%c0_158, %c0_159, %c0_160, %c24_161] : memref<1x16x16x72xbf16, #tpu.memory_space<vmem>>, vector<1x16x16x8xbf16>
    tpu.vector_store %arg16[%c0_158, %c0_159, %c0_160, %c24_161], %84 {strides = array<i32>} : memref<1x16x16x72xbf16, #tpu.memory_space<vmem>>, vector<1x16x16x8xbf16>,
    %c0_162 = arith.constant 0 : index
    %c1_163 = arith.constant 1 : index
    %c1_164 = arith.constant 1 : index
    %c0_165 = arith.constant 0 : index
    %86 = vector.load %arg15[%c0_162, %c1_163, %c1_164, %c0_165] : memref<1x18x18x8xf32, #tpu.memory_space<vmem>>, vector<1x16x16x8xf32>
    %87 = arith.truncf %86 : vector<1x16x16x8xf32> to vector<1x16x16x8xbf16>
    %c0_166 = arith.constant 0 : index
    %c0_167 = arith.constant 0 : index
    %c0_168 = arith.constant 0 : index
    %c32_169 = arith.constant 32 : index
    %88 = vector.load %arg16[%c0_166, %c0_167, %c0_168, %c32_169] : memref<1x16x16x72xbf16, #tpu.memory_space<vmem>>, vector<1x16x16x8xbf16>
    tpu.vector_store %arg16[%c0_166, %c0_167, %c0_168, %c32_169], %87 {strides = array<i32>} : memref<1x16x16x72xbf16, #tpu.memory_space<vmem>>, vector<1x16x16x8xbf16>,
    %c0_170 = arith.constant 0 : index
    %c1_171 = arith.constant 1 : index
    %c2_172 = arith.constant 2 : index
    %c0_173 = arith.constant 0 : index
    %89 = vector.load %arg15[%c0_170, %c1_171, %c2_172, %c0_173] : memref<1x18x18x8xf32, #tpu.memory_space<vmem>>, vector<1x16x16x8xf32>
    %90 = arith.truncf %89 : vector<1x16x16x8xf32> to vector<1x16x16x8xbf16>
    %c0_174 = arith.constant 0 : index
    %c0_175 = arith.constant 0 : index
    %c0_176 = arith.constant 0 : index
    %c40 = arith.constant 40 : index
    %91 = vector.load %arg16[%c0_174, %c0_175, %c0_176, %c40] : memref<1x16x16x72xbf16, #tpu.memory_space<vmem>>, vector<1x16x16x8xbf16>
    tpu.vector_store %arg16[%c0_174, %c0_175, %c0_176, %c40], %90 {strides = array<i32>} : memref<1x16x16x72xbf16, #tpu.memory_space<vmem>>, vector<1x16x16x8xbf16>,
    %c0_177 = arith.constant 0 : index
    %c2_178 = arith.constant 2 : index
    %c0_179 = arith.constant 0 : index
    %c0_180 = arith.constant 0 : index
    %92 = vector.load %arg15[%c0_177, %c2_178, %c0_179, %c0_180] : memref<1x18x18x8xf32, #tpu.memory_space<vmem>>, vector<1x16x16x8xf32>
    %93 = arith.truncf %92 : vector<1x16x16x8xf32> to vector<1x16x16x8xbf16>
    %c0_181 = arith.constant 0 : index
    %c0_182 = arith.constant 0 : index
    %c0_183 = arith.constant 0 : index
    %c48 = arith.constant 48 : index
    %94 = vector.load %arg16[%c0_181, %c0_182, %c0_183, %c48] : memref<1x16x16x72xbf16, #tpu.memory_space<vmem>>, vector<1x16x16x8xbf16>
    tpu.vector_store %arg16[%c0_181, %c0_182, %c0_183, %c48], %93 {strides = array<i32>} : memref<1x16x16x72xbf16, #tpu.memory_space<vmem>>, vector<1x16x16x8xbf16>,
    %c0_184 = arith.constant 0 : index
    %c2_185 = arith.constant 2 : index
    %c1_186 = arith.constant 1 : index
    %c0_187 = arith.constant 0 : index
    %95 = vector.load %arg15[%c0_184, %c2_185, %c1_186, %c0_187] : memref<1x18x18x8xf32, #tpu.memory_space<vmem>>, vector<1x16x16x8xf32>
    %96 = arith.truncf %95 : vector<1x16x16x8xf32> to vector<1x16x16x8xbf16>
    %c0_188 = arith.constant 0 : index
    %c0_189 = arith.constant 0 : index
    %c0_190 = arith.constant 0 : index
    %c56 = arith.constant 56 : index
    %97 = vector.load %arg16[%c0_188, %c0_189, %c0_190, %c56] : memref<1x16x16x72xbf16, #tpu.memory_space<vmem>>, vector<1x16x16x8xbf16>
    tpu.vector_store %arg16[%c0_188, %c0_189, %c0_190, %c56], %96 {strides = array<i32>} : memref<1x16x16x72xbf16, #tpu.memory_space<vmem>>, vector<1x16x16x8xbf16>,
    %c0_191 = arith.constant 0 : index
    %c2_192 = arith.constant 2 : index
    %c2_193 = arith.constant 2 : index
    %c0_194 = arith.constant 0 : index
    %98 = vector.load %arg15[%c0_191, %c2_192, %c2_193, %c0_194] : memref<1x18x18x8xf32, #tpu.memory_space<vmem>>, vector<1x16x16x8xf32>
    %99 = arith.truncf %98 : vector<1x16x16x8xf32> to vector<1x16x16x8xbf16>
    %c0_195 = arith.constant 0 : index
    %c0_196 = arith.constant 0 : index
    %c0_197 = arith.constant 0 : index
    %c64 = arith.constant 64 : index
    %100 = vector.load %arg16[%c0_195, %c0_196, %c0_197, %c64] : memref<1x16x16x72xbf16, #tpu.memory_space<vmem>>, vector<1x16x16x8xbf16>
    tpu.vector_store %arg16[%c0_195, %c0_196, %c0_197, %c64], %99 {strides = array<i32>} : memref<1x16x16x72xbf16, #tpu.memory_space<vmem>>, vector<1x16x16x8xbf16>,
    %c0_198 = arith.constant 0 : index
    %c0_199 = arith.constant 0 : index
    %c0_200 = arith.constant 0 : index
    %c0_201 = arith.constant 0 : index
    %101 = vector.load %arg16[%c0_198, %c0_199, %c0_200, %c0_201] : memref<1x16x16x72xbf16, #tpu.memory_space<vmem>>, vector<1x16x16x72xbf16>
    %102 = vector.shape_cast %101 : vector<1x16x16x72xbf16> to vector<256x72xbf16>
    %c0_202 = arith.constant 0 : index
    %c0_203 = arith.constant 0 : index
    %103 = vector.load %arg8[%c0_202, %c0_203] : memref<72x8xbf16, #tpu.memory_space<vmem>>, vector<72x8xbf16>
    %cst_204 = arith.constant dense<0.000000e+00> : vector<256x8xf32>
    %104 = tpu.matmul %102, %103, %cst_204 {dimension_numbers = #tpu.dot_dimension_numbers<[1], [0], [0], [1], [0, 0, 1, 1], [], []>} : vector<256x72xbf16>, vector<72x8xbf16>, vector<256x8xf32> -> vector<256x8xf32>
    %c0_205 = arith.constant 0 : index
    %c0_206 = arith.constant 0 : index
    %105 = vector.load %arg9[%c0_205, %c0_206] : memref<1x8xf32, #tpu.memory_space<vmem>>, vector<1x8xf32>
    %106 = vector.broadcast %105 : vector<1x8xf32> to vector<256x8xf32>
    %107 = arith.addf %104, %106 : vector<256x8xf32>
    %108 = vector.shape_cast %0 : vector<1x16x16x4xf32> to vector<256x4xf32>
    %109 = arith.truncf %108 : vector<256x4xf32> to vector<256x4xbf16>
    %c0_207 = arith.constant 0 : index
    %c0_208 = arith.constant 0 : index
    %110 = vector.load %arg10[%c0_207, %c0_208] : memref<4x8xbf16, #tpu.memory_space<vmem>>, vector<4x8xbf16>
    %cst_209 = arith.constant dense<0.000000e+00> : vector<256x8xf32>
    %111 = tpu.matmul %109, %110, %cst_209 {dimension_numbers = #tpu.dot_dimension_numbers<[1], [0], [0], [1], [0, 0, 1, 1], [], []>} : vector<256x4xbf16>, vector<4x8xbf16>, vector<256x8xf32> -> vector<256x8xf32>
    %c0_210 = arith.constant 0 : index
    %c0_211 = arith.constant 0 : index
    %112 = vector.load %arg11[%c0_210, %c0_211] : memref<1x8xf32, #tpu.memory_space<vmem>>, vector<1x8xf32>
    %113 = vector.broadcast %112 : vector<1x8xf32> to vector<256x8xf32>
    %114 = arith.addf %111, %113 : vector<256x8xf32>
    %115 = arith.addf %107, %114 : vector<256x8xf32>
    %116 = vector.shape_cast %115 : vector<256x8xf32> to vector<1x16x16x8xf32>
    %c0_212 = arith.constant 0 : index
    %c0_213 = arith.constant 0 : index
    %c0_214 = arith.constant 0 : index
    %c0_215 = arith.constant 0 : index
    %117 = vector.load %arg12[%c0_212, %c0_213, %c0_214, %c0_215] : memref<1x16x16x8xf32, #tpu.memory_space<vmem>>, vector<1x16x16x8xf32>
    tpu.vector_store %arg12[%c0_212, %c0_213, %c0_214, %c0_215], %116 {strides = array<i32>} : memref<1x16x16x8xf32, #tpu.memory_space<vmem>>, vector<1x16x16x8xf32>,
    return
  }
  func.func @transform_0(%arg0: i32) -> (i32, i32, i32, i32) {
    %c0_i32 = arith.constant 0 : i32
    %c0_i32_0 = arith.constant 0 : i32
    %c0_i32_1 = arith.constant 0 : i32
    %c0_i32_2 = arith.constant 0 : i32
    return %arg0, %c0_i32, %c0_i32_0, %c0_i32_1 : i32, i32, i32, i32
  }
  func.func @transform_1(%arg0: i32) -> (i32, i32) {
    %c0_i32 = arith.constant 0 : i32
    %c0_i32_0 = arith.constant 0 : i32
    %c0_i32_1 = arith.constant 0 : i32
    return %c0_i32, %c0_i32_0 : i32, i32
  }
  func.func @transform_2(%arg0: i32) -> (i32, i32) {
    %c0_i32 = arith.constant 0 : i32
    %c0_i32_0 = arith.constant 0 : i32
    %c0_i32_1 = arith.constant 0 : i32
    return %c0_i32, %c0_i32_0 : i32, i32
  }
  func.func @transform_3(%arg0: i32) -> (i32, i32) {
    %c0_i32 = arith.constant 0 : i32
    %c0_i32_0 = arith.constant 0 : i32
    %c0_i32_1 = arith.constant 0 : i32
    return %c0_i32, %c0_i32_0 : i32, i32
  }
  func.func @transform_4(%arg0: i32) -> (i32, i32) {
    %c0_i32 = arith.constant 0 : i32
    %c0_i32_0 = arith.constant 0 : i32
    %c0_i32_1 = arith.constant 0 : i32
    return %c0_i32, %c0_i32_0 : i32, i32
  }
  func.func @transform_5(%arg0: i32) -> (i32, i32) {
    %c0_i32 = arith.constant 0 : i32
    %c0_i32_0 = arith.constant 0 : i32
    %c0_i32_1 = arith.constant 0 : i32
    return %c0_i32, %c0_i32_0 : i32, i32
  }
  func.func @transform_6(%arg0: i32) -> (i32, i32) {
    %c0_i32 = arith.constant 0 : i32
    %c0_i32_0 = arith.constant 0 : i32
    %c0_i32_1 = arith.constant 0 : i32
    return %c0_i32, %c0_i32_0 : i32, i32
  }
  func.func @transform_7(%arg0: i32) -> (i32, i32) {
    %c0_i32 = arith.constant 0 : i32
    %c0_i32_0 = arith.constant 0 : i32
    %c0_i32_1 = arith.constant 0 : i32
    return %c0_i32, %c0_i32_0 : i32, i32
  }
  func.func @transform_8(%arg0: i32) -> (i32, i32) {
    %c0_i32 = arith.constant 0 : i32
    %c0_i32_0 = arith.constant 0 : i32
    %c0_i32_1 = arith.constant 0 : i32
    return %c0_i32, %c0_i32_0 : i32, i32
  }
  func.func @transform_9(%arg0: i32) -> (i32, i32) {
    %c0_i32 = arith.constant 0 : i32
    %c0_i32_0 = arith.constant 0 : i32
    %c0_i32_1 = arith.constant 0 : i32
    return %c0_i32, %c0_i32_0 : i32, i32
  }
  func.func @transform_10(%arg0: i32) -> (i32, i32) {
    %c0_i32 = arith.constant 0 : i32
    %c0_i32_0 = arith.constant 0 : i32
    %c0_i32_1 = arith.constant 0 : i32
    return %c0_i32, %c0_i32_0 : i32, i32
  }
  func.func @transform_11(%arg0: i32) -> (i32, i32, i32, i32) {
    %c0_i32 = arith.constant 0 : i32
    %c0_i32_0 = arith.constant 0 : i32
    %c0_i32_1 = arith.constant 0 : i32
    %c0_i32_2 = arith.constant 0 : i32
    return %arg0, %c0_i32, %c0_i32_0, %c0_i32_1 : i32, i32, i32, i32
  }
}

</mosaic_0001>

<llo_original>
// kernel: tpu_custom_call.1
$region0: #{tpu_custom_call.1}
  #allocation0 [shape = 'u32[]', space=smem, size = 0x4, offset = 0x4, fixed_abs, tag = 'smem constant byte address 0x4 - core index']
  #allocation1 [shape = 'u32[144,128]{1,0:T(1,128)}', space=vmem, size = 0x12000, scoped, tag = 'internal scratch']
  #allocation2 [shape = 'f32[1,18,18,4]{3,2,1,0:T(8,128)}', space=vmem, size = 0x36000, scoped, tag = 'scratch operand']
  #allocation3 [shape = 'bf16[1,16,16,36]{3,2,1,0:T(16,128)(2,1)}', space=vmem, size = 0x10000, scoped, tag = 'scratch operand']
  #allocation4 [shape = 'f32[1,18,18,8]{3,2,1,0:T(8,128)}', space=vmem, size = 0x36000, scoped, tag = 'scratch operand']
  #allocation5 [shape = 'bf16[1,16,16,72]{3,2,1,0:T(16,128)(2,1)}', space=vmem, size = 0x10000, scoped, tag = 'scratch operand']
  %s0 = inlined_call_operand.vmem [shape: f32[2,16,16,4], index: 0, kind: input, shape index: {}]
  %s1 = inlined_call_operand.vmem [shape: f32[1,4], index: 1, kind: input, shape index: {}]
  %s2 = inlined_call_operand.vmem [shape: f32[1,4], index: 2, kind: input, shape index: {}]
  %s3 = inlined_call_operand.vmem [shape: bf16[36,8], index: 3, kind: input, shape index: {}]
  %s4 = inlined_call_operand.vmem [shape: f32[1,8], index: 4, kind: input, shape index: {}]
  %s5 = inlined_call_operand.vmem [shape: f32[1,8], index: 5, kind: input, shape index: {}]
  %s6 = inlined_call_operand.vmem [shape: f32[1,8], index: 6, kind: input, shape index: {}]
  %s7 = inlined_call_operand.vmem [shape: bf16[72,8], index: 7, kind: input, shape index: {}]
  %s8 = inlined_call_operand.vmem [shape: f32[1,8], index: 8, kind: input, shape index: {}]
  %s9 = inlined_call_operand.vmem [shape: bf16[4,8], index: 9, kind: input, shape index: {}]
  %s10 = inlined_call_operand.vmem [shape: f32[1,8], index: 10, kind: input, shape index: {}]
  %s11 = inlined_call_operand.vmem [shape: f32[2,16,16,8], index: 11, kind: output, shape index: {}]
  %s12 = sld [smem:[#allocation0]]
  $region77: #{tpu_custom_call.1} parent=0
    _
  %s14 = ssub.s32 1, %s12
  %s15 = scalar_select 0, %s14, %s12
  loop: start=0, step=1, limit=4
  $region2: #{tpu_custom_call.1} parent=0 // loop_pre_header
    _
  $region3: #{tpu_custom_call.1} parent=0 // loop_header
    %s17 = sphi 0, %s21
    %p18 = scmp.ge.s32.totalorder %s17, 4
    %s27 = sphi 0, %s29
    %s30 = sphi 0, %s27
    %s31 = sphi 0, %s30
    %s47 = sphi 0, %s31
    %s51 = sphi 0, %s51
    %s53 = sphi 0, %s51
    %s54 = sphi 0, %s53
    %s68 = sphi 0, %s54
    %s72 = sphi 0, %s72
    %s74 = sphi 0, %s72
    %s75 = sphi 0, %s74
    %s89 = sphi 0, %s75
    %s93 = sphi 0, %s93
    %s95 = sphi 0, %s93
    %s96 = sphi 0, %s95
    %s110 = sphi 0, %s96
    %s114 = sphi 0, %s114
    %s116 = sphi 0, %s114
    %s117 = sphi 0, %s116
    %s131 = sphi 0, %s117
    %s135 = sphi 0, %s135
    %s137 = sphi 0, %s135
    %s138 = sphi 0, %s137
    %s152 = sphi 0, %s138
    %s156 = sphi 0, %s156
    %s158 = sphi 0, %s156
    %s159 = sphi 0, %s158
    %s173 = sphi 0, %s159
    %s177 = sphi 0, %s177
    %s179 = sphi 0, %s177
    %s180 = sphi 0, %s179
    %s194 = sphi 0, %s180
    %s198 = sphi 0, %s198
    %s200 = sphi 0, %s198
    %s201 = sphi 0, %s200
    %s215 = sphi 0, %s201
    %s219 = sphi 0, %s219
    %s221 = sphi 0, %s219
    %s222 = sphi 0, %s221
    %s236 = sphi 0, %s222
    %s240 = sphi 0, %s240
    %s242 = sphi 0, %s240
    %s243 = sphi 0, %s242
    %s257 = sphi 0, %s243
    %s263 = sphi 0, %s265
    %s266 = sphi 0, %s263
    %s267 = sphi 0, %s266
    %s283 = sphi 0, %s267
  $region4: #{tpu_custom_call.1} parent=0 // loop_header_branch
    %20 = sbr.rel (%p18) target = $region8
  $region5: #{tpu_custom_call.1} parent=0 // loop_body
    %s22 = ssub.s32 %s17, 1
    %s23 = ssub.s32 %s17, 2
    %s24 = sadd.s32 %s17, 1
    %s25 = ssub.s32 %s17, %s24
    %p26 = scmp.eq.s32.totalorder %s25, 0
    %s28 = sadd.s32 %s27, 1
    %s29 = scalar_select %p26, %s27, %s28
    %p32 = pneg %p26
    %p33 = scmp.eq.s32.totalorder %s17, 1
    %p34 = por %p32, %p33
    %p35 = scmp.ne.s32.totalorder %s27, %s30
    %p36 = scmp.eq.s32.totalorder %s17, 0
    %p37 = por %p35, %p36
    %p38 = scmp.ne.s32.totalorder %s27, %s30
    %p39 = scmp.eq.s32.totalorder %s22, 1
    %p40 = por %p38, %p39
    %p41 = scmp.ne.s32.totalorder %s30, %s31
    %p42 = scmp.eq.s32.totalorder %s22, 0
    %p43 = por %p41, %p42
    %p44 = scmp.ne.s32.totalorder %s30, %s31
    %p45 = scmp.eq.s32.totalorder %s23, 1
    %p46 = por %p44, %p45
    %p48 = scmp.ne.s32.totalorder %s31, %s47
    %p49 = scmp.eq.s32.totalorder %s23, 0
    %p50 = por %p48, %p49
    %s52 = sadd.s32 %s51, 1
    %p55 = scmp.eq.s32.totalorder %s17, 1
    %p56 = scmp.ne.s32.totalorder %s51, %s53
    %p57 = scmp.eq.s32.totalorder %s17, 0
    %p58 = por %p56, %p57
    %p59 = scmp.ne.s32.totalorder %s51, %s53
    %p60 = scmp.eq.s32.totalorder %s22, 1
    %p61 = por %p59, %p60
    %p62 = scmp.ne.s32.totalorder %s53, %s54
    %p63 = scmp.eq.s32.totalorder %s22, 0
    %p64 = por %p62, %p63
    %p65 = scmp.ne.s32.totalorder %s53, %s54
    %p66 = scmp.eq.s32.totalorder %s23, 1
    %p67 = por %p65, %p66
    %p69 = scmp.ne.s32.totalorder %s54, %s68
    %p70 = scmp.eq.s32.totalorder %s23, 0
    %p71 = por %p69, %p70
    %s73 = sadd.s32 %s72, 1
    %p76 = scmp.eq.s32.totalorder %s17, 1
    %p77 = scmp.ne.s32.totalorder %s72, %s74
    %p78 = scmp.eq.s32.totalorder %s17, 0
    %p79 = por %p77, %p78
    %p80 = scmp.ne.s32.totalorder %s72, %s74
    %p81 = scmp.eq.s32.totalorder %s22, 1
    %p82 = por %p80, %p81
    %p83 = scmp.ne.s32.totalorder %s74, %s75
    %p84 = scmp.eq.s32.totalorder %s22, 0
    %p85 = por %p83, %p84
    %p86 = scmp.ne.s32.totalorder %s74, %s75
    %p87 = scmp.eq.s32.totalorder %s23, 1
    %p88 = por %p86, %p87
    %p90 = scmp.ne.s32.totalorder %s75, %s89
    %p91 = scmp.eq.s32.totalorder %s23, 0
    %p92 = por %p90, %p91
    %s94 = sadd.s32 %s93, 1
    %p97 = scmp.eq.s32.totalorder %s17, 1
    %p98 = scmp.ne.s32.totalorder %s93, %s95
    %p99 = scmp.eq.s32.totalorder %s17, 0
    %p100 = por %p98, %p99
    %p101 = scmp.ne.s32.totalorder %s93, %s95
    %p102 = scmp.eq.s32.totalorder %s22, 1
    %p103 = por %p101, %p102
    %p104 = scmp.ne.s32.totalorder %s95, %s96
    %p105 = scmp.eq.s32.totalorder %s22, 0
    %p106 = por %p104, %p105
    %p107 = scmp.ne.s32.totalorder %s95, %s96
    %p108 = scmp.eq.s32.totalorder %s23, 1
    %p109 = por %p107, %p108
    %p111 = scmp.ne.s32.totalorder %s96, %s110
    %p112 = scmp.eq.s32.totalorder %s23, 0
    %p113 = por %p111, %p112
    %s115 = sadd.s32 %s114, 1
    %p118 = scmp.eq.s32.totalorder %s17, 1
    %p119 = scmp.ne.s32.totalorder %s114, %s116
    %p120 = scmp.eq.s32.totalorder %s17, 0
    %p121 = por %p119, %p120
    %p122 = scmp.ne.s32.totalorder %s114, %s116
    %p123 = scmp.eq.s32.totalorder %s22, 1
    %p124 = por %p122, %p123
    %p125 = scmp.ne.s32.totalorder %s116, %s117
    %p126 = scmp.eq.s32.totalorder %s22, 0
    %p127 = por %p125, %p126
    %p128 = scmp.ne.s32.totalorder %s116, %s117
    %p129 = scmp.eq.s32.totalorder %s23, 1
    %p130 = por %p128, %p129
    %p132 = scmp.ne.s32.totalorder %s117, %s131
    %p133 = scmp.eq.s32.totalorder %s23, 0
    %p134 = por %p132, %p133
    %s136 = sadd.s32 %s135, 1
    %p139 = scmp.eq.s32.totalorder %s17, 1
    %p140 = scmp.ne.s32.totalorder %s135, %s137
    %p141 = scmp.eq.s32.totalorder %s17, 0
    %p142 = por %p140, %p141
    %p143 = scmp.ne.s32.totalorder %s135, %s137
    %p144 = scmp.eq.s32.totalorder %s22, 1
    %p145 = por %p143, %p144
    %p146 = scmp.ne.s32.totalorder %s137, %s138
    %p147 = scmp.eq.s32.totalorder %s22, 0
    %p148 = por %p146, %p147
    %p149 = scmp.ne.s32.totalorder %s137, %s138
    %p150 = scmp.eq.s32.totalorder %s23, 1
    %p151 = por %p149, %p150
    %p153 = scmp.ne.s32.totalorder %s138, %s152
    %p154 = scmp.eq.s32.totalorder %s23, 0
    %p155 = por %p153, %p154
    %s157 = sadd.s32 %s156, 1
    %p160 = scmp.eq.s32.totalorder %s17, 1
    %p161 = scmp.ne.s32.totalorder %s156, %s158
    %p162 = scmp.eq.s32.totalorder %s17, 0
    %p163 = por %p161, %p162
    %p164 = scmp.ne.s32.totalorder %s156, %s158
    %p165 = scmp.eq.s32.totalorder %s22, 1
    %p166 = por %p164, %p165
    %p167 = scmp.ne.s32.totalorder %s158, %s159
    %p168 = scmp.eq.s32.totalorder %s22, 0
    %p169 = por %p167, %p168
    %p170 = scmp.ne.s32.totalorder %s158, %s159
    %p171 = scmp.eq.s32.totalorder %s23, 1
    %p172 = por %p170, %p171
    %p174 = scmp.ne.s32.totalorder %s159, %s173
    %p175 = scmp.eq.s32.totalorder %s23, 0
    %p176 = por %p174, %p175
    %s178 = sadd.s32 %s177, 1
    %p181 = scmp.eq.s32.totalorder %s17, 1
    %p182 = scmp.ne.s32.totalorder %s177, %s179
    %p183 = scmp.eq.s32.totalorder %s17, 0
    %p184 = por %p182, %p183
    %p185 = scmp.ne.s32.totalorder %s177, %s179
    %p186 = scmp.eq.s32.totalorder %s22, 1
    %p187 = por %p185, %p186
    %p188 = scmp.ne.s32.totalorder %s179, %s180
    %p189 = scmp.eq.s32.totalorder %s22, 0
    %p190 = por %p188, %p189
    %p191 = scmp.ne.s32.totalorder %s179, %s180
    %p192 = scmp.eq.s32.totalorder %s23, 1
    %p193 = por %p191, %p192
    %p195 = scmp.ne.s32.totalorder %s180, %s194
    %p196 = scmp.eq.s32.totalorder %s23, 0
    %p197 = por %p195, %p196
    %s199 = sadd.s32 %s198, 1
    %p202 = scmp.eq.s32.totalorder %s17, 1
    %p203 = scmp.ne.s32.totalorder %s198, %s200
    %p204 = scmp.eq.s32.totalorder %s17, 0
    %p205 = por %p203, %p204
    %p206 = scmp.ne.s32.totalorder %s198, %s200
    %p207 = scmp.eq.s32.totalorder %s22, 1
    %p208 = por %p206, %p207
    %p209 = scmp.ne.s32.totalorder %s200, %s201
    %p210 = scmp.eq.s32.totalorder %s22, 0
    %p211 = por %p209, %p210
    %p212 = scmp.ne.s32.totalorder %s200, %s201
    %p213 = scmp.eq.s32.totalorder %s23, 1
    %p214 = por %p212, %p213
    %p216 = scmp.ne.s32.totalorder %s201, %s215
    %p217 = scmp.eq.s32.totalorder %s23, 0
    %p218 = por %p216, %p217
    %s220 = sadd.s32 %s219, 1
    %p223 = scmp.eq.s32.totalorder %s17, 1
    %p224 = scmp.ne.s32.totalorder %s219, %s221
    %p225 = scmp.eq.s32.totalorder %s17, 0
    %p226 = por %p224, %p225
    %p227 = scmp.ne.s32.totalorder %s219, %s221
    %p228 = scmp.eq.s32.totalorder %s22, 1
    %p229 = por %p227, %p228
    %p230 = scmp.ne.s32.totalorder %s221, %s222
    %p231 = scmp.eq.s32.totalorder %s22, 0
    %p232 = por %p230, %p231
    %p233 = scmp.ne.s32.totalorder %s221, %s222
    %p234 = scmp.eq.s32.totalorder %s23, 1
    %p235 = por %p233, %p234
    %p237 = scmp.ne.s32.totalorder %s222, %s236
    %p238 = scmp.eq.s32.totalorder %s23, 0
    %p239 = por %p237, %p238
    %s241 = sadd.s32 %s240, 1
    %p244 = scmp.eq.s32.totalorder %s17, 1
    %p245 = scmp.ne.s32.totalorder %s240, %s242
    %p246 = scmp.eq.s32.totalorder %s17, 0
    %p247 = por %p245, %p246
    %p248 = scmp.ne.s32.totalorder %s240, %s242
    %p249 = scmp.eq.s32.totalorder %s22, 1
    %p250 = por %p248, %p249
    %p251 = scmp.ne.s32.totalorder %s242, %s243
    %p252 = scmp.eq.s32.totalorder %s22, 0
    %p253 = por %p251, %p252
    %p254 = scmp.ne.s32.totalorder %s242, %s243
    %p255 = scmp.eq.s32.totalorder %s23, 1
    %p256 = por %p254, %p255
    %p258 = scmp.ne.s32.totalorder %s243, %s257
    %p259 = scmp.eq.s32.totalorder %s23, 0
    %p260 = por %p258, %p259
    %s261 = ssub.s32 %s17, %s24
    %p262 = scmp.eq.s32.totalorder %s261, 0
    %s264 = sadd.s32 %s263, 1
    %s265 = scalar_select %p262, %s263, %s264
    %p268 = pneg %p262
    %p269 = scmp.eq.s32.totalorder %s17, 1
    %p270 = por %p268, %p269
    %p271 = scmp.ne.s32.totalorder %s263, %s266
    %p272 = scmp.eq.s32.totalorder %s17, 0
    %p273 = por %p271, %p272
    %p274 = scmp.ne.s32.totalorder %s263, %s266
    %p275 = scmp.eq.s32.totalorder %s22, 1
    %p276 = por %p274, %p275
    %p277 = scmp.ne.s32.totalorder %s266, %s267
    %p278 = scmp.eq.s32.totalorder %s22, 0
    %p279 = por %p277, %p278
    %p280 = scmp.ne.s32.totalorder %s266, %s267
    %p281 = scmp.eq.s32.totalorder %s23, 1
    %p282 = por %p280, %p281
    %p284 = scmp.ne.s32.totalorder %s267, %s283
    %p285 = scmp.eq.s32.totalorder %s23, 0
    %p286 = por %p284, %p285
    %p287 = scmp.le.s32.totalorder 1, %s17
    %p288 = scmp.lt.s32.totalorder %s17, 3
    %p289 = pnand %p287, %p288
    %p290 = pneg %p289
    // Predicated region
    $region9: #{tpu_custom_call.1} parent=5 // pred_check
      _
    $region10: #{tpu_custom_call.1} parent=5 // pred_check_branch
      %292 = sbr.rel (%p289) target = $region12
    $region11: #{tpu_custom_call.1} parent=5 // pred_region
      %s293 = ssub.s32 %s17, 1
      // Predicated region
      $region13: #{tpu_custom_call.1} parent=11 // pred_check
        %p294 = pneg %p64
      $region14: #{tpu_custom_call.1} parent=11 // pred_check_branch
        %296 = sbr.rel (%p294) target = $region16
      $region15: #{tpu_custom_call.1} parent=11 // pred_region
        _
      $region16: #{tpu_custom_call.1} parent=11 // pred_fallthru
        _
      // Predicated region
      $region17: #{tpu_custom_call.1} parent=11 // pred_check
        %p297 = pneg %p85
      $region18: #{tpu_custom_call.1} parent=11 // pred_check_branch
        %299 = sbr.rel (%p297) target = $region20
      $region19: #{tpu_custom_call.1} parent=11 // pred_region
        _
      $region20: #{tpu_custom_call.1} parent=11 // pred_fallthru
        _
      // Predicated region
      $region21: #{tpu_custom_call.1} parent=11 // pred_check
        %p300 = pneg %p106
      $region22: #{tpu_custom_call.1} parent=11 // pred_check_branch
        %302 = sbr.rel (%p300) target = $region24
      $region23: #{tpu_custom_call.1} parent=11 // pred_region
        _
      $region24: #{tpu_custom_call.1} parent=11 // pred_fallthru
        _
      // Predicated region
      $region25: #{tpu_custom_call.1} parent=11 // pred_check
        %p303 = pneg %p127
      $region26: #{tpu_custom_call.1} parent=11 // pred_check_branch
        %305 = sbr.rel (%p303) target = $region28
      $region27: #{tpu_custom_call.1} parent=11 // pred_region
        _
      $region28: #{tpu_custom_call.1} parent=11 // pred_fallthru
        _
      // Predicated region
      $region29: #{tpu_custom_call.1} parent=11 // pred_check
        %p306 = pneg %p148
      $region30: #{tpu_custom_call.1} parent=11 // pred_check_branch
        %308 = sbr.rel (%p306) target = $region32
      $region31: #{tpu_custom_call.1} parent=11 // pred_region
        _
      $region32: #{tpu_custom_call.1} parent=11 // pred_fallthru
        _
      // Predicated region
      $region33: #{tpu_custom_call.1} parent=11 // pred_check
        %p309 = pneg %p169
      $region34: #{tpu_custom_call.1} parent=11 // pred_check_branch
        %311 = sbr.rel (%p309) target = $region36
      $region35: #{tpu_custom_call.1} parent=11 // pred_region
        _
      $region36: #{tpu_custom_call.1} parent=11 // pred_fallthru
        _
      // Predicated region
      $region37: #{tpu_custom_call.1} parent=11 // pred_check
        %p312 = pneg %p190
      $region38: #{tpu_custom_call.1} parent=11 // pred_check_branch
        %314 = sbr.rel (%p312) target = $region40
      $region39: #{tpu_custom_call.1} parent=11 // pred_region
        _
      $region40: #{tpu_custom_call.1} parent=11 // pred_fallthru
        _
      // Predicated region
      $region41: #{tpu_custom_call.1} parent=11 // pred_check
        %p315 = pneg %p211
      $region42: #{tpu_custom_call.1} parent=11 // pred_check_branch
        %317 = sbr.rel (%p315) target = $region44
      $region43: #{tpu_custom_call.1} parent=11 // pred_region
        _
      $region44: #{tpu_custom_call.1} parent=11 // pred_fallthru
        _
      // Predicated region
      $region45: #{tpu_custom_call.1} parent=11 // pred_check
        %p318 = pneg %p232
      $region46: #{tpu_custom_call.1} parent=11 // pred_check_branch
        %320 = sbr.rel (%p318) target = $region48
      $region47: #{tpu_custom_call.1} parent=11 // pred_region
        _
      $region48: #{tpu_custom_call.1} parent=11 // pred_fallthru
        _
      // Predicated region
      $region49: #{tpu_custom_call.1} parent=11 // pred_check
        %p321 = pneg %p253
      $region50: #{tpu_custom_call.1} parent=11 // pred_check_branch
        %323 = sbr.rel (%p321) target = $region52
      $region51: #{tpu_custom_call.1} parent=11 // pred_region
        _
      $region52: #{tpu_custom_call.1} parent=11 // pred_fallthru
        _
    $region12: #{tpu_custom_call.1} parent=5 // pred_fallthru
      _
    %p324 = scmp.lt.s32.totalorder %s17, 2
    // Predicated region
    $region53: #{tpu_custom_call.1} parent=5 // pred_check
      %p325 = pneg %p324
    $region54: #{tpu_custom_call.1} parent=5 // pred_check_branch
      %327 = sbr.rel (%p325) target = $region56
    $region55: #{tpu_custom_call.1} parent=5 // pred_region
      // Predicated region
      $region57: #{tpu_custom_call.1} parent=55 // pred_check
        %p328 = pneg %p37
      $region58: #{tpu_custom_call.1} parent=55 // pred_check_branch
        %330 = sbr.rel (%p328) target = $region60
      $region59: #{tpu_custom_call.1} parent=55 // pred_region
        %p331 = scmp.lt.s32.totalorder %s17, 1
        %s332 = scalar_select %p331, %s17, 1
        %s333 = smul.addr %s332, 32
        %s334 = smul.addr %s333, 8
        %s335 = scalar_lea.vmem %s0, %s334
      $region60: #{tpu_custom_call.1} parent=55 // pred_fallthru
        _
    $region56: #{tpu_custom_call.1} parent=5 // pred_fallthru
      _
    %p336 = scmp.le.s32.totalorder 1, %s17
    %p337 = scmp.lt.s32.totalorder %s17, 3
    %p338 = pnand %p336, %p337
    %p339 = pneg %p338
    // Predicated region
    $region61: #{tpu_custom_call.1} parent=5 // pred_check
      _
    $region62: #{tpu_custom_call.1} parent=5 // pred_check_branch
      %341 = sbr.rel (%p338) target = $region64
    $region63: #{tpu_custom_call.1} parent=5 // pred_region
      %s342 = ssub.s32 %s17, 1
      %p343 = scmp.lt.s32.totalorder %s22, 1
      %s344 = scalar_select %p343, %s22, 1
      %s345 = smul.addr %s344, 32
      %s346 = smul.addr %s345, 8
      %s347 = scalar_lea.vmem %s0, %s346
      %p348 = pneg %p43
      %p349 = pneg %p40
      %p350 = pneg %p64
      %p351 = pneg %p61
      %p352 = pneg %p85
      %p353 = pneg %p82
      %p354 = pneg %p106
      %p355 = pneg %p103
      %p356 = pneg %p127
      %p357 = pneg %p124
      %p358 = pneg %p148
      %p359 = pneg %p145
      %p360 = pneg %p169
      %p361 = pneg %p166
      %p362 = pneg %p190
      %p363 = pneg %p187
      %p364 = pneg %p211
      %p365 = pneg %p208
      %p366 = pneg %p232
      %p367 = pneg %p229
      %p368 = pneg %p253
      %p369 = pneg %p250
      %p370 = pneg %p279
      %p371 = pneg %p276
      %p372 = scmp.lt.s32.totalorder %s22, 1
      %s373 = scalar_select %p372, %s22, 1
      %s374 = smul.addr %s373, 32
      %s375 = smul.addr %s374, 8
      %s376 = scalar_lea.vmem %s11, %s375
      %p377 = scmp.lt.s32.totalorder %s22, 1
      %s378 = scalar_select %p377, %s22, 1
      %s379 = smul.addr %s378, 32
      %s380 = smul.addr %s379, 8
      %s381 = scalar_lea.vmem %s0, %s380
      %p382 = scmp.lt.s32.totalorder %s22, 1
      %s383 = scalar_select %p382, %s22, 1
      %s384 = smul.addr %s383, 32
      %s385 = smul.addr %s384, 8
      %s386 = scalar_lea.vmem %s11, %s385
      %v388 = vld [vmem:[%s381] sm:$0xff]
      %v389 = vld [vmem:[%s381 + $0x8] sm:$0xff]
      %v390 = vld [vmem:[%s381 + $0x10] sm:$0xff]
      %v391 = vld [vmem:[%s381 + $0x18] sm:$0xff]
      %v392 = vld [vmem:[%s381 + $0x20] sm:$0xff]
      %v393 = vld [vmem:[%s381 + $0x28] sm:$0xff]
      %v394 = vld [vmem:[%s381 + $0x30] sm:$0xff]
      %v395 = vld [vmem:[%s381 + $0x38] sm:$0xff]
      %v396 = vld [vmem:[%s381 + $0x40] sm:$0xff]
      %v397 = vld [vmem:[%s381 + $0x48] sm:$0xff]
      %v398 = vld [vmem:[%s381 + $0x50] sm:$0xff]
      %v399 = vld [vmem:[%s381 + $0x58] sm:$0xff]
      %v400 = vld [vmem:[%s381 + $0x60] sm:$0xff]
      %v401 = vld [vmem:[%s381 + $0x68] sm:$0xff]
      %v402 = vld [vmem:[%s381 + $0x70] sm:$0xff]
      %v403 = vld [vmem:[%s381 + $0x78] sm:$0xff]
      %v404 = vld [vmem:[%s381 + $0x80] sm:$0xff]
      %v405 = vld [vmem:[%s381 + $0x88] sm:$0xff]
      %v406 = vld [vmem:[%s381 + $0x90] sm:$0xff]
      %v407 = vld [vmem:[%s381 + $0x98] sm:$0xff]
      %v408 = vld [vmem:[%s381 + $0xa0] sm:$0xff]
      %v409 = vld [vmem:[%s381 + $0xa8] sm:$0xff]
      %v410 = vld [vmem:[%s381 + $0xb0] sm:$0xff]
      %v411 = vld [vmem:[%s381 + $0xb8] sm:$0xff]
      %v412 = vld [vmem:[%s381 + $0xc0] sm:$0xff]
      %v413 = vld [vmem:[%s381 + $0xc8] sm:$0xff]
      %v414 = vld [vmem:[%s381 + $0xd0] sm:$0xff]
      %v415 = vld [vmem:[%s381 + $0xd8] sm:$0xff]
      %v416 = vld [vmem:[%s381 + $0xe0] sm:$0xff]
      %v417 = vld [vmem:[%s381 + $0xe8] sm:$0xff]
      %v418 = vld [vmem:[%s381 + $0xf0] sm:$0xff]
      %v419 = vld [vmem:[%s381 + $0xf8] sm:$0xff]
      %v420 = vld [vmem:[%s1] sm:$0x1]
      %v422 = vlaneseq
      %v423 = vshrl.u32 %v422, 7
      %v424 = vsub.s32 0, %v423
      %v425 = vrot.slane %v420, %v424
      %v427 = vmul.f32 %v388, %v425
      %v428 = vmul.f32 %v389, %v425
      %v429 = vmul.f32 %v390, %v425
      %v430 = vmul.f32 %v391, %v425
      %v431 = vmul.f32 %v392, %v425
      %v432 = vmul.f32 %v393, %v425
      %v433 = vmul.f32 %v394, %v425
      %v434 = vmul.f32 %v395, %v425
      %v435 = vmul.f32 %v396, %v425
      %v436 = vmul.f32 %v397, %v425
      %v437 = vmul.f32 %v398, %v425
      %v438 = vmul.f32 %v399, %v425
      %v439 = vmul.f32 %v400, %v425
      %v440 = vmul.f32 %v401, %v425
      %v441 = vmul.f32 %v402, %v425
      %v442 = vmul.f32 %v403, %v425
      %v443 = vmul.f32 %v404, %v425
      %v444 = vmul.f32 %v405, %v425
      %v445 = vmul.f32 %v406, %v425
      %v446 = vmul.f32 %v407, %v425
      %v447 = vmul.f32 %v408, %v425
      %v448 = vmul.f32 %v409, %v425
      %v449 = vmul.f32 %v410, %v425
      %v450 = vmul.f32 %v411, %v425
      %v451 = vmul.f32 %v412, %v425
      %v452 = vmul.f32 %v413, %v425
      %v453 = vmul.f32 %v414, %v425
      %v454 = vmul.f32 %v415, %v425
      %v455 = vmul.f32 %v416, %v425
      %v456 = vmul.f32 %v417, %v425
      %v457 = vmul.f32 %v418, %v425
      %v458 = vmul.f32 %v419, %v425
      %v459 = vld [vmem:[%s2] sm:$0x1]
      %v461 = vlaneseq
      %v462 = vshrl.u32 %v461, 7
      %v463 = vsub.s32 0, %v462
      %v464 = vrot.slane %v459, %v463
      %v466 = vadd.f32 %v427, %v464
      %v467 = vadd.f32 %v428, %v464
      %v468 = vadd.f32 %v429, %v464
      %v469 = vadd.f32 %v430, %v464
      %v470 = vadd.f32 %v431, %v464
      %v471 = vadd.f32 %v432, %v464
      %v472 = vadd.f32 %v433, %v464
      %v473 = vadd.f32 %v434, %v464
      %v474 = vadd.f32 %v435, %v464
      %v475 = vadd.f32 %v436, %v464
      %v476 = vadd.f32 %v437, %v464
      %v477 = vadd.f32 %v438, %v464
      %v478 = vadd.f32 %v439, %v464
      %v479 = vadd.f32 %v440, %v464
      %v480 = vadd.f32 %v441, %v464
      %v481 = vadd.f32 %v442, %v464
      %v482 = vadd.f32 %v443, %v464
      %v483 = vadd.f32 %v444, %v464
      %v484 = vadd.f32 %v445, %v464
      %v485 = vadd.f32 %v446, %v464
      %v486 = vadd.f32 %v447, %v464
      %v487 = vadd.f32 %v448, %v464
      %v488 = vadd.f32 %v449, %v464
      %v489 = vadd.f32 %v450, %v464
      %v490 = vadd.f32 %v451, %v464
      %v491 = vadd.f32 %v452, %v464
      %v492 = vadd.f32 %v453, %v464
      %v493 = vadd.f32 %v454, %v464
      %v494 = vadd.f32 %v455, %v464
      %v495 = vadd.f32 %v456, %v464
      %v496 = vadd.f32 %v457, %v464
      %v497 = vadd.f32 %v458, %v464
      %v498 = vmax.f32 %v466, 0.0
      %v499 = vmax.f32 %v467, 0.0
      %v500 = vmax.f32 %v468, 0.0
      %v501 = vmax.f32 %v469, 0.0
      %v502 = vmax.f32 %v470, 0.0
      %v503 = vmax.f32 %v471, 0.0
      %v504 = vmax.f32 %v472, 0.0
      %v505 = vmax.f32 %v473, 0.0
      %v506 = vmax.f32 %v474, 0.0
      %v507 = vmax.f32 %v475, 0.0
      %v508 = vmax.f32 %v476, 0.0
      %v509 = vmax.f32 %v477, 0.0
      %v510 = vmax.f32 %v478, 0.0
      %v511 = vmax.f32 %v479, 0.0
      %v512 = vmax.f32 %v480, 0.0
      %v513 = vmax.f32 %v481, 0.0
      %v514 = vmax.f32 %v482, 0.0
      %v515 = vmax.f32 %v483, 0.0
      %v516 = vmax.f32 %v484, 0.0
      %v517 = vmax.f32 %v485, 0.0
      %v518 = vmax.f32 %v486, 0.0
      %v519 = vmax.f32 %v487, 0.0
      %v520 = vmax.f32 %v488, 0.0
      %v521 = vmax.f32 %v489, 0.0
      %v522 = vmax.f32 %v490, 0.0
      %v523 = vmax.f32 %v491, 0.0
      %v524 = vmax.f32 %v492, 0.0
      %v525 = vmax.f32 %v493, 0.0
      %v526 = vmax.f32 %v494, 0.0
      %v527 = vmax.f32 %v495, 0.0
      %v528 = vmax.f32 %v496, 0.0
      %v529 = vmax.f32 %v497, 0.0
      %vm530 = vcmask 31744
      %531 = vst.msk [vmem:[#allocation2] sm:$0xff] %vm530, 0.0
      %532 = vst.msk [vmem:[#allocation2 + $0x8] sm:$0xff] %vm530, 0.0
      %vm533 = vcmask 25600
      %534 = vst.msk [vmem:[#allocation2 + $0x10] sm:$0x3] %vm533, 0.0
      %s535 = scalar_lea.vmem [#allocation2], 408
      %536 = vst.msk [vmem:[%s535] sm:$0xff] %vm530, 0.0
      %537 = vst.msk [vmem:[%s535 + $0x8] sm:$0xff] %vm530, 0.0
      %538 = vst.msk [vmem:[%s535 + $0x10] sm:$0x3] %vm533, 0.0
      %vm539 = vcmask 24576
      %540 = vst.msk [vmem:[#allocation2] sm:$0x1] %vm539, 0.0
      %541 = vst.msk [vmem:[#allocation2 + $0x18] sm:$0x1] %vm539, 0.0
      %542 = vst.msk [vmem:[#allocation2 + $0x30] sm:$0x1] %vm539, 0.0
      %543 = vst.msk [vmem:[#allocation2 + $0x48] sm:$0x1] %vm539, 0.0
      %544 = vst.msk [vmem:[#allocation2 + $0x60] sm:$0x1] %vm539, 0.0
      %545 = vst.msk [vmem:[#allocation2 + $0x78] sm:$0x1] %vm539, 0.0
      %546 = vst.msk [vmem:[#allocation2 + $0x90] sm:$0x1] %vm539, 0.0
      %547 = vst.msk [vmem:[#allocation2 + $0xa8] sm:$0x1] %vm539, 0.0
      %548 = vst.msk [vmem:[#allocation2 + $0xc0] sm:$0x1] %vm539, 0.0
      %549 = vst.msk [vmem:[#allocation2 + $0xd8] sm:$0x1] %vm539, 0.0
      %550 = vst.msk [vmem:[#allocation2 + $0xf0] sm:$0x1] %vm539, 0.0
      %551 = vst.msk [vmem:[#allocation2 + $0x108] sm:$0x1] %vm539, 0.0
      %552 = vst.msk [vmem:[#allocation2 + $0x120] sm:$0x1] %vm539, 0.0
      %553 = vst.msk [vmem:[#allocation2 + $0x138] sm:$0x1] %vm539, 0.0
      %554 = vst.msk [vmem:[#allocation2 + $0x150] sm:$0x1] %vm539, 0.0
      %555 = vst.msk [vmem:[#allocation2 + $0x168] sm:$0x1] %vm539, 0.0
      %556 = vst.msk [vmem:[#allocation2 + $0x180] sm:$0x1] %vm539, 0.0
      %557 = vst.msk [vmem:[#allocation2 + $0x198] sm:$0x1] %vm539, 0.0
      %558 = vst.msk [vmem:[#allocation2 + $0x11] sm:$0x1] %vm539, 0.0
      %559 = vst.msk [vmem:[#allocation2 + $0x29] sm:$0x1] %vm539, 0.0
      %560 = vst.msk [vmem:[#allocation2 + $0x41] sm:$0x1] %vm539, 0.0
      %561 = vst.msk [vmem:[#allocation2 + $0x59] sm:$0x1] %vm539, 0.0
      %562 = vst.msk [vmem:[#allocation2 + $0x71] sm:$0x1] %vm539, 0.0
      %563 = vst.msk [vmem:[#allocation2 + $0x89] sm:$0x1] %vm539, 0.0
      %564 = vst.msk [vmem:[#allocation2 + $0xa1] sm:$0x1] %vm539, 0.0
      %565 = vst.msk [vmem:[#allocation2 + $0xb9] sm:$0x1] %vm539, 0.0
      %566 = vst.msk [vmem:[#allocation2 + $0xd1] sm:$0x1] %vm539, 0.0
      %567 = vst.msk [vmem:[#allocation2 + $0xe9] sm:$0x1] %vm539, 0.0
      %568 = vst.msk [vmem:[#allocation2 + $0x101] sm:$0x1] %vm539, 0.0
      %569 = vst.msk [vmem:[#allocation2 + $0x119] sm:$0x1] %vm539, 0.0
      %570 = vst.msk [vmem:[#allocation2 + $0x131] sm:$0x1] %vm539, 0.0
      %571 = vst.msk [vmem:[#allocation2 + $0x149] sm:$0x1] %vm539, 0.0
      %572 = vst.msk [vmem:[#allocation2 + $0x161] sm:$0x1] %vm539, 0.0
      %573 = vst.msk [vmem:[#allocation2 + $0x179] sm:$0x1] %vm539, 0.0
      %574 = vst.msk [vmem:[#allocation2 + $0x191] sm:$0x1] %vm539, 0.0
      %575 = vst.msk [vmem:[#allocation2 + $0x1a9] sm:$0x1] %vm539, 0.0
      %s576 = scalar_lea.vmem [#allocation2], 24
      %577 = vst.msk [vmem:[%s576 + $0x1] sm:$0xff] %vm530, %v498
      %578 = vst.msk [vmem:[%s576 + $0x9] sm:$0xff] %vm530, %v499
      %579 = vst.msk [vmem:[%s576 + $0x19] sm:$0xff] %vm530, %v500
      %580 = vst.msk [vmem:[%s576 + $0x21] sm:$0xff] %vm530, %v501
      %581 = vst.msk [vmem:[%s576 + $0x31] sm:$0xff] %vm530, %v502
      %582 = vst.msk [vmem:[%s576 + $0x39] sm:$0xff] %vm530, %v503
      %583 = vst.msk [vmem:[%s576 + $0x49] sm:$0xff] %vm530, %v504
      %584 = vst.msk [vmem:[%s576 + $0x51] sm:$0xff] %vm530, %v505
      %585 = vst.msk [vmem:[%s576 + $0x61] sm:$0xff] %vm530, %v506
      %586 = vst.msk [vmem:[%s576 + $0x69] sm:$0xff] %vm530, %v507
      %587 = vst.msk [vmem:[%s576 + $0x79] sm:$0xff] %vm530, %v508
      %588 = vst.msk [vmem:[%s576 + $0x81] sm:$0xff] %vm530, %v509
      %589 = vst.msk [vmem:[%s576 + $0x91] sm:$0xff] %vm530, %v510
      %590 = vst.msk [vmem:[%s576 + $0x99] sm:$0xff] %vm530, %v511
      %591 = vst.msk [vmem:[%s576 + $0xa9] sm:$0xff] %vm530, %v512
      %592 = vst.msk [vmem:[%s576 + $0xb1] sm:$0xff] %vm530, %v513
      %593 = vst.msk [vmem:[%s576 + $0xc1] sm:$0xff] %vm530, %v514
      %594 = vst.msk [vmem:[%s576 + $0xc9] sm:$0xff] %vm530, %v515
      %595 = vst.msk [vmem:[%s576 + $0xd9] sm:$0xff] %vm530, %v516
      %596 = vst.msk [vmem:[%s576 + $0xe1] sm:$0xff] %vm530, %v517
      %597 = vst.msk [vmem:[%s576 + $0xf1] sm:$0xff] %vm530, %v518
      %598 = vst.msk [vmem:[%s576 + $0xf9] sm:$0xff] %vm530, %v519
      %599 = vst.msk [vmem:[%s576 + $0x109] sm:$0xff] %vm530, %v520
      %600 = vst.msk [vmem:[%s576 + $0x111] sm:$0xff] %vm530, %v521
      %601 = vst.msk [vmem:[%s576 + $0x121] sm:$0xff] %vm530, %v522
      %602 = vst.msk [vmem:[%s576 + $0x129] sm:$0xff] %vm530, %v523
      %603 = vst.msk [vmem:[%s576 + $0x139] sm:$0xff] %vm530, %v524
      %604 = vst.msk [vmem:[%s576 + $0x141] sm:$0xff] %vm530, %v525
      %605 = vst.msk [vmem:[%s576 + $0x151] sm:$0xff] %vm530, %v526
      %606 = vst.msk [vmem:[%s576 + $0x159] sm:$0xff] %vm530, %v527
      %607 = vst.msk [vmem:[%s576 + $0x169] sm:$0xff] %vm530, %v528
      %608 = vst.msk [vmem:[%s576 + $0x171] sm:$0xff] %vm530, %v529
      %v609 = vld [vmem:[#allocation2] sm:$0xff]
      %v610 = vld [vmem:[#allocation2 + $0x8] sm:$0xff]
      %v611 = vld [vmem:[#allocation2 + $0x18] sm:$0xff]
      %v612 = vld [vmem:[#allocation2 + $0x20] sm:$0xff]
      %v613 = vld [vmem:[#allocation2 + $0x30] sm:$0xff]
      %v614 = vld [vmem:[#allocation2 + $0x38] sm:$0xff]
      %v615 = vld [vmem:[#allocation2 + $0x48] sm:$0xff]
      %v616 = vld [vmem:[#allocation2 + $0x50] sm:$0xff]
      %v617 = vld [vmem:[#allocation2 + $0x60] sm:$0xff]
      %v618 = vld [vmem:[#allocation2 + $0x68] sm:$0xff]
      %v619 = vld [vmem:[#allocation2 + $0x78] sm:$0xff]
      %v620 = vld [vmem:[#allocation2 + $0x80] sm:$0xff]
      %v621 = vld [vmem:[#allocation2 + $0x90] sm:$0xff]
      %v622 = vld [vmem:[#allocation2 + $0x98] sm:$0xff]
      %v623 = vld [vmem:[#allocation2 + $0xa8] sm:$0xff]
      %v624 = vld [vmem:[#allocation2 + $0xb0] sm:$0xff]
      %v625 = vld [vmem:[#allocation2 + $0xc0] sm:$0xff]
      %v626 = vld [vmem:[#allocation2 + $0xc8] sm:$0xff]
      %v627 = vld [vmem:[#allocation2 + $0xd8] sm:$0xff]
      %v628 = vld [vmem:[#allocation2 + $0xe0] sm:$0xff]
      %v629 = vld [vmem:[#allocation2 + $0xf0] sm:$0xff]
      %v630 = vld [vmem:[#allocation2 + $0xf8] sm:$0xff]
      %v631 = vld [vmem:[#allocation2 + $0x108] sm:$0xff]
      %v632 = vld [vmem:[#allocation2 + $0x110] sm:$0xff]
      %v633 = vld [vmem:[#allocation2 + $0x120] sm:$0xff]
      %v634 = vld [vmem:[#allocation2 + $0x128] sm:$0xff]
      %v635 = vld [vmem:[#allocation2 + $0x138] sm:$0xff]
      %v636 = vld [vmem:[#allocation2 + $0x140] sm:$0xff]
      %v637 = vld [vmem:[#allocation2 + $0x150] sm:$0xff]
      %v638 = vld [vmem:[#allocation2 + $0x158] sm:$0xff]
      %v639 = vld [vmem:[#allocation2 + $0x168] sm:$0xff]
      %v640 = vld [vmem:[#allocation2 + $0x170] sm:$0xff]
      %v641 = vpack.c.bf16 %v610, %v609
      %v642 = vpack.c.bf16 %v612, %v611
      %v643 = vpack.c.bf16 %v614, %v613
      %v644 = vpack.c.bf16 %v616, %v615
      %v645 = vpack.c.bf16 %v618, %v617
      %v646 = vpack.c.bf16 %v620, %v619
      %v647 = vpack.c.bf16 %v622, %v621
      %v648 = vpack.c.bf16 %v624, %v623
      %v649 = vpack.c.bf16 %v626, %v625
      %v650 = vpack.c.bf16 %v628, %v627
      %v651 = vpack.c.bf16 %v630, %v629
      %v652 = vpack.c.bf16 %v632, %v631
      %v653 = vpack.c.bf16 %v634, %v633
      %v654 = vpack.c.bf16 %v636, %v635
      %v655 = vpack.c.bf16 %v638, %v637
      %v656 = vpack.c.bf16 %v640, %v639
      %657 = vst.msk [vmem:[#allocation3] sm:$0xff] %vm530, %v641
      %658 = vst.msk [vmem:[#allocation3 + $0x8] sm:$0xff] %vm530, %v642
      %659 = vst.msk [vmem:[#allocation3 + $0x10] sm:$0xff] %vm530, %v643
      %660 = vst.msk [vmem:[#allocation3 + $0x18] sm:$0xff] %vm530, %v644
      %661 = vst.msk [vmem:[#allocation3 + $0x20] sm:$0xff] %vm530, %v645
      %662 = vst.msk [vmem:[#allocation3 + $0x28] sm:$0xff] %vm530, %v646
      %663 = vst.msk [vmem:[#allocation3 + $0x30] sm:$0xff] %vm530, %v647
      %664 = vst.msk [vmem:[#allocation3 + $0x38] sm:$0xff] %vm530, %v648
      %665 = vst.msk [vmem:[#allocation3 + $0x40] sm:$0xff] %vm530, %v649
      %666 = vst.msk [vmem:[#allocation3 + $0x48] sm:$0xff] %vm530, %v650
      %667 = vst.msk [vmem:[#allocation3 + $0x50] sm:$0xff] %vm530, %v651
      %668 = vst.msk [vmem:[#allocation3 + $0x58] sm:$0xff] %vm530, %v652
      %669 = vst.msk [vmem:[#allocation3 + $0x60] sm:$0xff] %vm530, %v653
      %670 = vst.msk [vmem:[#allocation3 + $0x68] sm:$0xff] %vm530, %v654
      %671 = vst.msk [vmem:[#allocation3 + $0x70] sm:$0xff] %vm530, %v655
      %672 = vst.msk [vmem:[#allocation3 + $0x78] sm:$0xff] %vm530, %v656
      %v673 = vld [vmem:[#allocation2 + $0x1] sm:$0xff]
      %v674 = vld [vmem:[#allocation2 + $0x9] sm:$0xff]
      %v675 = vld [vmem:[#allocation2 + $0x19] sm:$0xff]
      %v676 = vld [vmem:[#allocation2 + $0x21] sm:$0xff]
      %v677 = vld [vmem:[#allocation2 + $0x31] sm:$0xff]
      %v678 = vld [vmem:[#allocation2 + $0x39] sm:$0xff]
      %v679 = vld [vmem:[#allocation2 + $0x49] sm:$0xff]
      %v680 = vld [vmem:[#allocation2 + $0x51] sm:$0xff]
      %v681 = vld [vmem:[#allocation2 + $0x61] sm:$0xff]
      %v682 = vld [vmem:[#allocation2 + $0x69] sm:$0xff]
      %v683 = vld [vmem:[#allocation2 + $0x79] sm:$0xff]
      %v684 = vld [vmem:[#allocation2 + $0x81] sm:$0xff]
      %v685 = vld [vmem:[#allocation2 + $0x91] sm:$0xff]
      %v686 = vld [vmem:[#allocation2 + $0x99] sm:$0xff]
      %v687 = vld [vmem:[#allocation2 + $0xa9] sm:$0xff]
      %v688 = vld [vmem:[#allocation2 + $0xb1] sm:$0xff]
      %v689 = vld [vmem:[#allocation2 + $0xc1] sm:$0xff]
      %v690 = vld [vmem:[#allocation2 + $0xc9] sm:$0xff]
      %v691 = vld [vmem:[#allocation2 + $0xd9] sm:$0xff]
      %v692 = vld [vmem:[#allocation2 + $0xe1] sm:$0xff]
      %v693 = vld [vmem:[#allocation2 + $0xf1] sm:$0xff]
      %v694 = vld [vmem:[#allocation2 + $0xf9] sm:$0xff]
      %v695 = vld [vmem:[#allocation2 + $0x109] sm:$0xff]
      %v696 = vld [vmem:[#allocation2 + $0x111] sm:$0xff]
      %v697 = vld [vmem:[#allocation2 + $0x121] sm:$0xff]
      %v698 = vld [vmem:[#allocation2 + $0x129] sm:$0xff]
      %v699 = vld [vmem:[#allocation2 + $0x139] sm:$0xff]
      %v700 = vld [vmem:[#allocation2 + $0x141] sm:$0xff]
      %v701 = vld [vmem:[#allocation2 + $0x151] sm:$0xff]
      %v702 = vld [vmem:[#allocation2 + $0x159] sm:$0xff]
      %v703 = vld [vmem:[#allocation2 + $0x169] sm:$0xff]
      %v704 = vld [vmem:[#allocation2 + $0x171] sm:$0xff]
      %v705 = vpack.c.bf16 %v674, %v673
      %v706 = vpack.c.bf16 %v676, %v675
      %v707 = vpack.c.bf16 %v678, %v677
      %v708 = vpack.c.bf16 %v680, %v679
      %v709 = vpack.c.bf16 %v682, %v681
      %v710 = vpack.c.bf16 %v684, %v683
      %v711 = vpack.c.bf16 %v686, %v685
      %v712 = vpack.c.bf16 %v688, %v687
      %v713 = vpack.c.bf16 %v690, %v689
      %v714 = vpack.c.bf16 %v692, %v691
      %v715 = vpack.c.bf16 %v694, %v693
      %v716 = vpack.c.bf16 %v696, %v695
      %v717 = vpack.c.bf16 %v698, %v697
      %v718 = vpack.c.bf16 %v700, %v699
      %v719 = vpack.c.bf16 %v702, %v701
      %v720 = vpack.c.bf16 %v704, %v703
      %737 = vrot.lane.b32.xlu0 %v705, 4
      %v738 = vpop.permute.xlu0 %737
      %739 = vrot.lane.b32.xlu0 %v706, 4
      %v740 = vpop.permute.xlu0 %739
      %741 = vrot.lane.b32.xlu0 %v707, 4
      %v742 = vpop.permute.xlu0 %741
      %743 = vrot.lane.b32.xlu0 %v708, 4
      %v744 = vpop.permute.xlu0 %743
      %745 = vrot.lane.b32.xlu0 %v709, 4
      %v746 = vpop.permute.xlu0 %745
      %747 = vrot.lane.b32.xlu0 %v710, 4
      %v748 = vpop.permute.xlu0 %747
      %749 = vrot.lane.b32.xlu0 %v711, 4
      %v750 = vpop.permute.xlu0 %749
      %751 = vrot.lane.b32.xlu0 %v712, 4
      %v752 = vpop.permute.xlu0 %751
      %753 = vrot.lane.b32.xlu0 %v713, 4
      %v754 = vpop.permute.xlu0 %753
      %755 = vrot.lane.b32.xlu0 %v714, 4
      %v756 = vpop.permute.xlu0 %755
      %757 = vrot.lane.b32.xlu0 %v715, 4
      %v758 = vpop.permute.xlu0 %757
      %759 = vrot.lane.b32.xlu0 %v716, 4
      %v760 = vpop.permute.xlu0 %759
      %761 = vrot.lane.b32.xlu0 %v717, 4
      %v762 = vpop.permute.xlu0 %761
      %763 = vrot.lane.b32.xlu0 %v718, 4
      %v764 = vpop.permute.xlu0 %763
      %765 = vrot.lane.b32.xlu0 %v719, 4
      %v766 = vpop.permute.xlu0 %765
      %767 = vrot.lane.b32.xlu0 %v720, 4
      %v768 = vpop.permute.xlu0 %767
      %vm785 = vcmask 64544
      %786 = vst.msk [vmem:[#allocation3] sm:$0xff] %vm785, %v738
      %787 = vst.msk [vmem:[#allocation3 + $0x8] sm:$0xff] %vm785, %v740
      %788 = vst.msk [vmem:[#allocation3 + $0x10] sm:$0xff] %vm785, %v742
      %789 = vst.msk [vmem:[#allocation3 + $0x18] sm:$0xff] %vm785, %v744
      %790 = vst.msk [vmem:[#allocation3 + $0x20] sm:$0xff] %vm785, %v746
      %791 = vst.msk [vmem:[#allocation3 + $0x28] sm:$0xff] %vm785, %v748
      %792 = vst.msk [vmem:[#allocation3 + $0x30] sm:$0xff] %vm785, %v750
      %793 = vst.msk [vmem:[#allocation3 + $0x38] sm:$0xff] %vm785, %v752
      %794 = vst.msk [vmem:[#allocation3 + $0x40] sm:$0xff] %vm785, %v754
      %795 = vst.msk [vmem:[#allocation3 + $0x48] sm:$0xff] %vm785, %v756
      %796 = vst.msk [vmem:[#allocation3 + $0x50] sm:$0xff] %vm785, %v758
      %797 = vst.msk [vmem:[#allocation3 + $0x58] sm:$0xff] %vm785, %v760
      %798 = vst.msk [vmem:[#allocation3 + $0x60] sm:$0xff] %vm785, %v762
      %799 = vst.msk [vmem:[#allocation3 + $0x68] sm:$0xff] %vm785, %v764
      %800 = vst.msk [vmem:[#allocation3 + $0x70] sm:$0xff] %vm785, %v766
      %801 = vst.msk [vmem:[#allocation3 + $0x78] sm:$0xff] %vm785, %v768
      %v802 = vld [vmem:[#allocation2 + $0x2] sm:$0xff]
      %v803 = vld [vmem:[#allocation2 + $0xa] sm:$0xff]
      %v804 = vld [vmem:[#allocation2 + $0x1a] sm:$0xff]
      %v805 = vld [vmem:[#allocation2 + $0x22] sm:$0xff]
      %v806 = vld [vmem:[#allocation2 + $0x32] sm:$0xff]
      %v807 = vld [vmem:[#allocation2 + $0x3a] sm:$0xff]
      %v808 = vld [vmem:[#allocation2 + $0x4a] sm:$0xff]
      %v809 = vld [vmem:[#allocation2 + $0x52] sm:$0xff]
      %v810 = vld [vmem:[#allocation2 + $0x62] sm:$0xff]
      %v811 = vld [vmem:[#allocation2 + $0x6a] sm:$0xff]
      %v812 = vld [vmem:[#allocation2 + $0x7a] sm:$0xff]
      %v813 = vld [vmem:[#allocation2 + $0x82] sm:$0xff]
      %v814 = vld [vmem:[#allocation2 + $0x92] sm:$0xff]
      %v815 = vld [vmem:[#allocation2 + $0x9a] sm:$0xff]
      %v816 = vld [vmem:[#allocation2 + $0xaa] sm:$0xff]
      %v817 = vld [vmem:[#allocation2 + $0xb2] sm:$0xff]
      %v818 = vld [vmem:[#allocation2 + $0xc2] sm:$0xff]
      %v819 = vld [vmem:[#allocation2 + $0xca] sm:$0xff]
      %v820 = vld [vmem:[#allocation2 + $0xda] sm:$0xff]
      %v821 = vld [vmem:[#allocation2 + $0xe2] sm:$0xff]
      %v822 = vld [vmem:[#allocation2 + $0xf2] sm:$0xff]
      %v823 = vld [vmem:[#allocation2 + $0xfa] sm:$0xff]
      %v824 = vld [vmem:[#allocation2 + $0x10a] sm:$0xff]
      %v825 = vld [vmem:[#allocation2 + $0x112] sm:$0xff]
      %v826 = vld [vmem:[#allocation2 + $0x122] sm:$0xff]
      %v827 = vld [vmem:[#allocation2 + $0x12a] sm:$0xff]
      %v828 = vld [vmem:[#allocation2 + $0x13a] sm:$0xff]
      %v829 = vld [vmem:[#allocation2 + $0x142] sm:$0xff]
      %v830 = vld [vmem:[#allocation2 + $0x152] sm:$0xff]
      %v831 = vld [vmem:[#allocation2 + $0x15a] sm:$0xff]
      %v832 = vld [vmem:[#allocation2 + $0x16a] sm:$0xff]
      %v833 = vld [vmem:[#allocation2 + $0x172] sm:$0xff]
      %v834 = vpack.c.bf16 %v803, %v802
      %v835 = vpack.c.bf16 %v805, %v804
      %v836 = vpack.c.bf16 %v807, %v806
      %v837 = vpack.c.bf16 %v809, %v808
      %v838 = vpack.c.bf16 %v811, %v810
      %v839 = vpack.c.bf16 %v813, %v812
      %v840 = vpack.c.bf16 %v815, %v814
      %v841 = vpack.c.bf16 %v817, %v816
      %v842 = vpack.c.bf16 %v819, %v818
      %v843 = vpack.c.bf16 %v821, %v820
      %v844 = vpack.c.bf16 %v823, %v822
      %v845 = vpack.c.bf16 %v825, %v824
      %v846 = vpack.c.bf16 %v827, %v826
      %v847 = vpack.c.bf16 %v829, %v828
      %v848 = vpack.c.bf16 %v831, %v830
      %v849 = vpack.c.bf16 %v833, %v832
      %866 = vrot.lane.b32.xlu0 %v834, 8
      %v867 = vpop.permute.xlu0 %866
      %868 = vrot.lane.b32.xlu0 %v835, 8
      %v869 = vpop.permute.xlu0 %868
      %870 = vrot.lane.b32.xlu0 %v836, 8
      %v871 = vpop.permute.xlu0 %870
      %872 = vrot.lane.b32.xlu0 %v837, 8
      %v873 = vpop.permute.xlu0 %872
      %874 = vrot.lane.b32.xlu0 %v838, 8
      %v875 = vpop.permute.xlu0 %874
      %876 = vrot.lane.b32.xlu0 %v839, 8
      %v877 = vpop.permute.xlu0 %876
      %878 = vrot.lane.b32.xlu0 %v840, 8
      %v879 = vpop.permute.xlu0 %878
      %880 = vrot.lane.b32.xlu0 %v841, 8
      %v881 = vpop.permute.xlu0 %880
      %882 = vrot.lane.b32.xlu0 %v842, 8
      %v883 = vpop.permute.xlu0 %882
      %884 = vrot.lane.b32.xlu0 %v843, 8
      %v885 = vpop.permute.xlu0 %884
      %886 = vrot.lane.b32.xlu0 %v844, 8
      %v887 = vpop.permute.xlu0 %886
      %888 = vrot.lane.b32.xlu0 %v845, 8
      %v889 = vpop.permute.xlu0 %888
      %890 = vrot.lane.b32.xlu0 %v846, 8
      %v891 = vpop.permute.xlu0 %890
      %892 = vrot.lane.b32.xlu0 %v847, 8
      %v893 = vpop.permute.xlu0 %892
      %894 = vrot.lane.b32.xlu0 %v848, 8
      %v895 = vpop.permute.xlu0 %894
      %896 = vrot.lane.b32.xlu0 %v849, 8
      %v897 = vpop.permute.xlu0 %896
      %vm914 = vcmask 97344
      %915 = vst.msk [vmem:[#allocation3] sm:$0xff] %vm914, %v867
      %916 = vst.msk [vmem:[#allocation3 + $0x8] sm:$0xff] %vm914, %v869
      %917 = vst.msk [vmem:[#allocation3 + $0x10] sm:$0xff] %vm914, %v871
      %918 = vst.msk [vmem:[#allocation3 + $0x18] sm:$0xff] %vm914, %v873
      %919 = vst.msk [vmem:[#allocation3 + $0x20] sm:$0xff] %vm914, %v875
      %920 = vst.msk [vmem:[#allocation3 + $0x28] sm:$0xff] %vm914, %v877
      %921 = vst.msk [vmem:[#allocation3 + $0x30] sm:$0xff] %vm914, %v879
      %922 = vst.msk [vmem:[#allocation3 + $0x38] sm:$0xff] %vm914, %v881
      %923 = vst.msk [vmem:[#allocation3 + $0x40] sm:$0xff] %vm914, %v883
      %924 = vst.msk [vmem:[#allocation3 + $0x48] sm:$0xff] %vm914, %v885
      %925 = vst.msk [vmem:[#allocation3 + $0x50] sm:$0xff] %vm914, %v887
      %926 = vst.msk [vmem:[#allocation3 + $0x58] sm:$0xff] %vm914, %v889
      %927 = vst.msk [vmem:[#allocation3 + $0x60] sm:$0xff] %vm914, %v891
      %928 = vst.msk [vmem:[#allocation3 + $0x68] sm:$0xff] %vm914, %v893
      %929 = vst.msk [vmem:[#allocation3 + $0x70] sm:$0xff] %vm914, %v895
      %930 = vst.msk [vmem:[#allocation3 + $0x78] sm:$0xff] %vm914, %v897
      %v931 = vld [vmem:[%s576] sm:$0xff]
      %v932 = vld [vmem:[%s576 + $0x8] sm:$0xff]
      %v933 = vld [vmem:[%s576 + $0x18] sm:$0xff]
      %v934 = vld [vmem:[%s576 + $0x20] sm:$0xff]
      %v935 = vld [vmem:[%s576 + $0x30] sm:$0xff]
      %v936 = vld [vmem:[%s576 + $0x38] sm:$0xff]
      %v937 = vld [vmem:[%s576 + $0x48] sm:$0xff]
      %v938 = vld [vmem:[%s576 + $0x50] sm:$0xff]
      %v939 = vld [vmem:[%s576 + $0x60] sm:$0xff]
      %v940 = vld [vmem:[%s576 + $0x68] sm:$0xff]
      %v941 = vld [vmem:[%s576 + $0x78] sm:$0xff]
      %v942 = vld [vmem:[%s576 + $0x80] sm:$0xff]
      %v943 = vld [vmem:[%s576 + $0x90] sm:$0xff]
      %v944 = vld [vmem:[%s576 + $0x98] sm:$0xff]
      %v945 = vld [vmem:[%s576 + $0xa8] sm:$0xff]
      %v946 = vld [vmem:[%s576 + $0xb0] sm:$0xff]
      %v947 = vld [vmem:[%s576 + $0xc0] sm:$0xff]
      %v948 = vld [vmem:[%s576 + $0xc8] sm:$0xff]
      %v949 = vld [vmem:[%s576 + $0xd8] sm:$0xff]
      %v950 = vld [vmem:[%s576 + $0xe0] sm:$0xff]
      %v951 = vld [vmem:[%s576 + $0xf0] sm:$0xff]
      %v952 = vld [vmem:[%s576 + $0xf8] sm:$0xff]
      %v953 = vld [vmem:[%s576 + $0x108] sm:$0xff]
      %v954 = vld [vmem:[%s576 + $0x110] sm:$0xff]
      %v955 = vld [vmem:[%s576 + $0x120] sm:$0xff]
      %v956 = vld [vmem:[%s576 + $0x128] sm:$0xff]
      %v957 = vld [vmem:[%s576 + $0x138] sm:$0xff]
      %v958 = vld [vmem:[%s576 + $0x140] sm:$0xff]
      %v959 = vld [vmem:[%s576 + $0x150] sm:$0xff]
      %v960 = vld [vmem:[%s576 + $0x158] sm:$0xff]
      %v961 = vld [vmem:[%s576 + $0x168] sm:$0xff]
      %v962 = vld [vmem:[%s576 + $0x170] sm:$0xff]
      %v963 = vpack.c.bf16 %v932, %v931
      %v964 = vpack.c.bf16 %v934, %v933
      %v965 = vpack.c.bf16 %v936, %v935
      %v966 = vpack.c.bf16 %v938, %v937
      %v967 = vpack.c.bf16 %v940, %v939
      %v968 = vpack.c.bf16 %v942, %v941
      %v969 = vpack.c.bf16 %v944, %v943
      %v970 = vpack.c.bf16 %v946, %v945
      %v971 = vpack.c.bf16 %v948, %v947
      %v972 = vpack.c.bf16 %v950, %v949
      %v973 = vpack.c.bf16 %v952, %v951
      %v974 = vpack.c.bf16 %v954, %v953
      %v975 = vpack.c.bf16 %v956, %v955
      %v976 = vpack.c.bf16 %v958, %v957
      %v977 = vpack.c.bf16 %v960, %v959
      %v978 = vpack.c.bf16 %v962, %v961
      %995 = vrot.lane.b32.xlu0 %v963, 12
      %v996 = vpop.permute.xlu0 %995
      %997 = vrot.lane.b32.xlu0 %v964, 12
      %v998 = vpop.permute.xlu0 %997
      %999 = vrot.lane.b32.xlu0 %v965, 12
      %v1000 = vpop.permute.xlu0 %999
      %1001 = vrot.lane.b32.xlu0 %v966, 12
      %v1002 = vpop.permute.xlu0 %1001
      %1003 = vrot.lane.b32.xlu0 %v967, 12
      %v1004 = vpop.permute.xlu0 %1003
      %1005 = vrot.lane.b32.xlu0 %v968, 12
      %v1006 = vpop.permute.xlu0 %1005
      %1007 = vrot.lane.b32.xlu0 %v969, 12
      %v1008 = vpop.permute.xlu0 %1007
      %1009 = vrot.lane.b32.xlu0 %v970, 12
      %v1010 = vpop.permute.xlu0 %1009
      %1011 = vrot.lane.b32.xlu0 %v971, 12
      %v1012 = vpop.permute.xlu0 %1011
      %1013 = vrot.lane.b32.xlu0 %v972, 12
      %v1014 = vpop.permute.xlu0 %1013
      %1015 = vrot.lane.b32.xlu0 %v973, 12
      %v1016 = vpop.permute.xlu0 %1015
      %1017 = vrot.lane.b32.xlu0 %v974, 12
      %v1018 = vpop.permute.xlu0 %1017
      %1019 = vrot.lane.b32.xlu0 %v975, 12
      %v1020 = vpop.permute.xlu0 %1019
      %1021 = vrot.lane.b32.xlu0 %v976, 12
      %v1022 = vpop.permute.xlu0 %1021
      %1023 = vrot.lane.b32.xlu0 %v977, 12
      %v1024 = vpop.permute.xlu0 %1023
      %1025 = vrot.lane.b32.xlu0 %v978, 12
      %v1026 = vpop.permute.xlu0 %1025
      %vm1043 = vcmask 130144
      %1044 = vst.msk [vmem:[#allocation3] sm:$0xff] %vm1043, %v996
      %1045 = vst.msk [vmem:[#allocation3 + $0x8] sm:$0xff] %vm1043, %v998
      %1046 = vst.msk [vmem:[#allocation3 + $0x10] sm:$0xff] %vm1043, %v1000
      %1047 = vst.msk [vmem:[#allocation3 + $0x18] sm:$0xff] %vm1043, %v1002
      %1048 = vst.msk [vmem:[#allocation3 + $0x20] sm:$0xff] %vm1043, %v1004
      %1049 = vst.msk [vmem:[#allocation3 + $0x28] sm:$0xff] %vm1043, %v1006
      %1050 = vst.msk [vmem:[#allocation3 + $0x30] sm:$0xff] %vm1043, %v1008
      %1051 = vst.msk [vmem:[#allocation3 + $0x38] sm:$0xff] %vm1043, %v1010
      %1052 = vst.msk [vmem:[#allocation3 + $0x40] sm:$0xff] %vm1043, %v1012
      %1053 = vst.msk [vmem:[#allocation3 + $0x48] sm:$0xff] %vm1043, %v1014
      %1054 = vst.msk [vmem:[#allocation3 + $0x50] sm:$0xff] %vm1043, %v1016
      %1055 = vst.msk [vmem:[#allocation3 + $0x58] sm:$0xff] %vm1043, %v1018
      %1056 = vst.msk [vmem:[#allocation3 + $0x60] sm:$0xff] %vm1043, %v1020
      %1057 = vst.msk [vmem:[#allocation3 + $0x68] sm:$0xff] %vm1043, %v1022
      %1058 = vst.msk [vmem:[#allocation3 + $0x70] sm:$0xff] %vm1043, %v1024
      %1059 = vst.msk [vmem:[#allocation3 + $0x78] sm:$0xff] %vm1043, %v1026
      %v1060 = vld [vmem:[%s576 + $0x1] sm:$0xff]
      %v1061 = vld [vmem:[%s576 + $0x9] sm:$0xff]
      %v1062 = vld [vmem:[%s576 + $0x19] sm:$0xff]
      %v1063 = vld [vmem:[%s576 + $0x21] sm:$0xff]
      %v1064 = vld [vmem:[%s576 + $0x31] sm:$0xff]
      %v1065 = vld [vmem:[%s576 + $0x39] sm:$0xff]
      %v1066 = vld [vmem:[%s576 + $0x49] sm:$0xff]
      %v1067 = vld [vmem:[%s576 + $0x51] sm:$0xff]
      %v1068 = vld [vmem:[%s576 + $0x61] sm:$0xff]
      %v1069 = vld [vmem:[%s576 + $0x69] sm:$0xff]
      %v1070 = vld [vmem:[%s576 + $0x79] sm:$0xff]
      %v1071 = vld [vmem:[%s576 + $0x81] sm:$0xff]
      %v1072 = vld [vmem:[%s576 + $0x91] sm:$0xff]
      %v1073 = vld [vmem:[%s576 + $0x99] sm:$0xff]
      %v1074 = vld [vmem:[%s576 + $0xa9] sm:$0xff]
      %v1075 = vld [vmem:[%s576 + $0xb1] sm:$0xff]
      %v1076 = vld [vmem:[%s576 + $0xc1] sm:$0xff]
      %v1077 = vld [vmem:[%s576 + $0xc9] sm:$0xff]
      %v1078 = vld [vmem:[%s576 + $0xd9] sm:$0xff]
      %v1079 = vld [vmem:[%s576 + $0xe1] sm:$0xff]
      %v1080 = vld [vmem:[%s576 + $0xf1] sm:$0xff]
      %v1081 = vld [vmem:[%s576 + $0xf9] sm:$0xff]
      %v1082 = vld [vmem:[%s576 + $0x109] sm:$0xff]
      %v1083 = vld [vmem:[%s576 + $0x111] sm:$0xff]
      %v1084 = vld [vmem:[%s576 + $0x121] sm:$0xff]
      %v1085 = vld [vmem:[%s576 + $0x129] sm:$0xff]
      %v1086 = vld [vmem:[%s576 + $0x139] sm:$0xff]
      %v1087 = vld [vmem:[%s576 + $0x141] sm:$0xff]
      %v1088 = vld [vmem:[%s576 + $0x151] sm:$0xff]
      %v1089 = vld [vmem:[%s576 + $0x159] sm:$0xff]
      %v1090 = vld [vmem:[%s576 + $0x169] sm:$0xff]
      %v1091 = vld [vmem:[%s576 + $0x171] sm:$0xff]
      %v1092 = vpack.c.bf16 %v1061, %v1060
      %v1093 = vpack.c.bf16 %v1063, %v1062
      %v1094 = vpack.c.bf16 %v1065, %v1064
      %v1095 = vpack.c.bf16 %v1067, %v1066
      %v1096 = vpack.c.bf16 %v1069, %v1068
      %v1097 = vpack.c.bf16 %v1071, %v1070
      %v1098 = vpack.c.bf16 %v1073, %v1072
      %v1099 = vpack.c.bf16 %v1075, %v1074
      %v1100 = vpack.c.bf16 %v1077, %v1076
      %v1101 = vpack.c.bf16 %v1079, %v1078
      %v1102 = vpack.c.bf16 %v1081, %v1080
      %v1103 = vpack.c.bf16 %v1083, %v1082
      %v1104 = vpack.c.bf16 %v1085, %v1084
      %v1105 = vpack.c.bf16 %v1087, %v1086
      %v1106 = vpack.c.bf16 %v1089, %v1088
      %v1107 = vpack.c.bf16 %v1091, %v1090
      %1124 = vrot.lane.b32.xlu0 %v1092, 16
      %v1125 = vpop.permute.xlu0 %1124
      %1126 = vrot.lane.b32.xlu0 %v1093, 16
      %v1127 = vpop.permute.xlu0 %1126
      %1128 = vrot.lane.b32.xlu0 %v1094, 16
      %v1129 = vpop.permute.xlu0 %1128
      %1130 = vrot.lane.b32.xlu0 %v1095, 16
      %v1131 = vpop.permute.xlu0 %1130
      %1132 = vrot.lane.b32.xlu0 %v1096, 16
      %v1133 = vpop.permute.xlu0 %1132
      %1134 = vrot.lane.b32.xlu0 %v1097, 16
      %v1135 = vpop.permute.xlu0 %1134
      %1136 = vrot.lane.b32.xlu0 %v1098, 16
      %v1137 = vpop.permute.xlu0 %1136
      %1138 = vrot.lane.b32.xlu0 %v1099, 16
      %v1139 = vpop.permute.xlu0 %1138
      %1140 = vrot.lane.b32.xlu0 %v1100, 16
      %v1141 = vpop.permute.xlu0 %1140
      %1142 = vrot.lane.b32.xlu0 %v1101, 16
      %v1143 = vpop.permute.xlu0 %1142
      %1144 = vrot.lane.b32.xlu0 %v1102, 16
      %v1145 = vpop.permute.xlu0 %1144
      %1146 = vrot.lane.b32.xlu0 %v1103, 16
      %v1147 = vpop.permute.xlu0 %1146
      %1148 = vrot.lane.b32.xlu0 %v1104, 16
      %v1149 = vpop.permute.xlu0 %1148
      %1150 = vrot.lane.b32.xlu0 %v1105, 16
      %v1151 = vpop.permute.xlu0 %1150
      %1152 = vrot.lane.b32.xlu0 %v1106, 16
      %v1153 = vpop.permute.xlu0 %1152
      %1154 = vrot.lane.b32.xlu0 %v1107, 16
      %v1155 = vpop.permute.xlu0 %1154
      %vm1172 = vcmask 162944
      %1173 = vst.msk [vmem:[#allocation3] sm:$0xff] %vm1172, %v1125
      %1174 = vst.msk [vmem:[#allocation3 + $0x8] sm:$0xff] %vm1172, %v1127
      %1175 = vst.msk [vmem:[#allocation3 + $0x10] sm:$0xff] %vm1172, %v1129
      %1176 = vst.msk [vmem:[#allocation3 + $0x18] sm:$0xff] %vm1172, %v1131
      %1177 = vst.msk [vmem:[#allocation3 + $0x20] sm:$0xff] %vm1172, %v1133
      %1178 = vst.msk [vmem:[#allocation3 + $0x28] sm:$0xff] %vm1172, %v1135
      %1179 = vst.msk [vmem:[#allocation3 + $0x30] sm:$0xff] %vm1172, %v1137
      %1180 = vst.msk [vmem:[#allocation3 + $0x38] sm:$0xff] %vm1172, %v1139
      %1181 = vst.msk [vmem:[#allocation3 + $0x40] sm:$0xff] %vm1172, %v1141
      %1182 = vst.msk [vmem:[#allocation3 + $0x48] sm:$0xff] %vm1172, %v1143
      %1183 = vst.msk [vmem:[#allocation3 + $0x50] sm:$0xff] %vm1172, %v1145
      %1184 = vst.msk [vmem:[#allocation3 + $0x58] sm:$0xff] %vm1172, %v1147
      %1185 = vst.msk [vmem:[#allocation3 + $0x60] sm:$0xff] %vm1172, %v1149
      %1186 = vst.msk [vmem:[#allocation3 + $0x68] sm:$0xff] %vm1172, %v1151
      %1187 = vst.msk [vmem:[#allocation3 + $0x70] sm:$0xff] %vm1172, %v1153
      %1188 = vst.msk [vmem:[#allocation3 + $0x78] sm:$0xff] %vm1172, %v1155
      %v1189 = vld [vmem:[%s576 + $0x2] sm:$0xff]
      %v1190 = vld [vmem:[%s576 + $0xa] sm:$0xff]
      %v1191 = vld [vmem:[%s576 + $0x1a] sm:$0xff]
      %v1192 = vld [vmem:[%s576 + $0x22] sm:$0xff]
      %v1193 = vld [vmem:[%s576 + $0x32] sm:$0xff]
      %v1194 = vld [vmem:[%s576 + $0x3a] sm:$0xff]
      %v1195 = vld [vmem:[%s576 + $0x4a] sm:$0xff]
      %v1196 = vld [vmem:[%s576 + $0x52] sm:$0xff]
      %v1197 = vld [vmem:[%s576 + $0x62] sm:$0xff]
      %v1198 = vld [vmem:[%s576 + $0x6a] sm:$0xff]
      %v1199 = vld [vmem:[%s576 + $0x7a] sm:$0xff]
      %v1200 = vld [vmem:[%s576 + $0x82] sm:$0xff]
      %v1201 = vld [vmem:[%s576 + $0x92] sm:$0xff]
      %v1202 = vld [vmem:[%s576 + $0x9a] sm:$0xff]
      %v1203 = vld [vmem:[%s576 + $0xaa] sm:$0xff]
      %v1204 = vld [vmem:[%s576 + $0xb2] sm:$0xff]
      %v1205 = vld [vmem:[%s576 + $0xc2] sm:$0xff]
      %v1206 = vld [vmem:[%s576 + $0xca] sm:$0xff]
      %v1207 = vld [vmem:[%s576 + $0xda] sm:$0xff]
      %v1208 = vld [vmem:[%s576 + $0xe2] sm:$0xff]
      %v1209 = vld [vmem:[%s576 + $0xf2] sm:$0xff]
      %v1210 = vld [vmem:[%s576 + $0xfa] sm:$0xff]
      %v1211 = vld [vmem:[%s576 + $0x10a] sm:$0xff]
      %v1212 = vld [vmem:[%s576 + $0x112] sm:$0xff]
      %v1213 = vld [vmem:[%s576 + $0x122] sm:$0xff]
      %v1214 = vld [vmem:[%s576 + $0x12a] sm:$0xff]
      %v1215 = vld [vmem:[%s576 + $0x13a] sm:$0xff]
      %v1216 = vld [vmem:[%s576 + $0x142] sm:$0xff]
      %v1217 = vld [vmem:[%s576 + $0x152] sm:$0xff]
      %v1218 = vld [vmem:[%s576 + $0x15a] sm:$0xff]
      %v1219 = vld [vmem:[%s576 + $0x16a] sm:$0xff]
      %v1220 = vld [vmem:[%s576 + $0x172] sm:$0xff]
      %v1221 = vpack.c.bf16 %v1190, %v1189
      %v1222 = vpack.c.bf16 %v1192, %v1191
      %v1223 = vpack.c.bf16 %v1194, %v1193
      %v1224 = vpack.c.bf16 %v1196, %v1195
      %v1225 = vpack.c.bf16 %v1198, %v1197
      %v1226 = vpack.c.bf16 %v1200, %v1199
      %v1227 = vpack.c.bf16 %v1202, %v1201
      %v1228 = vpack.c.bf16 %v1204, %v1203
      %v1229 = vpack.c.bf16 %v1206, %v1205
      %v1230 = vpack.c.bf16 %v1208, %v1207
      %v1231 = vpack.c.bf16 %v1210, %v1209
      %v1232 = vpack.c.bf16 %v1212, %v1211
      %v1233 = vpack.c.bf16 %v1214, %v1213
      %v1234 = vpack.c.bf16 %v1216, %v1215
      %v1235 = vpack.c.bf16 %v1218, %v1217
      %v1236 = vpack.c.bf16 %v1220, %v1219
      %1253 = vrot.lane.b32.xlu0 %v1221, 20
      %v1254 = vpop.permute.xlu0 %1253
      %1255 = vrot.lane.b32.xlu0 %v1222, 20
      %v1256 = vpop.permute.xlu0 %1255
      %1257 = vrot.lane.b32.xlu0 %v1223, 20
      %v1258 = vpop.permute.xlu0 %1257
      %1259 = vrot.lane.b32.xlu0 %v1224, 20
      %v1260 = vpop.permute.xlu0 %1259
      %1261 = vrot.lane.b32.xlu0 %v1225, 20
      %v1262 = vpop.permute.xlu0 %1261
      %1263 = vrot.lane.b32.xlu0 %v1226, 20
      %v1264 = vpop.permute.xlu0 %1263
      %1265 = vrot.lane.b32.xlu0 %v1227, 20
      %v1266 = vpop.permute.xlu0 %1265
      %1267 = vrot.lane.b32.xlu0 %v1228, 20
      %v1268 = vpop.permute.xlu0 %1267
      %1269 = vrot.lane.b32.xlu0 %v1229, 20
      %v1270 = vpop.permute.xlu0 %1269
      %1271 = vrot.lane.b32.xlu0 %v1230, 20
      %v1272 = vpop.permute.xlu0 %1271
      %1273 = vrot.lane.b32.xlu0 %v1231, 20
      %v1274 = vpop.permute.xlu0 %1273
      %1275 = vrot.lane.b32.xlu0 %v1232, 20
      %v1276 = vpop.permute.xlu0 %1275
      %1277 = vrot.lane.b32.xlu0 %v1233, 20
      %v1278 = vpop.permute.xlu0 %1277
      %1279 = vrot.lane.b32.xlu0 %v1234, 20
      %v1280 = vpop.permute.xlu0 %1279
      %1281 = vrot.lane.b32.xlu0 %v1235, 20
      %v1282 = vpop.permute.xlu0 %1281
      %1283 = vrot.lane.b32.xlu0 %v1236, 20
      %v1284 = vpop.permute.xlu0 %1283
      %vm1301 = vcmask 195744
      %1302 = vst.msk [vmem:[#allocation3] sm:$0xff] %vm1301, %v1254
      %1303 = vst.msk [vmem:[#allocation3 + $0x8] sm:$0xff] %vm1301, %v1256
      %1304 = vst.msk [vmem:[#allocation3 + $0x10] sm:$0xff] %vm1301, %v1258
      %1305 = vst.msk [vmem:[#allocation3 + $0x18] sm:$0xff] %vm1301, %v1260
      %1306 = vst.msk [vmem:[#allocation3 + $0x20] sm:$0xff] %vm1301, %v1262
      %1307 = vst.msk [vmem:[#allocation3 + $0x28] sm:$0xff] %vm1301, %v1264
      %1308 = vst.msk [vmem:[#allocation3 + $0x30] sm:$0xff] %vm1301, %v1266
      %1309 = vst.msk [vmem:[#allocation3 + $0x38] sm:$0xff] %vm1301, %v1268
      %1310 = vst.msk [vmem:[#allocation3 + $0x40] sm:$0xff] %vm1301, %v1270
      %1311 = vst.msk [vmem:[#allocation3 + $0x48] sm:$0xff] %vm1301, %v1272
      %1312 = vst.msk [vmem:[#allocation3 + $0x50] sm:$0xff] %vm1301, %v1274
      %1313 = vst.msk [vmem:[#allocation3 + $0x58] sm:$0xff] %vm1301, %v1276
      %1314 = vst.msk [vmem:[#allocation3 + $0x60] sm:$0xff] %vm1301, %v1278
      %1315 = vst.msk [vmem:[#allocation3 + $0x68] sm:$0xff] %vm1301, %v1280
      %1316 = vst.msk [vmem:[#allocation3 + $0x70] sm:$0xff] %vm1301, %v1282
      %1317 = vst.msk [vmem:[#allocation3 + $0x78] sm:$0xff] %vm1301, %v1284
      %s1318 = scalar_lea.vmem [#allocation2], 48
      %v1319 = vld [vmem:[%s1318] sm:$0xff]
      %v1320 = vld [vmem:[%s1318 + $0x8] sm:$0xff]
      %v1321 = vld [vmem:[%s1318 + $0x18] sm:$0xff]
      %v1322 = vld [vmem:[%s1318 + $0x20] sm:$0xff]
      %v1323 = vld [vmem:[%s1318 + $0x30] sm:$0xff]
      %v1324 = vld [vmem:[%s1318 + $0x38] sm:$0xff]
      %v1325 = vld [vmem:[%s1318 + $0x48] sm:$0xff]
      %v1326 = vld [vmem:[%s1318 + $0x50] sm:$0xff]
      %v1327 = vld [vmem:[%s1318 + $0x60] sm:$0xff]
      %v1328 = vld [vmem:[%s1318 + $0x68] sm:$0xff]
      %v1329 = vld [vmem:[%s1318 + $0x78] sm:$0xff]
      %v1330 = vld [vmem:[%s1318 + $0x80] sm:$0xff]
      %v1331 = vld [vmem:[%s1318 + $0x90] sm:$0xff]
      %v1332 = vld [vmem:[%s1318 + $0x98] sm:$0xff]
      %v1333 = vld [vmem:[%s1318 + $0xa8] sm:$0xff]
      %v1334 = vld [vmem:[%s1318 + $0xb0] sm:$0xff]
      %v1335 = vld [vmem:[%s1318 + $0xc0] sm:$0xff]
      %v1336 = vld [vmem:[%s1318 + $0xc8] sm:$0xff]
      %v1337 = vld [vmem:[%s1318 + $0xd8] sm:$0xff]
      %v1338 = vld [vmem:[%s1318 + $0xe0] sm:$0xff]
      %v1339 = vld [vmem:[%s1318 + $0xf0] sm:$0xff]
      %v1340 = vld [vmem:[%s1318 + $0xf8] sm:$0xff]
      %v1341 = vld [vmem:[%s1318 + $0x108] sm:$0xff]
      %v1342 = vld [vmem:[%s1318 + $0x110] sm:$0xff]
      %v1343 = vld [vmem:[%s1318 + $0x120] sm:$0xff]
      %v1344 = vld [vmem:[%s1318 + $0x128] sm:$0xff]
      %v1345 = vld [vmem:[%s1318 + $0x138] sm:$0xff]
      %v1346 = vld [vmem:[%s1318 + $0x140] sm:$0xff]
      %v1347 = vld [vmem:[%s1318 + $0x150] sm:$0xff]
      %v1348 = vld [vmem:[%s1318 + $0x158] sm:$0xff]
      %v1349 = vld [vmem:[%s1318 + $0x168] sm:$0xff]
      %v1350 = vld [vmem:[%s1318 + $0x170] sm:$0xff]
      %v1351 = vpack.c.bf16 %v1320, %v1319
      %v1352 = vpack.c.bf16 %v1322, %v1321
      %v1353 = vpack.c.bf16 %v1324, %v1323
      %v1354 = vpack.c.bf16 %v1326, %v1325
      %v1355 = vpack.c.bf16 %v1328, %v1327
      %v1356 = vpack.c.bf16 %v1330, %v1329
      %v1357 = vpack.c.bf16 %v1332, %v1331
      %v1358 = vpack.c.bf16 %v1334, %v1333
      %v1359 = vpack.c.bf16 %v1336, %v1335
      %v1360 = vpack.c.bf16 %v1338, %v1337
      %v1361 = vpack.c.bf16 %v1340, %v1339
      %v1362 = vpack.c.bf16 %v1342, %v1341
      %v1363 = vpack.c.bf16 %v1344, %v1343
      %v1364 = vpack.c.bf16 %v1346, %v1345
      %v1365 = vpack.c.bf16 %v1348, %v1347
      %v1366 = vpack.c.bf16 %v1350, %v1349
      %1383 = vrot.lane.b32.xlu0 %v1351, 24
      %v1384 = vpop.permute.xlu0 %1383
      %1385 = vrot.lane.b32.xlu0 %v1352, 24
      %v1386 = vpop.permute.xlu0 %1385
      %1387 = vrot.lane.b32.xlu0 %v1353, 24
      %v1388 = vpop.permute.xlu0 %1387
      %1389 = vrot.lane.b32.xlu0 %v1354, 24
      %v1390 = vpop.permute.xlu0 %1389
      %1391 = vrot.lane.b32.xlu0 %v1355, 24
      %v1392 = vpop.permute.xlu0 %1391
      %1393 = vrot.lane.b32.xlu0 %v1356, 24
      %v1394 = vpop.permute.xlu0 %1393
      %1395 = vrot.lane.b32.xlu0 %v1357, 24
      %v1396 = vpop.permute.xlu0 %1395
      %1397 = vrot.lane.b32.xlu0 %v1358, 24
      %v1398 = vpop.permute.xlu0 %1397
      %1399 = vrot.lane.b32.xlu0 %v1359, 24
      %v1400 = vpop.permute.xlu0 %1399
      %1401 = vrot.lane.b32.xlu0 %v1360, 24
      %v1402 = vpop.permute.xlu0 %1401
      %1403 = vrot.lane.b32.xlu0 %v1361, 24
      %v1404 = vpop.permute.xlu0 %1403
      %1405 = vrot.lane.b32.xlu0 %v1362, 24
      %v1406 = vpop.permute.xlu0 %1405
      %1407 = vrot.lane.b32.xlu0 %v1363, 24
      %v1408 = vpop.permute.xlu0 %1407
      %1409 = vrot.lane.b32.xlu0 %v1364, 24
      %v1410 = vpop.permute.xlu0 %1409
      %1411 = vrot.lane.b32.xlu0 %v1365, 24
      %v1412 = vpop.permute.xlu0 %1411
      %1413 = vrot.lane.b32.xlu0 %v1366, 24
      %v1414 = vpop.permute.xlu0 %1413
      %vm1431 = vcmask 228544
      %1432 = vst.msk [vmem:[#allocation3] sm:$0xff] %vm1431, %v1384
      %1433 = vst.msk [vmem:[#allocation3 + $0x8] sm:$0xff] %vm1431, %v1386
      %1434 = vst.msk [vmem:[#allocation3 + $0x10] sm:$0xff] %vm1431, %v1388
      %1435 = vst.msk [vmem:[#allocation3 + $0x18] sm:$0xff] %vm1431, %v1390
      %1436 = vst.msk [vmem:[#allocation3 + $0x20] sm:$0xff] %vm1431, %v1392
      %1437 = vst.msk [vmem:[#allocation3 + $0x28] sm:$0xff] %vm1431, %v1394
      %1438 = vst.msk [vmem:[#allocation3 + $0x30] sm:$0xff] %vm1431, %v1396
      %1439 = vst.msk [vmem:[#allocation3 + $0x38] sm:$0xff] %vm1431, %v1398
      %1440 = vst.msk [vmem:[#allocation3 + $0x40] sm:$0xff] %vm1431, %v1400
      %1441 = vst.msk [vmem:[#allocation3 + $0x48] sm:$0xff] %vm1431, %v1402
      %1442 = vst.msk [vmem:[#allocation3 + $0x50] sm:$0xff] %vm1431, %v1404
      %1443 = vst.msk [vmem:[#allocation3 + $0x58] sm:$0xff] %vm1431, %v1406
      %1444 = vst.msk [vmem:[#allocation3 + $0x60] sm:$0xff] %vm1431, %v1408
      %1445 = vst.msk [vmem:[#allocation3 + $0x68] sm:$0xff] %vm1431, %v1410
      %1446 = vst.msk [vmem:[#allocation3 + $0x70] sm:$0xff] %vm1431, %v1412
      %1447 = vst.msk [vmem:[#allocation3 + $0x78] sm:$0xff] %vm1431, %v1414
      %v1448 = vld [vmem:[%s1318 + $0x1] sm:$0xff]
      %v1449 = vld [vmem:[%s1318 + $0x9] sm:$0xff]
      %v1450 = vld [vmem:[%s1318 + $0x19] sm:$0xff]
      %v1451 = vld [vmem:[%s1318 + $0x21] sm:$0xff]
      %v1452 = vld [vmem:[%s1318 + $0x31] sm:$0xff]
      %v1453 = vld [vmem:[%s1318 + $0x39] sm:$0xff]
      %v1454 = vld [vmem:[%s1318 + $0x49] sm:$0xff]
      %v1455 = vld [vmem:[%s1318 + $0x51] sm:$0xff]
      %v1456 = vld [vmem:[%s1318 + $0x61] sm:$0xff]
      %v1457 = vld [vmem:[%s1318 + $0x69] sm:$0xff]
      %v1458 = vld [vmem:[%s1318 + $0x79] sm:$0xff]
      %v1459 = vld [vmem:[%s1318 + $0x81] sm:$0xff]
      %v1460 = vld [vmem:[%s1318 + $0x91] sm:$0xff]
      %v1461 = vld [vmem:[%s1318 + $0x99] sm:$0xff]
      %v1462 = vld [vmem:[%s1318 + $0xa9] sm:$0xff]
      %v1463 = vld [vmem:[%s1318 + $0xb1] sm:$0xff]
      %v1464 = vld [vmem:[%s1318 + $0xc1] sm:$0xff]
      %v1465 = vld [vmem:[%s1318 + $0xc9] sm:$0xff]
      %v1466 = vld [vmem:[%s1318 + $0xd9] sm:$0xff]
      %v1467 = vld [vmem:[%s1318 + $0xe1] sm:$0xff]
      %v1468 = vld [vmem:[%s1318 + $0xf1] sm:$0xff]
      %v1469 = vld [vmem:[%s1318 + $0xf9] sm:$0xff]
      %v1470 = vld [vmem:[%s1318 + $0x109] sm:$0xff]
      %v1471 = vld [vmem:[%s1318 + $0x111] sm:$0xff]
      %v1472 = vld [vmem:[%s1318 + $0x121] sm:$0xff]
      %v1473 = vld [vmem:[%s1318 + $0x129] sm:$0xff]
      %v1474 = vld [vmem:[%s1318 + $0x139] sm:$0xff]
      %v1475 = vld [vmem:[%s1318 + $0x141] sm:$0xff]
      %v1476 = vld [vmem:[%s1318 + $0x151] sm:$0xff]
      %v1477 = vld [vmem:[%s1318 + $0x159] sm:$0xff]
      %v1478 = vld [vmem:[%s1318 + $0x169] sm:$0xff]
      %v1479 = vld [vmem:[%s1318 + $0x171] sm:$0xff]
      %v1480 = vpack.c.bf16 %v1449, %v1448
      %v1481 = vpack.c.bf16 %v1451, %v1450
      %v1482 = vpack.c.bf16 %v1453, %v1452
      %v1483 = vpack.c.bf16 %v1455, %v1454
      %v1484 = vpack.c.bf16 %v1457, %v1456
      %v1485 = vpack.c.bf16 %v1459, %v1458
      %v1486 = vpack.c.bf16 %v1461, %v1460
      %v1487 = vpack.c.bf16 %v1463, %v1462
      %v1488 = vpack.c.bf16 %v1465, %v1464
      %v1489 = vpack.c.bf16 %v1467, %v1466
      %v1490 = vpack.c.bf16 %v1469, %v1468
      %v1491 = vpack.c.bf16 %v1471, %v1470
      %v1492 = vpack.c.bf16 %v1473, %v1472
      %v1493 = vpack.c.bf16 %v1475, %v1474
      %v1494 = vpack.c.bf16 %v1477, %v1476
      %v1495 = vpack.c.bf16 %v1479, %v1478
      %1512 = vrot.lane.b32.xlu0 %v1480, 28
      %v1513 = vpop.permute.xlu0 %1512
      %1514 = vrot.lane.b32.xlu0 %v1481, 28
      %v1515 = vpop.permute.xlu0 %1514
      %1516 = vrot.lane.b32.xlu0 %v1482, 28
      %v1517 = vpop.permute.xlu0 %1516
      %1518 = vrot.lane.b32.xlu0 %v1483, 28
      %v1519 = vpop.permute.xlu0 %1518
      %1520 = vrot.lane.b32.xlu0 %v1484, 28
      %v1521 = vpop.permute.xlu0 %1520
      %1522 = vrot.lane.b32.xlu0 %v1485, 28
      %v1523 = vpop.permute.xlu0 %1522
      %1524 = vrot.lane.b32.xlu0 %v1486, 28
      %v1525 = vpop.permute.xlu0 %1524
      %1526 = vrot.lane.b32.xlu0 %v1487, 28
      %v1527 = vpop.permute.xlu0 %1526
      %1528 = vrot.lane.b32.xlu0 %v1488, 28
      %v1529 = vpop.permute.xlu0 %1528
      %1530 = vrot.lane.b32.xlu0 %v1489, 28
      %v1531 = vpop.permute.xlu0 %1530
      %1532 = vrot.lane.b32.xlu0 %v1490, 28
      %v1533 = vpop.permute.xlu0 %1532
      %1534 = vrot.lane.b32.xlu0 %v1491, 28
      %v1535 = vpop.permute.xlu0 %1534
      %1536 = vrot.lane.b32.xlu0 %v1492, 28
      %v1537 = vpop.permute.xlu0 %1536
      %1538 = vrot.lane.b32.xlu0 %v1493, 28
      %v1539 = vpop.permute.xlu0 %1538
      %1540 = vrot.lane.b32.xlu0 %v1494, 28
      %v1541 = vpop.permute.xlu0 %1540
      %1542 = vrot.lane.b32.xlu0 %v1495, 28
      %v1543 = vpop.permute.xlu0 %1542
      %vm1560 = vcmask 261344
      %1561 = vst.msk [vmem:[#allocation3] sm:$0xff] %vm1560, %v1513
      %1562 = vst.msk [vmem:[#allocation3 + $0x8] sm:$0xff] %vm1560, %v1515
      %1563 = vst.msk [vmem:[#allocation3 + $0x10] sm:$0xff] %vm1560, %v1517
      %1564 = vst.msk [vmem:[#allocation3 + $0x18] sm:$0xff] %vm1560, %v1519
      %1565 = vst.msk [vmem:[#allocation3 + $0x20] sm:$0xff] %vm1560, %v1521
      %1566 = vst.msk [vmem:[#allocation3 + $0x28] sm:$0xff] %vm1560, %v1523
      %1567 = vst.msk [vmem:[#allocation3 + $0x30] sm:$0xff] %vm1560, %v1525
      %1568 = vst.msk [vmem:[#allocation3 + $0x38] sm:$0xff] %vm1560, %v1527
      %1569 = vst.msk [vmem:[#allocation3 + $0x40] sm:$0xff] %vm1560, %v1529
      %1570 = vst.msk [vmem:[#allocation3 + $0x48] sm:$0xff] %vm1560, %v1531
      %1571 = vst.msk [vmem:[#allocation3 + $0x50] sm:$0xff] %vm1560, %v1533
      %1572 = vst.msk [vmem:[#allocation3 + $0x58] sm:$0xff] %vm1560, %v1535
      %1573 = vst.msk [vmem:[#allocation3 + $0x60] sm:$0xff] %vm1560, %v1537
      %1574 = vst.msk [vmem:[#allocation3 + $0x68] sm:$0xff] %vm1560, %v1539
      %1575 = vst.msk [vmem:[#allocation3 + $0x70] sm:$0xff] %vm1560, %v1541
      %1576 = vst.msk [vmem:[#allocation3 + $0x78] sm:$0xff] %vm1560, %v1543
      %v1577 = vld [vmem:[%s1318 + $0x2] sm:$0xff]
      %v1578 = vld [vmem:[%s1318 + $0xa] sm:$0xff]
      %v1579 = vld [vmem:[%s1318 + $0x1a] sm:$0xff]
      %v1580 = vld [vmem:[%s1318 + $0x22] sm:$0xff]
      %v1581 = vld [vmem:[%s1318 + $0x32] sm:$0xff]
      %v1582 = vld [vmem:[%s1318 + $0x3a] sm:$0xff]
      %v1583 = vld [vmem:[%s1318 + $0x4a] sm:$0xff]
      %v1584 = vld [vmem:[%s1318 + $0x52] sm:$0xff]
      %v1585 = vld [vmem:[%s1318 + $0x62] sm:$0xff]
      %v1586 = vld [vmem:[%s1318 + $0x6a] sm:$0xff]
      %v1587 = vld [vmem:[%s1318 + $0x7a] sm:$0xff]
      %v1588 = vld [vmem:[%s1318 + $0x82] sm:$0xff]
      %v1589 = vld [vmem:[%s1318 + $0x92] sm:$0xff]
      %v1590 = vld [vmem:[%s1318 + $0x9a] sm:$0xff]
      %v1591 = vld [vmem:[%s1318 + $0xaa] sm:$0xff]
      %v1592 = vld [vmem:[%s1318 + $0xb2] sm:$0xff]
      %v1593 = vld [vmem:[%s1318 + $0xc2] sm:$0xff]
      %v1594 = vld [vmem:[%s1318 + $0xca] sm:$0xff]
      %v1595 = vld [vmem:[%s1318 + $0xda] sm:$0xff]
      %v1596 = vld [vmem:[%s1318 + $0xe2] sm:$0xff]
      %v1597 = vld [vmem:[%s1318 + $0xf2] sm:$0xff]
      %v1598 = vld [vmem:[%s1318 + $0xfa] sm:$0xff]
      %v1599 = vld [vmem:[%s1318 + $0x10a] sm:$0xff]
      %v1600 = vld [vmem:[%s1318 + $0x112] sm:$0xff]
      %v1601 = vld [vmem:[%s1318 + $0x122] sm:$0xff]
      %v1602 = vld [vmem:[%s1318 + $0x12a] sm:$0xff]
      %v1603 = vld [vmem:[%s1318 + $0x13a] sm:$0xff]
      %v1604 = vld [vmem:[%s1318 + $0x142] sm:$0xff]
      %v1605 = vld [vmem:[%s1318 + $0x152] sm:$0xff]
      %v1606 = vld [vmem:[%s1318 + $0x15a] sm:$0xff]
      %v1607 = vld [vmem:[%s1318 + $0x16a] sm:$0xff]
      %v1608 = vld [vmem:[%s1318 + $0x172] sm:$0xff]
      %v1609 = vpack.c.bf16 %v1578, %v1577
      %v1610 = vpack.c.bf16 %v1580, %v1579
      %v1611 = vpack.c.bf16 %v1582, %v1581
      %v1612 = vpack.c.bf16 %v1584, %v1583
      %v1613 = vpack.c.bf16 %v1586, %v1585
      %v1614 = vpack.c.bf16 %v1588, %v1587
      %v1615 = vpack.c.bf16 %v1590, %v1589
      %v1616 = vpack.c.bf16 %v1592, %v1591
      %v1617 = vpack.c.bf16 %v1594, %v1593
      %v1618 = vpack.c.bf16 %v1596, %v1595
      %v1619 = vpack.c.bf16 %v1598, %v1597
      %v1620 = vpack.c.bf16 %v1600, %v1599
      %v1621 = vpack.c.bf16 %v1602, %v1601
      %v1622 = vpack.c.bf16 %v1604, %v1603
      %v1623 = vpack.c.bf16 %v1606, %v1605
      %v1624 = vpack.c.bf16 %v1608, %v1607
      %1641 = vrot.lane.b32.xlu0 %v1609, 32
      %v1642 = vpop.permute.xlu0 %1641
      %1643 = vrot.lane.b32.xlu0 %v1610, 32
      %v1644 = vpop.permute.xlu0 %1643
      %1645 = vrot.lane.b32.xlu0 %v1611, 32
      %v1646 = vpop.permute.xlu0 %1645
      %1647 = vrot.lane.b32.xlu0 %v1612, 32
      %v1648 = vpop.permute.xlu0 %1647
      %1649 = vrot.lane.b32.xlu0 %v1613, 32
      %v1650 = vpop.permute.xlu0 %1649
      %1651 = vrot.lane.b32.xlu0 %v1614, 32
      %v1652 = vpop.permute.xlu0 %1651
      %1653 = vrot.lane.b32.xlu0 %v1615, 32
      %v1654 = vpop.permute.xlu0 %1653
      %1655 = vrot.lane.b32.xlu0 %v1616, 32
      %v1656 = vpop.permute.xlu0 %1655
      %1657 = vrot.lane.b32.xlu0 %v1617, 32
      %v1658 = vpop.permute.xlu0 %1657
      %1659 = vrot.lane.b32.xlu0 %v1618, 32
      %v1660 = vpop.permute.xlu0 %1659
      %1661 = vrot.lane.b32.xlu0 %v1619, 32
      %v1662 = vpop.permute.xlu0 %1661
      %1663 = vrot.lane.b32.xlu0 %v1620, 32
      %v1664 = vpop.permute.xlu0 %1663
      %1665 = vrot.lane.b32.xlu0 %v1621, 32
      %v1666 = vpop.permute.xlu0 %1665
      %1667 = vrot.lane.b32.xlu0 %v1622, 32
      %v1668 = vpop.permute.xlu0 %1667
      %1669 = vrot.lane.b32.xlu0 %v1623, 32
      %v1670 = vpop.permute.xlu0 %1669
      %1671 = vrot.lane.b32.xlu0 %v1624, 32
      %v1672 = vpop.permute.xlu0 %1671
      %vm1689 = vcmask 294144
      %1690 = vst.msk [vmem:[#allocation3] sm:$0xff] %vm1689, %v1642
      %1691 = vst.msk [vmem:[#allocation3 + $0x8] sm:$0xff] %vm1689, %v1644
      %1692 = vst.msk [vmem:[#allocation3 + $0x10] sm:$0xff] %vm1689, %v1646
      %1693 = vst.msk [vmem:[#allocation3 + $0x18] sm:$0xff] %vm1689, %v1648
      %1694 = vst.msk [vmem:[#allocation3 + $0x20] sm:$0xff] %vm1689, %v1650
      %1695 = vst.msk [vmem:[#allocation3 + $0x28] sm:$0xff] %vm1689, %v1652
      %1696 = vst.msk [vmem:[#allocation3 + $0x30] sm:$0xff] %vm1689, %v1654
      %1697 = vst.msk [vmem:[#allocation3 + $0x38] sm:$0xff] %vm1689, %v1656
      %1698 = vst.msk [vmem:[#allocation3 + $0x40] sm:$0xff] %vm1689, %v1658
      %1699 = vst.msk [vmem:[#allocation3 + $0x48] sm:$0xff] %vm1689, %v1660
      %1700 = vst.msk [vmem:[#allocation3 + $0x50] sm:$0xff] %vm1689, %v1662
      %1701 = vst.msk [vmem:[#allocation3 + $0x58] sm:$0xff] %vm1689, %v1664
      %1702 = vst.msk [vmem:[#allocation3 + $0x60] sm:$0xff] %vm1689, %v1666
      %1703 = vst.msk [vmem:[#allocation3 + $0x68] sm:$0xff] %vm1689, %v1668
      %1704 = vst.msk [vmem:[#allocation3 + $0x70] sm:$0xff] %vm1689, %v1670
      %1705 = vst.msk [vmem:[#allocation3 + $0x78] sm:$0xff] %vm1689, %v1672
      %v1706 = vld [vmem:[#allocation3] sm:$0xff]
      %v1707 = vld [vmem:[#allocation3 + $0x8] sm:$0xff]
      %v1708 = vld [vmem:[#allocation3 + $0x10] sm:$0xff]
      %v1709 = vld [vmem:[#allocation3 + $0x18] sm:$0xff]
      %v1710 = vld [vmem:[#allocation3 + $0x20] sm:$0xff]
      %v1711 = vld [vmem:[#allocation3 + $0x28] sm:$0xff]
      %v1712 = vld [vmem:[#allocation3 + $0x30] sm:$0xff]
      %v1713 = vld [vmem:[#allocation3 + $0x38] sm:$0xff]
      %v1714 = vld [vmem:[#allocation3 + $0x40] sm:$0xff]
      %v1715 = vld [vmem:[#allocation3 + $0x48] sm:$0xff]
      %v1716 = vld [vmem:[#allocation3 + $0x50] sm:$0xff]
      %v1717 = vld [vmem:[#allocation3 + $0x58] sm:$0xff]
      %v1718 = vld [vmem:[#allocation3 + $0x60] sm:$0xff]
      %v1719 = vld [vmem:[#allocation3 + $0x68] sm:$0xff]
      %v1720 = vld [vmem:[#allocation3 + $0x70] sm:$0xff]
      %v1721 = vld [vmem:[#allocation3 + $0x78] sm:$0xff]
      %v1722 = vld [vmem:[%s3] sm:$0xf]
      %v1723 = vld [vmem:[%s3 + $0x4] sm:$0xf]
      %v1724 = vld [vmem:[%s3 + $0x8] sm:$0xf]
      %v1725 = vld [vmem:[%s3 + $0xc] sm:$0xf]
      %v1726 = vld [vmem:[%s3 + $0x10] sm:$0x3]
      %v1727 = vld [vmem:[%s4] sm:$0x1]
      %v1729 = vlaneseq
      %v1730 = vshrl.u32 %v1729, 7
      %v1731 = vsub.s32 0, %v1730
      %v1732 = vrot.slane %v1727, %v1731
      %v1739 = vunpack.c.l.b16 %v1722
      %v1740 = vunpack.c.l.b16 %v1723
      %v1741 = vunpack.c.l.b16 %v1724
      %v1742 = vunpack.c.l.b16 %v1725
      %v1743 = vunpack.c.l.b16 %v1726
      %v1744 = vpack.c.b16 %v1740, %v1739
      %v1745 = vpack.c.b16 %v1742, %v1741
      %v1746 = vpack.c.b16 %v1743, %v1743
      %vm1749 = vcmask 293888
      %v1751 = vsel %vm1749, %v1706, 0
      %v1754 = vsel %vm1749, %v1707, 0
      %v1757 = vsel %vm1749, %v1708, 0
      %v1760 = vsel %vm1749, %v1709, 0
      %v1763 = vsel %vm1749, %v1710, 0
      %v1766 = vsel %vm1749, %v1711, 0
      %v1769 = vsel %vm1749, %v1712, 0
      %v1772 = vsel %vm1749, %v1713, 0
      %v1775 = vsel %vm1749, %v1714, 0
      %v1778 = vsel %vm1749, %v1715, 0
      %v1781 = vsel %vm1749, %v1716, 0
      %v1784 = vsel %vm1749, %v1717, 0
      %v1787 = vsel %vm1749, %v1718, 0
      %v1790 = vsel %vm1749, %v1719, 0
      %v1793 = vsel %vm1749, %v1720, 0
      %v1796 = vsel %vm1749, %v1721, 0
      %vm1798 = vcmask 1041408
      %v1800 = vsel %vm1798, %v1746, 0
      %1802 = vmatprep.subr.bf16.mxu0 0
      %1803 = vmatpush1.bf16.msra.mxu0 %v1744
      %1804 = vmatprep.subr.bf16.mxu0 0
      %1805 = vmatpush1.bf16.msra.mxu0 %v1745
      %1806 = vmatprep.subr.bf16.mxu0 0
      %1807 = vmatpush1.bf16.msra.mxu0 %v1800
      %1808 = vmatprep.subr.bf16.mxu0 0
      %1809 = vmatpush1.bf16.msra.mxu0 0
      %1810 = vmatprep.subr.bf16.mxu0 0
      %1811 = vmatpush1.bf16.msra.mxu0 0
      %1812 = vmatprep.subr.bf16.mxu0 0
      %1813 = vmatpush1.bf16.msra.mxu0 0
      %1814 = vmatprep.subr.bf16.mxu0 0
      %1815 = vmatpush1.bf16.msra.mxu0 0
      %1816 = vmatprep.subr.bf16.mxu0 0
      %1817 = vmatpush1.bf16.msra.mxu0 0
      %1818 = vmatprep.subr.bf16.mxu0 0
      %1819 = vmatpush1.bf16.msra.mxu0 0
      %1820 = vmatprep.subr.bf16.mxu0 0
      %1821 = vmatpush1.bf16.msra.mxu0 0
      %1822 = vmatprep.subr.bf16.mxu0 0
      %1823 = vmatpush1.bf16.msra.mxu0 0
      %1824 = vmatprep.subr.bf16.mxu0 0
      %1825 = vmatpush1.bf16.msra.mxu0 0
      %1826 = vmatprep.subr.bf16.mxu0 0
      %1827 = vmatpush1.bf16.msra.mxu0 0
      %1828 = vmatprep.subr.bf16.mxu0 0
      %1829 = vmatpush1.bf16.msra.mxu0 0
      %1830 = vmatprep.subr.bf16.mxu0 0
      %1831 = vmatpush1.bf16.msra.mxu0 0
      %1832 = vmatprep.subr.bf16.mxu0 0
      %1833 = vmatpush1.bf16.msra.mxu0 0
      %1834 = vmatprep.mubr.bf16.mxu0 0
      %1835 = vmatmul.mubr.bf16.gmra.mrb[0].mxu0 %v1751
      %v1836 = vpop.f32.mrb[0].mxu0
      %v1837 = vadd.f32 %v1732, %v1836
      %v1838 = vpop.f32.mrb[0].mxu0
      %v1839 = vpop.f32.mrb[0].mxu0
      %v1840 = vadd.f32 %v1732, %v1839
      %v1841 = vpop.f32.mrb[0].mxu0
      %1842 = vmatprep.mubr.bf16.mxu0 0
      %1843 = vmatmul.mubr.bf16.gmra.mrb[0].mxu0 %v1754
      %v1844 = vpop.f32.mrb[0].mxu0
      %v1845 = vadd.f32 %v1732, %v1844
      %v1846 = vpop.f32.mrb[0].mxu0
      %v1847 = vpop.f32.mrb[0].mxu0
      %v1848 = vadd.f32 %v1732, %v1847
      %v1849 = vpop.f32.mrb[0].mxu0
      %1850 = vmatprep.mubr.bf16.mxu0 0
      %1851 = vmatmul.mubr.bf16.gmra.mrb[0].mxu0 %v1757
      %v1852 = vpop.f32.mrb[0].mxu0
      %v1853 = vadd.f32 %v1732, %v1852
      %v1854 = vpop.f32.mrb[0].mxu0
      %v1855 = vpop.f32.mrb[0].mxu0
      %v1856 = vadd.f32 %v1732, %v1855
      %v1857 = vpop.f32.mrb[0].mxu0
      %1858 = vmatprep.mubr.bf16.mxu0 0
      %1859 = vmatmul.mubr.bf16.gmra.mrb[0].mxu0 %v1760
      %v1860 = vpop.f32.mrb[0].mxu0
      %v1861 = vadd.f32 %v1732, %v1860
      %v1862 = vpop.f32.mrb[0].mxu0
      %v1863 = vpop.f32.mrb[0].mxu0
      %v1864 = vadd.f32 %v1732, %v1863
      %v1865 = vpop.f32.mrb[0].mxu0
      %1866 = vmatprep.mubr.bf16.mxu0 0
      %1867 = vmatmul.mubr.bf16.gmra.mrb[0].mxu0 %v1763
      %v1868 = vpop.f32.mrb[0].mxu0
      %v1869 = vadd.f32 %v1732, %v1868
      %v1870 = vpop.f32.mrb[0].mxu0
      %v1871 = vpop.f32.mrb[0].mxu0
      %v1872 = vadd.f32 %v1732, %v1871
      %v1873 = vpop.f32.mrb[0].mxu0
      %1874 = vmatprep.mubr.bf16.mxu0 0
      %1875 = vmatmul.mubr.bf16.gmra.mrb[0].mxu0 %v1766
      %v1876 = vpop.f32.mrb[0].mxu0
      %v1877 = vadd.f32 %v1732, %v1876
      %v1878 = vpop.f32.mrb[0].mxu0
      %v1879 = vpop.f32.mrb[0].mxu0
      %v1880 = vadd.f32 %v1732, %v1879
      %v1881 = vpop.f32.mrb[0].mxu0
      %1882 = vmatprep.mubr.bf16.mxu0 0
      %1883 = vmatmul.mubr.bf16.gmra.mrb[0].mxu0 %v1769
      %v1884 = vpop.f32.mrb[0].mxu0
      %v1885 = vadd.f32 %v1732, %v1884
      %v1886 = vpop.f32.mrb[0].mxu0
      %v1887 = vpop.f32.mrb[0].mxu0
      %v1888 = vadd.f32 %v1732, %v1887
      %v1889 = vpop.f32.mrb[0].mxu0
      %1890 = vmatprep.mubr.bf16.mxu0 0
      %1891 = vmatmul.mubr.bf16.gmra.mrb[0].mxu0 %v1772
      %v1892 = vpop.f32.mrb[0].mxu0
      %v1893 = vadd.f32 %v1732, %v1892
      %v1894 = vpop.f32.mrb[0].mxu0
      %v1895 = vpop.f32.mrb[0].mxu0
      %v1896 = vadd.f32 %v1732, %v1895
      %v1897 = vpop.f32.mrb[0].mxu0
      %1898 = vmatprep.mubr.bf16.mxu0 0
      %1899 = vmatmul.mubr.bf16.gmra.mrb[0].mxu0 %v1775
      %v1900 = vpop.f32.mrb[0].mxu0
      %v1901 = vadd.f32 %v1732, %v1900
      %v1902 = vpop.f32.mrb[0].mxu0
      %v1903 = vpop.f32.mrb[0].mxu0
      %v1904 = vadd.f32 %v1732, %v1903
      %v1905 = vpop.f32.mrb[0].mxu0
      %1906 = vmatprep.mubr.bf16.mxu0 0
      %1907 = vmatmul.mubr.bf16.gmra.mrb[0].mxu0 %v1778
      %v1908 = vpop.f32.mrb[0].mxu0
      %v1909 = vadd.f32 %v1732, %v1908
      %v1910 = vpop.f32.mrb[0].mxu0
      %v1911 = vpop.f32.mrb[0].mxu0
      %v1912 = vadd.f32 %v1732, %v1911
      %v1913 = vpop.f32.mrb[0].mxu0
      %1914 = vmatprep.mubr.bf16.mxu0 0
      %1915 = vmatmul.mubr.bf16.gmra.mrb[0].mxu0 %v1781
      %v1916 = vpop.f32.mrb[0].mxu0
      %v1917 = vadd.f32 %v1732, %v1916
      %v1918 = vpop.f32.mrb[0].mxu0
      %v1919 = vpop.f32.mrb[0].mxu0
      %v1920 = vadd.f32 %v1732, %v1919
      %v1921 = vpop.f32.mrb[0].mxu0
      %1922 = vmatprep.mubr.bf16.mxu0 0
      %1923 = vmatmul.mubr.bf16.gmra.mrb[0].mxu0 %v1784
      %v1924 = vpop.f32.mrb[0].mxu0
      %v1925 = vadd.f32 %v1732, %v1924
      %v1926 = vpop.f32.mrb[0].mxu0
      %v1927 = vpop.f32.mrb[0].mxu0
      %v1928 = vadd.f32 %v1732, %v1927
      %v1929 = vpop.f32.mrb[0].mxu0
      %1930 = vmatprep.mubr.bf16.mxu0 0
      %1931 = vmatmul.mubr.bf16.gmra.mrb[0].mxu0 %v1787
      %v1932 = vpop.f32.mrb[0].mxu0
      %v1933 = vadd.f32 %v1732, %v1932
      %v1934 = vpop.f32.mrb[0].mxu0
      %v1935 = vpop.f32.mrb[0].mxu0
      %v1936 = vadd.f32 %v1732, %v1935
      %v1937 = vpop.f32.mrb[0].mxu0
      %1938 = vmatprep.mubr.bf16.mxu0 0
      %1939 = vmatmul.mubr.bf16.gmra.mrb[0].mxu0 %v1790
      %v1940 = vpop.f32.mrb[0].mxu0
      %v1941 = vadd.f32 %v1732, %v1940
      %v1942 = vpop.f32.mrb[0].mxu0
      %v1943 = vpop.f32.mrb[0].mxu0
      %v1944 = vadd.f32 %v1732, %v1943
      %v1945 = vpop.f32.mrb[0].mxu0
      %1946 = vmatprep.mubr.bf16.mxu0 0
      %1947 = vmatmul.mubr.bf16.gmra.mrb[0].mxu0 %v1793
      %v1948 = vpop.f32.mrb[0].mxu0
      %v1949 = vadd.f32 %v1732, %v1948
      %v1950 = vpop.f32.mrb[0].mxu0
      %v1951 = vpop.f32.mrb[0].mxu0
      %v1952 = vadd.f32 %v1732, %v1951
      %v1953 = vpop.f32.mrb[0].mxu0
      %1954 = vmatprep.mubr.bf16.mxu0 0
      %1955 = vmatmul.mubr.bf16.gmra.mrb[0].mxu0 %v1796
      %v1956 = vpop.f32.mrb[0].mxu0
      %v1957 = vadd.f32 %v1732, %v1956
      %v1958 = vpop.f32.mrb[0].mxu0
      %v1959 = vpop.f32.mrb[0].mxu0
      %v1960 = vadd.f32 %v1732, %v1959
      %v1961 = vpop.f32.mrb[0].mxu0
      %1962 = vdwg.mxu0
      %v1963 = vld [vmem:[%s5] sm:$0x1]
      %v1965 = vlaneseq
      %v1966 = vshrl.u32 %v1965, 7
      %v1967 = vsub.s32 0, %v1966
      %v1968 = vrot.slane %v1963, %v1967
      %v1970 = vmul.f32 %v1837, %v1968
      %v1971 = vmul.f32 %v1840, %v1968
      %v1972 = vmul.f32 %v1845, %v1968
      %v1973 = vmul.f32 %v1848, %v1968
      %v1974 = vmul.f32 %v1853, %v1968
      %v1975 = vmul.f32 %v1856, %v1968
      %v1976 = vmul.f32 %v1861, %v1968
      %v1977 = vmul.f32 %v1864, %v1968
      %v1978 = vmul.f32 %v1869, %v1968
      %v1979 = vmul.f32 %v1872, %v1968
      %v1980 = vmul.f32 %v1877, %v1968
      %v1981 = vmul.f32 %v1880, %v1968
      %v1982 = vmul.f32 %v1885, %v1968
      %v1983 = vmul.f32 %v1888, %v1968
      %v1984 = vmul.f32 %v1893, %v1968
      %v1985 = vmul.f32 %v1896, %v1968
      %v1986 = vmul.f32 %v1901, %v1968
      %v1987 = vmul.f32 %v1904, %v1968
      %v1988 = vmul.f32 %v1909, %v1968
      %v1989 = vmul.f32 %v1912, %v1968
      %v1990 = vmul.f32 %v1917, %v1968
      %v1991 = vmul.f32 %v1920, %v1968
      %v1992 = vmul.f32 %v1925, %v1968
      %v1993 = vmul.f32 %v1928, %v1968
      %v1994 = vmul.f32 %v1933, %v1968
      %v1995 = vmul.f32 %v1936, %v1968
      %v1996 = vmul.f32 %v1941, %v1968
      %v1997 = vmul.f32 %v1944, %v1968
      %v1998 = vmul.f32 %v1949, %v1968
      %v1999 = vmul.f32 %v1952, %v1968
      %v2000 = vmul.f32 %v1957, %v1968
      %v2001 = vmul.f32 %v1960, %v1968
      %v2002 = vld [vmem:[%s6] sm:$0x1]
      %v2004 = vlaneseq
      %v2005 = vshrl.u32 %v2004, 7
      %v2006 = vsub.s32 0, %v2005
      %v2007 = vrot.slane %v2002, %v2006
      %v2009 = vadd.f32 %v1970, %v2007
      %v2010 = vadd.f32 %v1971, %v2007
      %v2011 = vadd.f32 %v1972, %v2007
      %v2012 = vadd.f32 %v1973, %v2007
      %v2013 = vadd.f32 %v1974, %v2007
      %v2014 = vadd.f32 %v1975, %v2007
      %v2015 = vadd.f32 %v1976, %v2007
      %v2016 = vadd.f32 %v1977, %v2007
      %v2017 = vadd.f32 %v1978, %v2007
      %v2018 = vadd.f32 %v1979, %v2007
      %v2019 = vadd.f32 %v1980, %v2007
      %v2020 = vadd.f32 %v1981, %v2007
      %v2021 = vadd.f32 %v1982, %v2007
      %v2022 = vadd.f32 %v1983, %v2007
      %v2023 = vadd.f32 %v1984, %v2007
      %v2024 = vadd.f32 %v1985, %v2007
      %v2025 = vadd.f32 %v1986, %v2007
      %v2026 = vadd.f32 %v1987, %v2007
      %v2027 = vadd.f32 %v1988, %v2007
      %v2028 = vadd.f32 %v1989, %v2007
      %v2029 = vadd.f32 %v1990, %v2007
      %v2030 = vadd.f32 %v1991, %v2007
      %v2031 = vadd.f32 %v1992, %v2007
      %v2032 = vadd.f32 %v1993, %v2007
      %v2033 = vadd.f32 %v1994, %v2007
      %v2034 = vadd.f32 %v1995, %v2007
      %v2035 = vadd.f32 %v1996, %v2007
      %v2036 = vadd.f32 %v1997, %v2007
      %v2037 = vadd.f32 %v1998, %v2007
      %v2038 = vadd.f32 %v1999, %v2007
      %v2039 = vadd.f32 %v2000, %v2007
      %v2040 = vadd.f32 %v2001, %v2007
      %v2041 = vmax.f32 %v2009, 0.0
      %v2042 = vmax.f32 %v2010, 0.0
      %v2043 = vmax.f32 %v2011, 0.0
      %v2044 = vmax.f32 %v2012, 0.0
      %v2045 = vmax.f32 %v2013, 0.0
      %v2046 = vmax.f32 %v2014, 0.0
      %v2047 = vmax.f32 %v2015, 0.0
      %v2048 = vmax.f32 %v2016, 0.0
      %v2049 = vmax.f32 %v2017, 0.0
      %v2050 = vmax.f32 %v2018, 0.0
      %v2051 = vmax.f32 %v2019, 0.0
      %v2052 = vmax.f32 %v2020, 0.0
      %v2053 = vmax.f32 %v2021, 0.0
      %v2054 = vmax.f32 %v2022, 0.0
      %v2055 = vmax.f32 %v2023, 0.0
      %v2056 = vmax.f32 %v2024, 0.0
      %v2057 = vmax.f32 %v2025, 0.0
      %v2058 = vmax.f32 %v2026, 0.0
      %v2059 = vmax.f32 %v2027, 0.0
      %v2060 = vmax.f32 %v2028, 0.0
      %v2061 = vmax.f32 %v2029, 0.0
      %v2062 = vmax.f32 %v2030, 0.0
      %v2063 = vmax.f32 %v2031, 0.0
      %v2064 = vmax.f32 %v2032, 0.0
      %v2065 = vmax.f32 %v2033, 0.0
      %v2066 = vmax.f32 %v2034, 0.0
      %v2067 = vmax.f32 %v2035, 0.0
      %v2068 = vmax.f32 %v2036, 0.0
      %v2069 = vmax.f32 %v2037, 0.0
      %v2070 = vmax.f32 %v2038, 0.0
      %v2071 = vmax.f32 %v2039, 0.0
      %v2072 = vmax.f32 %v2040, 0.0
      %vm2073 = vcmask 64512
      %2074 = vst.msk [vmem:[#allocation4] sm:$0xff] %vm2073, 0.0
      %2075 = vst.msk [vmem:[#allocation4 + $0x8] sm:$0xff] %vm2073, 0.0
      %vm2076 = vcmask 58368
      %2077 = vst.msk [vmem:[#allocation4 + $0x10] sm:$0x3] %vm2076, 0.0
      %s2078 = scalar_lea.vmem [#allocation4], 408
      %2079 = vst.msk [vmem:[%s2078] sm:$0xff] %vm2073, 0.0
      %2080 = vst.msk [vmem:[%s2078 + $0x8] sm:$0xff] %vm2073, 0.0
      %2081 = vst.msk [vmem:[%s2078 + $0x10] sm:$0x3] %vm2076, 0.0
      %vm2082 = vcmask 57344
      %2083 = vst.msk [vmem:[#allocation4] sm:$0x1] %vm2082, 0.0
      %2084 = vst.msk [vmem:[#allocation4 + $0x18] sm:$0x1] %vm2082, 0.0
      %2085 = vst.msk [vmem:[#allocation4 + $0x30] sm:$0x1] %vm2082, 0.0
      %2086 = vst.msk [vmem:[#allocation4 + $0x48] sm:$0x1] %vm2082, 0.0
      %2087 = vst.msk [vmem:[#allocation4 + $0x60] sm:$0x1] %vm2082, 0.0
      %2088 = vst.msk [vmem:[#allocation4 + $0x78] sm:$0x1] %vm2082, 0.0
      %2089 = vst.msk [vmem:[#allocation4 + $0x90] sm:$0x1] %vm2082, 0.0
      %2090 = vst.msk [vmem:[#allocation4 + $0xa8] sm:$0x1] %vm2082, 0.0
      %2091 = vst.msk [vmem:[#allocation4 + $0xc0] sm:$0x1] %vm2082, 0.0
      %2092 = vst.msk [vmem:[#allocation4 + $0xd8] sm:$0x1] %vm2082, 0.0
      %2093 = vst.msk [vmem:[#allocation4 + $0xf0] sm:$0x1] %vm2082, 0.0
      %2094 = vst.msk [vmem:[#allocation4 + $0x108] sm:$0x1] %vm2082, 0.0
      %2095 = vst.msk [vmem:[#allocation4 + $0x120] sm:$0x1] %vm2082, 0.0
      %2096 = vst.msk [vmem:[#allocation4 + $0x138] sm:$0x1] %vm2082, 0.0
      %2097 = vst.msk [vmem:[#allocation4 + $0x150] sm:$0x1] %vm2082, 0.0
      %2098 = vst.msk [vmem:[#allocation4 + $0x168] sm:$0x1] %vm2082, 0.0
      %2099 = vst.msk [vmem:[#allocation4 + $0x180] sm:$0x1] %vm2082, 0.0
      %2100 = vst.msk [vmem:[#allocation4 + $0x198] sm:$0x1] %vm2082, 0.0
      %2101 = vst.msk [vmem:[#allocation4 + $0x11] sm:$0x1] %vm2082, 0.0
      %2102 = vst.msk [vmem:[#allocation4 + $0x29] sm:$0x1] %vm2082, 0.0
      %2103 = vst.msk [vmem:[#allocation4 + $0x41] sm:$0x1] %vm2082, 0.0
      %2104 = vst.msk [vmem:[#allocation4 + $0x59] sm:$0x1] %vm2082, 0.0
      %2105 = vst.msk [vmem:[#allocation4 + $0x71] sm:$0x1] %vm2082, 0.0
      %2106 = vst.msk [vmem:[#allocation4 + $0x89] sm:$0x1] %vm2082, 0.0
      %2107 = vst.msk [vmem:[#allocation4 + $0xa1] sm:$0x1] %vm2082, 0.0
      %2108 = vst.msk [vmem:[#allocation4 + $0xb9] sm:$0x1] %vm2082, 0.0
      %2109 = vst.msk [vmem:[#allocation4 + $0xd1] sm:$0x1] %vm2082, 0.0
      %2110 = vst.msk [vmem:[#allocation4 + $0xe9] sm:$0x1] %vm2082, 0.0
      %2111 = vst.msk [vmem:[#allocation4 + $0x101] sm:$0x1] %vm2082, 0.0
      %2112 = vst.msk [vmem:[#allocation4 + $0x119] sm:$0x1] %vm2082, 0.0
      %2113 = vst.msk [vmem:[#allocation4 + $0x131] sm:$0x1] %vm2082, 0.0
      %2114 = vst.msk [vmem:[#allocation4 + $0x149] sm:$0x1] %vm2082, 0.0
      %2115 = vst.msk [vmem:[#allocation4 + $0x161] sm:$0x1] %vm2082, 0.0
      %2116 = vst.msk [vmem:[#allocation4 + $0x179] sm:$0x1] %vm2082, 0.0
      %2117 = vst.msk [vmem:[#allocation4 + $0x191] sm:$0x1] %vm2082, 0.0
      %2118 = vst.msk [vmem:[#allocation4 + $0x1a9] sm:$0x1] %vm2082, 0.0
      %s2119 = scalar_lea.vmem [#allocation4], 24
      %2120 = vst.msk [vmem:[%s2119 + $0x1] sm:$0xff] %vm2073, %v2041
      %2121 = vst.msk [vmem:[%s2119 + $0x9] sm:$0xff] %vm2073, %v2042
      %2122 = vst.msk [vmem:[%s2119 + $0x19] sm:$0xff] %vm2073, %v2043
      %2123 = vst.msk [vmem:[%s2119 + $0x21] sm:$0xff] %vm2073, %v2044
      %2124 = vst.msk [vmem:[%s2119 + $0x31] sm:$0xff] %vm2073, %v2045
      %2125 = vst.msk [vmem:[%s2119 + $0x39] sm:$0xff] %vm2073, %v2046
      %2126 = vst.msk [vmem:[%s2119 + $0x49] sm:$0xff] %vm2073, %v2047
      %2127 = vst.msk [vmem:[%s2119 + $0x51] sm:$0xff] %vm2073, %v2048
      %2128 = vst.msk [vmem:[%s2119 + $0x61] sm:$0xff] %vm2073, %v2049
      %2129 = vst.msk [vmem:[%s2119 + $0x69] sm:$0xff] %vm2073, %v2050
      %2130 = vst.msk [vmem:[%s2119 + $0x79] sm:$0xff] %vm2073, %v2051
      %2131 = vst.msk [vmem:[%s2119 + $0x81] sm:$0xff] %vm2073, %v2052
      %2132 = vst.msk [vmem:[%s2119 + $0x91] sm:$0xff] %vm2073, %v2053
      %2133 = vst.msk [vmem:[%s2119 + $0x99] sm:$0xff] %vm2073, %v2054
      %2134 = vst.msk [vmem:[%s2119 + $0xa9] sm:$0xff] %vm2073, %v2055
      %2135 = vst.msk [vmem:[%s2119 + $0xb1] sm:$0xff] %vm2073, %v2056
      %2136 = vst.msk [vmem:[%s2119 + $0xc1] sm:$0xff] %vm2073, %v2057
      %2137 = vst.msk [vmem:[%s2119 + $0xc9] sm:$0xff] %vm2073, %v2058
      %2138 = vst.msk [vmem:[%s2119 + $0xd9] sm:$0xff] %vm2073, %v2059
      %2139 = vst.msk [vmem:[%s2119 + $0xe1] sm:$0xff] %vm2073, %v2060
      %2140 = vst.msk [vmem:[%s2119 + $0xf1] sm:$0xff] %vm2073, %v2061
      %2141 = vst.msk [vmem:[%s2119 + $0xf9] sm:$0xff] %vm2073, %v2062
      %2142 = vst.msk [vmem:[%s2119 + $0x109] sm:$0xff] %vm2073, %v2063
      %2143 = vst.msk [vmem:[%s2119 + $0x111] sm:$0xff] %vm2073, %v2064
      %2144 = vst.msk [vmem:[%s2119 + $0x121] sm:$0xff] %vm2073, %v2065
      %2145 = vst.msk [vmem:[%s2119 + $0x129] sm:$0xff] %vm2073, %v2066
      %2146 = vst.msk [vmem:[%s2119 + $0x139] sm:$0xff] %vm2073, %v2067
      %2147 = vst.msk [vmem:[%s2119 + $0x141] sm:$0xff] %vm2073, %v2068
      %2148 = vst.msk [vmem:[%s2119 + $0x151] sm:$0xff] %vm2073, %v2069
      %2149 = vst.msk [vmem:[%s2119 + $0x159] sm:$0xff] %vm2073, %v2070
      %2150 = vst.msk [vmem:[%s2119 + $0x169] sm:$0xff] %vm2073, %v2071
      %2151 = vst.msk [vmem:[%s2119 + $0x171] sm:$0xff] %vm2073, %v2072
      %v2152 = vld [vmem:[#allocation4] sm:$0xff]
      %v2153 = vld [vmem:[#allocation4 + $0x8] sm:$0xff]
      %v2154 = vld [vmem:[#allocation4 + $0x18] sm:$0xff]
      %v2155 = vld [vmem:[#allocation4 + $0x20] sm:$0xff]
      %v2156 = vld [vmem:[#allocation4 + $0x30] sm:$0xff]
      %v2157 = vld [vmem:[#allocation4 + $0x38] sm:$0xff]
      %v2158 = vld [vmem:[#allocation4 + $0x48] sm:$0xff]
      %v2159 = vld [vmem:[#allocation4 + $0x50] sm:$0xff]
      %v2160 = vld [vmem:[#allocation4 + $0x60] sm:$0xff]
      %v2161 = vld [vmem:[#allocation4 + $0x68] sm:$0xff]
      %v2162 = vld [vmem:[#allocation4 + $0x78] sm:$0xff]
      %v2163 = vld [vmem:[#allocation4 + $0x80] sm:$0xff]
      %v2164 = vld [vmem:[#allocation4 + $0x90] sm:$0xff]
      %v2165 = vld [vmem:[#allocation4 + $0x98] sm:$0xff]
      %v2166 = vld [vmem:[#allocation4 + $0xa8] sm:$0xff]
      %v2167 = vld [vmem:[#allocation4 + $0xb0] sm:$0xff]
      %v2168 = vld [vmem:[#allocation4 + $0xc0] sm:$0xff]
      %v2169 = vld [vmem:[#allocation4 + $0xc8] sm:$0xff]
      %v2170 = vld [vmem:[#allocation4 + $0xd8] sm:$0xff]
      %v2171 = vld [vmem:[#allocation4 + $0xe0] sm:$0xff]
      %v2172 = vld [vmem:[#allocation4 + $0xf0] sm:$0xff]
      %v2173 = vld [vmem:[#allocation4 + $0xf8] sm:$0xff]
      %v2174 = vld [vmem:[#allocation4 + $0x108] sm:$0xff]
      %v2175 = vld [vmem:[#allocation4 + $0x110] sm:$0xff]
      %v2176 = vld [vmem:[#allocation4 + $0x120] sm:$0xff]
      %v2177 = vld [vmem:[#allocation4 + $0x128] sm:$0xff]
      %v2178 = vld [vmem:[#allocation4 + $0x138] sm:$0xff]
      %v2179 = vld [vmem:[#allocation4 + $0x140] sm:$0xff]
      %v2180 = vld [vmem:[#allocation4 + $0x150] sm:$0xff]
      %v2181 = vld [vmem:[#allocation4 + $0x158] sm:$0xff]
      %v2182 = vld [vmem:[#allocation4 + $0x168] sm:$0xff]
      %v2183 = vld [vmem:[#allocation4 + $0x170] sm:$0xff]
      %v2184 = vpack.c.bf16 %v2153, %v2152
      %v2185 = vpack.c.bf16 %v2155, %v2154
      %v2186 = vpack.c.bf16 %v2157, %v2156
      %v2187 = vpack.c.bf16 %v2159, %v2158
      %v2188 = vpack.c.bf16 %v2161, %v2160
      %v2189 = vpack.c.bf16 %v2163, %v2162
      %v2190 = vpack.c.bf16 %v2165, %v2164
      %v2191 = vpack.c.bf16 %v2167, %v2166
      %v2192 = vpack.c.bf16 %v2169, %v2168
      %v2193 = vpack.c.bf16 %v2171, %v2170
      %v2194 = vpack.c.bf16 %v2173, %v2172
      %v2195 = vpack.c.bf16 %v2175, %v2174
      %v2196 = vpack.c.bf16 %v2177, %v2176
      %v2197 = vpack.c.bf16 %v2179, %v2178
      %v2198 = vpack.c.bf16 %v2181, %v2180
      %v2199 = vpack.c.bf16 %v2183, %v2182
      %2200 = vst.msk [vmem:[#allocation5] sm:$0xff] %vm2073, %v2184
      %2201 = vst.msk [vmem:[#allocation5 + $0x8] sm:$0xff] %vm2073, %v2185
      %2202 = vst.msk [vmem:[#allocation5 + $0x10] sm:$0xff] %vm2073, %v2186
      %2203 = vst.msk [vmem:[#allocation5 + $0x18] sm:$0xff] %vm2073, %v2187
      %2204 = vst.msk [vmem:[#allocation5 + $0x20] sm:$0xff] %vm2073, %v2188
      %2205 = vst.msk [vmem:[#allocation5 + $0x28] sm:$0xff] %vm2073, %v2189
      %2206 = vst.msk [vmem:[#allocation5 + $0x30] sm:$0xff] %vm2073, %v2190
      %2207 = vst.msk [vmem:[#allocation5 + $0x38] sm:$0xff] %vm2073, %v2191
      %2208 = vst.msk [vmem:[#allocation5 + $0x40] sm:$0xff] %vm2073, %v2192
      %2209 = vst.msk [vmem:[#allocation5 + $0x48] sm:$0xff] %vm2073, %v2193
      %2210 = vst.msk [vmem:[#allocation5 + $0x50] sm:$0xff] %vm2073, %v2194
      %2211 = vst.msk [vmem:[#allocation5 + $0x58] sm:$0xff] %vm2073, %v2195
      %2212 = vst.msk [vmem:[#allocation5 + $0x60] sm:$0xff] %vm2073, %v2196
      %2213 = vst.msk [vmem:[#allocation5 + $0x68] sm:$0xff] %vm2073, %v2197
      %2214 = vst.msk [vmem:[#allocation5 + $0x70] sm:$0xff] %vm2073, %v2198
      %2215 = vst.msk [vmem:[#allocation5 + $0x78] sm:$0xff] %vm2073, %v2199
      %v2216 = vld [vmem:[#allocation4 + $0x1] sm:$0xff]
      %v2217 = vld [vmem:[#allocation4 + $0x9] sm:$0xff]
      %v2218 = vld [vmem:[#allocation4 + $0x19] sm:$0xff]
      %v2219 = vld [vmem:[#allocation4 + $0x21] sm:$0xff]
      %v2220 = vld [vmem:[#allocation4 + $0x31] sm:$0xff]
      %v2221 = vld [vmem:[#allocation4 + $0x39] sm:$0xff]
      %v2222 = vld [vmem:[#allocation4 + $0x49] sm:$0xff]
      %v2223 = vld [vmem:[#allocation4 + $0x51] sm:$0xff]
      %v2224 = vld [vmem:[#allocation4 + $0x61] sm:$0xff]
      %v2225 = vld [vmem:[#allocation4 + $0x69] sm:$0xff]
      %v2226 = vld [vmem:[#allocation4 + $0x79] sm:$0xff]
      %v2227 = vld [vmem:[#allocation4 + $0x81] sm:$0xff]
      %v2228 = vld [vmem:[#allocation4 + $0x91] sm:$0xff]
      %v2229 = vld [vmem:[#allocation4 + $0x99] sm:$0xff]
      %v2230 = vld [vmem:[#allocation4 + $0xa9] sm:$0xff]
      %v2231 = vld [vmem:[#allocation4 + $0xb1] sm:$0xff]
      %v2232 = vld [vmem:[#allocation4 + $0xc1] sm:$0xff]
      %v2233 = vld [vmem:[#allocation4 + $0xc9] sm:$0xff]
      %v2234 = vld [vmem:[#allocation4 + $0xd9] sm:$0xff]
      %v2235 = vld [vmem:[#allocation4 + $0xe1] sm:$0xff]
      %v2236 = vld [vmem:[#allocation4 + $0xf1] sm:$0xff]
      %v2237 = vld [vmem:[#allocation4 + $0xf9] sm:$0xff]
      %v2238 = vld [vmem:[#allocation4 + $0x109] sm:$0xff]
      %v2239 = vld [vmem:[#allocation4 + $0x111] sm:$0xff]
      %v2240 = vld [vmem:[#allocation4 + $0x121] sm:$0xff]
      %v2241 = vld [vmem:[#allocation4 + $0x129] sm:$0xff]
      %v2242 = vld [vmem:[#allocation4 + $0x139] sm:$0xff]
      %v2243 = vld [vmem:[#allocation4 + $0x141] sm:$0xff]
      %v2244 = vld [vmem:[#allocation4 + $0x151] sm:$0xff]
      %v2245 = vld [vmem:[#allocation4 + $0x159] sm:$0xff]
      %v2246 = vld [vmem:[#allocation4 + $0x169] sm:$0xff]
      %v2247 = vld [vmem:[#allocation4 + $0x171] sm:$0xff]
      %v2248 = vpack.c.bf16 %v2217, %v2216
      %v2249 = vpack.c.bf16 %v2219, %v2218
      %v2250 = vpack.c.bf16 %v2221, %v2220
      %v2251 = vpack.c.bf16 %v2223, %v2222
      %v2252 = vpack.c.bf16 %v2225, %v2224
      %v2253 = vpack.c.bf16 %v2227, %v2226
      %v2254 = vpack.c.bf16 %v2229, %v2228
      %v2255 = vpack.c.bf16 %v2231, %v2230
      %v2256 = vpack.c.bf16 %v2233, %v2232
      %v2257 = vpack.c.bf16 %v2235, %v2234
      %v2258 = vpack.c.bf16 %v2237, %v2236
      %v2259 = vpack.c.bf16 %v2239, %v2238
      %v2260 = vpack.c.bf16 %v2241, %v2240
      %v2261 = vpack.c.bf16 %v2243, %v2242
      %v2262 = vpack.c.bf16 %v2245, %v2244
      %v2263 = vpack.c.bf16 %v2247, %v2246
      %2280 = vrot.lane.b32.xlu0 %v2248, 8
      %v2281 = vpop.permute.xlu0 %2280
      %2282 = vrot.lane.b32.xlu0 %v2249, 8
      %v2283 = vpop.permute.xlu0 %2282
      %2284 = vrot.lane.b32.xlu0 %v2250, 8
      %v2285 = vpop.permute.xlu0 %2284
      %2286 = vrot.lane.b32.xlu0 %v2251, 8
      %v2287 = vpop.permute.xlu0 %2286
      %2288 = vrot.lane.b32.xlu0 %v2252, 8
      %v2289 = vpop.permute.xlu0 %2288
      %2290 = vrot.lane.b32.xlu0 %v2253, 8
      %v2291 = vpop.permute.xlu0 %2290
      %2292 = vrot.lane.b32.xlu0 %v2254, 8
      %v2293 = vpop.permute.xlu0 %2292
      %2294 = vrot.lane.b32.xlu0 %v2255, 8
      %v2295 = vpop.permute.xlu0 %2294
      %2296 = vrot.lane.b32.xlu0 %v2256, 8
      %v2297 = vpop.permute.xlu0 %2296
      %2298 = vrot.lane.b32.xlu0 %v2257, 8
      %v2299 = vpop.permute.xlu0 %2298
      %2300 = vrot.lane.b32.xlu0 %v2258, 8
      %v2301 = vpop.permute.xlu0 %2300
      %2302 = vrot.lane.b32.xlu0 %v2259, 8
      %v2303 = vpop.permute.xlu0 %2302
      %2304 = vrot.lane.b32.xlu0 %v2260, 8
      %v2305 = vpop.permute.xlu0 %2304
      %2306 = vrot.lane.b32.xlu0 %v2261, 8
      %v2307 = vpop.permute.xlu0 %2306
      %2308 = vrot.lane.b32.xlu0 %v2262, 8
      %v2309 = vpop.permute.xlu0 %2308
      %2310 = vrot.lane.b32.xlu0 %v2263, 8
      %v2311 = vpop.permute.xlu0 %2310
      %vm2328 = vcmask 130112
      %2329 = vst.msk [vmem:[#allocation5] sm:$0xff] %vm2328, %v2281
      %2330 = vst.msk [vmem:[#allocation5 + $0x8] sm:$0xff] %vm2328, %v2283
      %2331 = vst.msk [vmem:[#allocation5 + $0x10] sm:$0xff] %vm2328, %v2285
      %2332 = vst.msk [vmem:[#allocation5 + $0x18] sm:$0xff] %vm2328, %v2287
      %2333 = vst.msk [vmem:[#allocation5 + $0x20] sm:$0xff] %vm2328, %v2289
      %2334 = vst.msk [vmem:[#allocation5 + $0x28] sm:$0xff] %vm2328, %v2291
      %2335 = vst.msk [vmem:[#allocation5 + $0x30] sm:$0xff] %vm2328, %v2293
      %2336 = vst.msk [vmem:[#allocation5 + $0x38] sm:$0xff] %vm2328, %v2295
      %2337 = vst.msk [vmem:[#allocation5 + $0x40] sm:$0xff] %vm2328, %v2297
      %2338 = vst.msk [vmem:[#allocation5 + $0x48] sm:$0xff] %vm2328, %v2299
      %2339 = vst.msk [vmem:[#allocation5 + $0x50] sm:$0xff] %vm2328, %v2301
      %2340 = vst.msk [vmem:[#allocation5 + $0x58] sm:$0xff] %vm2328, %v2303
      %2341 = vst.msk [vmem:[#allocation5 + $0x60] sm:$0xff] %vm2328, %v2305
      %2342 = vst.msk [vmem:[#allocation5 + $0x68] sm:$0xff] %vm2328, %v2307
      %2343 = vst.msk [vmem:[#allocation5 + $0x70] sm:$0xff] %vm2328, %v2309
      %2344 = vst.msk [vmem:[#allocation5 + $0x78] sm:$0xff] %vm2328, %v2311
      %v2345 = vld [vmem:[#allocation4 + $0x2] sm:$0xff]
      %v2346 = vld [vmem:[#allocation4 + $0xa] sm:$0xff]
      %v2347 = vld [vmem:[#allocation4 + $0x1a] sm:$0xff]
      %v2348 = vld [vmem:[#allocation4 + $0x22] sm:$0xff]
      %v2349 = vld [vmem:[#allocation4 + $0x32] sm:$0xff]
      %v2350 = vld [vmem:[#allocation4 + $0x3a] sm:$0xff]
      %v2351 = vld [vmem:[#allocation4 + $0x4a] sm:$0xff]
      %v2352 = vld [vmem:[#allocation4 + $0x52] sm:$0xff]
      %v2353 = vld [vmem:[#allocation4 + $0x62] sm:$0xff]
      %v2354 = vld [vmem:[#allocation4 + $0x6a] sm:$0xff]
      %v2355 = vld [vmem:[#allocation4 + $0x7a] sm:$0xff]
      %v2356 = vld [vmem:[#allocation4 + $0x82] sm:$0xff]
      %v2357 = vld [vmem:[#allocation4 + $0x92] sm:$0xff]
      %v2358 = vld [vmem:[#allocation4 + $0x9a] sm:$0xff]
      %v2359 = vld [vmem:[#allocation4 + $0xaa] sm:$0xff]
      %v2360 = vld [vmem:[#allocation4 + $0xb2] sm:$0xff]
      %v2361 = vld [vmem:[#allocation4 + $0xc2] sm:$0xff]
      %v2362 = vld [vmem:[#allocation4 + $0xca] sm:$0xff]
      %v2363 = vld [vmem:[#allocation4 + $0xda] sm:$0xff]
      %v2364 = vld [vmem:[#allocation4 + $0xe2] sm:$0xff]
      %v2365 = vld [vmem:[#allocation4 + $0xf2] sm:$0xff]
      %v2366 = vld [vmem:[#allocation4 + $0xfa] sm:$0xff]
      %v2367 = vld [vmem:[#allocation4 + $0x10a] sm:$0xff]
      %v2368 = vld [vmem:[#allocation4 + $0x112] sm:$0xff]
      %v2369 = vld [vmem:[#allocation4 + $0x122] sm:$0xff]
      %v2370 = vld [vmem:[#allocation4 + $0x12a] sm:$0xff]
      %v2371 = vld [vmem:[#allocation4 + $0x13a] sm:$0xff]
      %v2372 = vld [vmem:[#allocation4 + $0x142] sm:$0xff]
      %v2373 = vld [vmem:[#allocation4 + $0x152] sm:$0xff]
      %v2374 = vld [vmem:[#allocation4 + $0x15a] sm:$0xff]
      %v2375 = vld [vmem:[#allocation4 + $0x16a] sm:$0xff]
      %v2376 = vld [vmem:[#allocation4 + $0x172] sm:$0xff]
      %v2377 = vpack.c.bf16 %v2346, %v2345
      %v2378 = vpack.c.bf16 %v2348, %v2347
      %v2379 = vpack.c.bf16 %v2350, %v2349
      %v2380 = vpack.c.bf16 %v2352, %v2351
      %v2381 = vpack.c.bf16 %v2354, %v2353
      %v2382 = vpack.c.bf16 %v2356, %v2355
      %v2383 = vpack.c.bf16 %v2358, %v2357
      %v2384 = vpack.c.bf16 %v2360, %v2359
      %v2385 = vpack.c.bf16 %v2362, %v2361
      %v2386 = vpack.c.bf16 %v2364, %v2363
      %v2387 = vpack.c.bf16 %v2366, %v2365
      %v2388 = vpack.c.bf16 %v2368, %v2367
      %v2389 = vpack.c.bf16 %v2370, %v2369
      %v2390 = vpack.c.bf16 %v2372, %v2371
      %v2391 = vpack.c.bf16 %v2374, %v2373
      %v2392 = vpack.c.bf16 %v2376, %v2375
      %2409 = vrot.lane.b32.xlu0 %v2377, 16
      %v2410 = vpop.permute.xlu0 %2409
      %2411 = vrot.lane.b32.xlu0 %v2378, 16
      %v2412 = vpop.permute.xlu0 %2411
      %2413 = vrot.lane.b32.xlu0 %v2379, 16
      %v2414 = vpop.permute.xlu0 %2413
      %2415 = vrot.lane.b32.xlu0 %v2380, 16
      %v2416 = vpop.permute.xlu0 %2415
      %2417 = vrot.lane.b32.xlu0 %v2381, 16
      %v2418 = vpop.permute.xlu0 %2417
      %2419 = vrot.lane.b32.xlu0 %v2382, 16
      %v2420 = vpop.permute.xlu0 %2419
      %2421 = vrot.lane.b32.xlu0 %v2383, 16
      %v2422 = vpop.permute.xlu0 %2421
      %2423 = vrot.lane.b32.xlu0 %v2384, 16
      %v2424 = vpop.permute.xlu0 %2423
      %2425 = vrot.lane.b32.xlu0 %v2385, 16
      %v2426 = vpop.permute.xlu0 %2425
      %2427 = vrot.lane.b32.xlu0 %v2386, 16
      %v2428 = vpop.permute.xlu0 %2427
      %2429 = vrot.lane.b32.xlu0 %v2387, 16
      %v2430 = vpop.permute.xlu0 %2429
      %2431 = vrot.lane.b32.xlu0 %v2388, 16
      %v2432 = vpop.permute.xlu0 %2431
      %2433 = vrot.lane.b32.xlu0 %v2389, 16
      %v2434 = vpop.permute.xlu0 %2433
      %2435 = vrot.lane.b32.xlu0 %v2390, 16
      %v2436 = vpop.permute.xlu0 %2435
      %2437 = vrot.lane.b32.xlu0 %v2391, 16
      %v2438 = vpop.permute.xlu0 %2437
      %2439 = vrot.lane.b32.xlu0 %v2392, 16
      %v2440 = vpop.permute.xlu0 %2439
      %vm2457 = vcmask 195712
      %2458 = vst.msk [vmem:[#allocation5] sm:$0xff] %vm2457, %v2410
      %2459 = vst.msk [vmem:[#allocation5 + $0x8] sm:$0xff] %vm2457, %v2412
      %2460 = vst.msk [vmem:[#allocation5 + $0x10] sm:$0xff] %vm2457, %v2414
      %2461 = vst.msk [vmem:[#allocation5 + $0x18] sm:$0xff] %vm2457, %v2416
      %2462 = vst.msk [vmem:[#allocation5 + $0x20] sm:$0xff] %vm2457, %v2418
      %2463 = vst.msk [vmem:[#allocation5 + $0x28] sm:$0xff] %vm2457, %v2420
      %2464 = vst.msk [vmem:[#allocation5 + $0x30] sm:$0xff] %vm2457, %v2422
      %2465 = vst.msk [vmem:[#allocation5 + $0x38] sm:$0xff] %vm2457, %v2424
      %2466 = vst.msk [vmem:[#allocation5 + $0x40] sm:$0xff] %vm2457, %v2426
      %2467 = vst.msk [vmem:[#allocation5 + $0x48] sm:$0xff] %vm2457, %v2428
      %2468 = vst.msk [vmem:[#allocation5 + $0x50] sm:$0xff] %vm2457, %v2430
      %2469 = vst.msk [vmem:[#allocation5 + $0x58] sm:$0xff] %vm2457, %v2432
      %2470 = vst.msk [vmem:[#allocation5 + $0x60] sm:$0xff] %vm2457, %v2434
      %2471 = vst.msk [vmem:[#allocation5 + $0x68] sm:$0xff] %vm2457, %v2436
      %2472 = vst.msk [vmem:[#allocation5 + $0x70] sm:$0xff] %vm2457, %v2438
      %2473 = vst.msk [vmem:[#allocation5 + $0x78] sm:$0xff] %vm2457, %v2440
      %v2474 = vld [vmem:[%s2119] sm:$0xff]
      %v2475 = vld [vmem:[%s2119 + $0x8] sm:$0xff]
      %v2476 = vld [vmem:[%s2119 + $0x18] sm:$0xff]
      %v2477 = vld [vmem:[%s2119 + $0x20] sm:$0xff]
      %v2478 = vld [vmem:[%s2119 + $0x30] sm:$0xff]
      %v2479 = vld [vmem:[%s2119 + $0x38] sm:$0xff]
      %v2480 = vld [vmem:[%s2119 + $0x48] sm:$0xff]
      %v2481 = vld [vmem:[%s2119 + $0x50] sm:$0xff]
      %v2482 = vld [vmem:[%s2119 + $0x60] sm:$0xff]
      %v2483 = vld [vmem:[%s2119 + $0x68] sm:$0xff]
      %v2484 = vld [vmem:[%s2119 + $0x78] sm:$0xff]
      %v2485 = vld [vmem:[%s2119 + $0x80] sm:$0xff]
      %v2486 = vld [vmem:[%s2119 + $0x90] sm:$0xff]
      %v2487 = vld [vmem:[%s2119 + $0x98] sm:$0xff]
      %v2488 = vld [vmem:[%s2119 + $0xa8] sm:$0xff]
      %v2489 = vld [vmem:[%s2119 + $0xb0] sm:$0xff]
      %v2490 = vld [vmem:[%s2119 + $0xc0] sm:$0xff]
      %v2491 = vld [vmem:[%s2119 + $0xc8] sm:$0xff]
      %v2492 = vld [vmem:[%s2119 + $0xd8] sm:$0xff]
      %v2493 = vld [vmem:[%s2119 + $0xe0] sm:$0xff]
      %v2494 = vld [vmem:[%s2119 + $0xf0] sm:$0xff]
      %v2495 = vld [vmem:[%s2119 + $0xf8] sm:$0xff]
      %v2496 = vld [vmem:[%s2119 + $0x108] sm:$0xff]
      %v2497 = vld [vmem:[%s2119 + $0x110] sm:$0xff]
      %v2498 = vld [vmem:[%s2119 + $0x120] sm:$0xff]
      %v2499 = vld [vmem:[%s2119 + $0x128] sm:$0xff]
      %v2500 = vld [vmem:[%s2119 + $0x138] sm:$0xff]
      %v2501 = vld [vmem:[%s2119 + $0x140] sm:$0xff]
      %v2502 = vld [vmem:[%s2119 + $0x150] sm:$0xff]
      %v2503 = vld [vmem:[%s2119 + $0x158] sm:$0xff]
      %v2504 = vld [vmem:[%s2119 + $0x168] sm:$0xff]
      %v2505 = vld [vmem:[%s2119 + $0x170] sm:$0xff]
      %v2506 = vpack.c.bf16 %v2475, %v2474
      %v2507 = vpack.c.bf16 %v2477, %v2476
      %v2508 = vpack.c.bf16 %v2479, %v2478
      %v2509 = vpack.c.bf16 %v2481, %v2480
      %v2510 = vpack.c.bf16 %v2483, %v2482
      %v2511 = vpack.c.bf16 %v2485, %v2484
      %v2512 = vpack.c.bf16 %v2487, %v2486
      %v2513 = vpack.c.bf16 %v2489, %v2488
      %v2514 = vpack.c.bf16 %v2491, %v2490
      %v2515 = vpack.c.bf16 %v2493, %v2492
      %v2516 = vpack.c.bf16 %v2495, %v2494
      %v2517 = vpack.c.bf16 %v2497, %v2496
      %v2518 = vpack.c.bf16 %v2499, %v2498
      %v2519 = vpack.c.bf16 %v2501, %v2500
      %v2520 = vpack.c.bf16 %v2503, %v2502
      %v2521 = vpack.c.bf16 %v2505, %v2504
      %2538 = vrot.lane.b32.xlu0 %v2506, 24
      %v2539 = vpop.permute.xlu0 %2538
      %2540 = vrot.lane.b32.xlu0 %v2507, 24
      %v2541 = vpop.permute.xlu0 %2540
      %2542 = vrot.lane.b32.xlu0 %v2508, 24
      %v2543 = vpop.permute.xlu0 %2542
      %2544 = vrot.lane.b32.xlu0 %v2509, 24
      %v2545 = vpop.permute.xlu0 %2544
      %2546 = vrot.lane.b32.xlu0 %v2510, 24
      %v2547 = vpop.permute.xlu0 %2546
      %2548 = vrot.lane.b32.xlu0 %v2511, 24
      %v2549 = vpop.permute.xlu0 %2548
      %2550 = vrot.lane.b32.xlu0 %v2512, 24
      %v2551 = vpop.permute.xlu0 %2550
      %2552 = vrot.lane.b32.xlu0 %v2513, 24
      %v2553 = vpop.permute.xlu0 %2552
      %2554 = vrot.lane.b32.xlu0 %v2514, 24
      %v2555 = vpop.permute.xlu0 %2554
      %2556 = vrot.lane.b32.xlu0 %v2515, 24
      %v2557 = vpop.permute.xlu0 %2556
      %2558 = vrot.lane.b32.xlu0 %v2516, 24
      %v2559 = vpop.permute.xlu0 %2558
      %2560 = vrot.lane.b32.xlu0 %v2517, 24
      %v2561 = vpop.permute.xlu0 %2560
      %2562 = vrot.lane.b32.xlu0 %v2518, 24
      %v2563 = vpop.permute.xlu0 %2562
      %2564 = vrot.lane.b32.xlu0 %v2519, 24
      %v2565 = vpop.permute.xlu0 %2564
      %2566 = vrot.lane.b32.xlu0 %v2520, 24
      %v2567 = vpop.permute.xlu0 %2566
      %2568 = vrot.lane.b32.xlu0 %v2521, 24
      %v2569 = vpop.permute.xlu0 %2568
      %vm2586 = vcmask 261312
      %2587 = vst.msk [vmem:[#allocation5] sm:$0xff] %vm2586, %v2539
      %2588 = vst.msk [vmem:[#allocation5 + $0x8] sm:$0xff] %vm2586, %v2541
      %2589 = vst.msk [vmem:[#allocation5 + $0x10] sm:$0xff] %vm2586, %v2543
      %2590 = vst.msk [vmem:[#allocation5 + $0x18] sm:$0xff] %vm2586, %v2545
      %2591 = vst.msk [vmem:[#allocation5 + $0x20] sm:$0xff] %vm2586, %v2547
      %2592 = vst.msk [vmem:[#allocation5 + $0x28] sm:$0xff] %vm2586, %v2549
      %2593 = vst.msk [vmem:[#allocation5 + $0x30] sm:$0xff] %vm2586, %v2551
      %2594 = vst.msk [vmem:[#allocation5 + $0x38] sm:$0xff] %vm2586, %v2553
      %2595 = vst.msk [vmem:[#allocation5 + $0x40] sm:$0xff] %vm2586, %v2555
      %2596 = vst.msk [vmem:[#allocation5 + $0x48] sm:$0xff] %vm2586, %v2557
      %2597 = vst.msk [vmem:[#allocation5 + $0x50] sm:$0xff] %vm2586, %v2559
      %2598 = vst.msk [vmem:[#allocation5 + $0x58] sm:$0xff] %vm2586, %v2561
      %2599 = vst.msk [vmem:[#allocation5 + $0x60] sm:$0xff] %vm2586, %v2563
      %2600 = vst.msk [vmem:[#allocation5 + $0x68] sm:$0xff] %vm2586, %v2565
      %2601 = vst.msk [vmem:[#allocation5 + $0x70] sm:$0xff] %vm2586, %v2567
      %2602 = vst.msk [vmem:[#allocation5 + $0x78] sm:$0xff] %vm2586, %v2569
      %v2603 = vld [vmem:[%s2119 + $0x1] sm:$0xff]
      %v2604 = vld [vmem:[%s2119 + $0x9] sm:$0xff]
      %v2605 = vld [vmem:[%s2119 + $0x19] sm:$0xff]
      %v2606 = vld [vmem:[%s2119 + $0x21] sm:$0xff]
      %v2607 = vld [vmem:[%s2119 + $0x31] sm:$0xff]
      %v2608 = vld [vmem:[%s2119 + $0x39] sm:$0xff]
      %v2609 = vld [vmem:[%s2119 + $0x49] sm:$0xff]
      %v2610 = vld [vmem:[%s2119 + $0x51] sm:$0xff]
      %v2611 = vld [vmem:[%s2119 + $0x61] sm:$0xff]
      %v2612 = vld [vmem:[%s2119 + $0x69] sm:$0xff]
      %v2613 = vld [vmem:[%s2119 + $0x79] sm:$0xff]
      %v2614 = vld [vmem:[%s2119 + $0x81] sm:$0xff]
      %v2615 = vld [vmem:[%s2119 + $0x91] sm:$0xff]
      %v2616 = vld [vmem:[%s2119 + $0x99] sm:$0xff]
      %v2617 = vld [vmem:[%s2119 + $0xa9] sm:$0xff]
      %v2618 = vld [vmem:[%s2119 + $0xb1] sm:$0xff]
      %v2619 = vld [vmem:[%s2119 + $0xc1] sm:$0xff]
      %v2620 = vld [vmem:[%s2119 + $0xc9] sm:$0xff]
      %v2621 = vld [vmem:[%s2119 + $0xd9] sm:$0xff]
      %v2622 = vld [vmem:[%s2119 + $0xe1] sm:$0xff]
      %v2623 = vld [vmem:[%s2119 + $0xf1] sm:$0xff]
      %v2624 = vld [vmem:[%s2119 + $0xf9] sm:$0xff]
      %v2625 = vld [vmem:[%s2119 + $0x109] sm:$0xff]
      %v2626 = vld [vmem:[%s2119 + $0x111] sm:$0xff]
      %v2627 = vld [vmem:[%s2119 + $0x121] sm:$0xff]
      %v2628 = vld [vmem:[%s2119 + $0x129] sm:$0xff]
      %v2629 = vld [vmem:[%s2119 + $0x139] sm:$0xff]
      %v2630 = vld [vmem:[%s2119 + $0x141] sm:$0xff]
      %v2631 = vld [vmem:[%s2119 + $0x151] sm:$0xff]
      %v2632 = vld [vmem:[%s2119 + $0x159] sm:$0xff]
      %v2633 = vld [vmem:[%s2119 + $0x169] sm:$0xff]
      %v2634 = vld [vmem:[%s2119 + $0x171] sm:$0xff]
      %v2635 = vpack.c.bf16 %v2604, %v2603
      %v2636 = vpack.c.bf16 %v2606, %v2605
      %v2637 = vpack.c.bf16 %v2608, %v2607
      %v2638 = vpack.c.bf16 %v2610, %v2609
      %v2639 = vpack.c.bf16 %v2612, %v2611
      %v2640 = vpack.c.bf16 %v2614, %v2613
      %v2641 = vpack.c.bf16 %v2616, %v2615
      %v2642 = vpack.c.bf16 %v2618, %v2617
      %v2643 = vpack.c.bf16 %v2620, %v2619
      %v2644 = vpack.c.bf16 %v2622, %v2621
      %v2645 = vpack.c.bf16 %v2624, %v2623
      %v2646 = vpack.c.bf16 %v2626, %v2625
      %v2647 = vpack.c.bf16 %v2628, %v2627
      %v2648 = vpack.c.bf16 %v2630, %v2629
      %v2649 = vpack.c.bf16 %v2632, %v2631
      %v2650 = vpack.c.bf16 %v2634, %v2633
      %2667 = vrot.lane.b32.xlu0 %v2635, 32
      %v2668 = vpop.permute.xlu0 %2667
      %2669 = vrot.lane.b32.xlu0 %v2636, 32
      %v2670 = vpop.permute.xlu0 %2669
      %2671 = vrot.lane.b32.xlu0 %v2637, 32
      %v2672 = vpop.permute.xlu0 %2671
      %2673 = vrot.lane.b32.xlu0 %v2638, 32
      %v2674 = vpop.permute.xlu0 %2673
      %2675 = vrot.lane.b32.xlu0 %v2639, 32
      %v2676 = vpop.permute.xlu0 %2675
      %2677 = vrot.lane.b32.xlu0 %v2640, 32
      %v2678 = vpop.permute.xlu0 %2677
      %2679 = vrot.lane.b32.xlu0 %v2641, 32
      %v2680 = vpop.permute.xlu0 %2679
      %2681 = vrot.lane.b32.xlu0 %v2642, 32
      %v2682 = vpop.permute.xlu0 %2681
      %2683 = vrot.lane.b32.xlu0 %v2643, 32
      %v2684 = vpop.permute.xlu0 %2683
      %2685 = vrot.lane.b32.xlu0 %v2644, 32
      %v2686 = vpop.permute.xlu0 %2685
      %2687 = vrot.lane.b32.xlu0 %v2645, 32
      %v2688 = vpop.permute.xlu0 %2687
      %2689 = vrot.lane.b32.xlu0 %v2646, 32
      %v2690 = vpop.permute.xlu0 %2689
      %2691 = vrot.lane.b32.xlu0 %v2647, 32
      %v2692 = vpop.permute.xlu0 %2691
      %2693 = vrot.lane.b32.xlu0 %v2648, 32
      %v2694 = vpop.permute.xlu0 %2693
      %2695 = vrot.lane.b32.xlu0 %v2649, 32
      %v2696 = vpop.permute.xlu0 %2695
      %2697 = vrot.lane.b32.xlu0 %v2650, 32
      %v2698 = vpop.permute.xlu0 %2697
      %vm2715 = vcmask 326912
      %2716 = vst.msk [vmem:[#allocation5] sm:$0xff] %vm2715, %v2668
      %2717 = vst.msk [vmem:[#allocation5 + $0x8] sm:$0xff] %vm2715, %v2670
      %2718 = vst.msk [vmem:[#allocation5 + $0x10] sm:$0xff] %vm2715, %v2672
      %2719 = vst.msk [vmem:[#allocation5 + $0x18] sm:$0xff] %vm2715, %v2674
      %2720 = vst.msk [vmem:[#allocation5 + $0x20] sm:$0xff] %vm2715, %v2676
      %2721 = vst.msk [vmem:[#allocation5 + $0x28] sm:$0xff] %vm2715, %v2678
      %2722 = vst.msk [vmem:[#allocation5 + $0x30] sm:$0xff] %vm2715, %v2680
      %2723 = vst.msk [vmem:[#allocation5 + $0x38] sm:$0xff] %vm2715, %v2682
      %2724 = vst.msk [vmem:[#allocation5 + $0x40] sm:$0xff] %vm2715, %v2684
      %2725 = vst.msk [vmem:[#allocation5 + $0x48] sm:$0xff] %vm2715, %v2686
      %2726 = vst.msk [vmem:[#allocation5 + $0x50] sm:$0xff] %vm2715, %v2688
      %2727 = vst.msk [vmem:[#allocation5 + $0x58] sm:$0xff] %vm2715, %v2690
      %2728 = vst.msk [vmem:[#allocation5 + $0x60] sm:$0xff] %vm2715, %v2692
      %2729 = vst.msk [vmem:[#allocation5 + $0x68] sm:$0xff] %vm2715, %v2694
      %2730 = vst.msk [vmem:[#allocation5 + $0x70] sm:$0xff] %vm2715, %v2696
      %2731 = vst.msk [vmem:[#allocation5 + $0x78] sm:$0xff] %vm2715, %v2698
      %v2732 = vld [vmem:[%s2119 + $0x2] sm:$0xff]
      %v2733 = vld [vmem:[%s2119 + $0xa] sm:$0xff]
      %v2734 = vld [vmem:[%s2119 + $0x1a] sm:$0xff]
      %v2735 = vld [vmem:[%s2119 + $0x22] sm:$0xff]
      %v2736 = vld [vmem:[%s2119 + $0x32] sm:$0xff]
      %v2737 = vld [vmem:[%s2119 + $0x3a] sm:$0xff]
      %v2738 = vld [vmem:[%s2119 + $0x4a] sm:$0xff]
      %v2739 = vld [vmem:[%s2119 + $0x52] sm:$0xff]
      %v2740 = vld [vmem:[%s2119 + $0x62] sm:$0xff]
      %v2741 = vld [vmem:[%s2119 + $0x6a] sm:$0xff]
      %v2742 = vld [vmem:[%s2119 + $0x7a] sm:$0xff]
      %v2743 = vld [vmem:[%s2119 + $0x82] sm:$0xff]
      %v2744 = vld [vmem:[%s2119 + $0x92] sm:$0xff]
      %v2745 = vld [vmem:[%s2119 + $0x9a] sm:$0xff]
      %v2746 = vld [vmem:[%s2119 + $0xaa] sm:$0xff]
      %v2747 = vld [vmem:[%s2119 + $0xb2] sm:$0xff]
      %v2748 = vld [vmem:[%s2119 + $0xc2] sm:$0xff]
      %v2749 = vld [vmem:[%s2119 + $0xca] sm:$0xff]
      %v2750 = vld [vmem:[%s2119 + $0xda] sm:$0xff]
      %v2751 = vld [vmem:[%s2119 + $0xe2] sm:$0xff]
      %v2752 = vld [vmem:[%s2119 + $0xf2] sm:$0xff]
      %v2753 = vld [vmem:[%s2119 + $0xfa] sm:$0xff]
      %v2754 = vld [vmem:[%s2119 + $0x10a] sm:$0xff]
      %v2755 = vld [vmem:[%s2119 + $0x112] sm:$0xff]
      %v2756 = vld [vmem:[%s2119 + $0x122] sm:$0xff]
      %v2757 = vld [vmem:[%s2119 + $0x12a] sm:$0xff]
      %v2758 = vld [vmem:[%s2119 + $0x13a] sm:$0xff]
      %v2759 = vld [vmem:[%s2119 + $0x142] sm:$0xff]
      %v2760 = vld [vmem:[%s2119 + $0x152] sm:$0xff]
      %v2761 = vld [vmem:[%s2119 + $0x15a] sm:$0xff]
      %v2762 = vld [vmem:[%s2119 + $0x16a] sm:$0xff]
      %v2763 = vld [vmem:[%s2119 + $0x172] sm:$0xff]
      %v2764 = vpack.c.bf16 %v2733, %v2732
      %v2765 = vpack.c.bf16 %v2735, %v2734
      %v2766 = vpack.c.bf16 %v2737, %v2736
      %v2767 = vpack.c.bf16 %v2739, %v2738
      %v2768 = vpack.c.bf16 %v2741, %v2740
      %v2769 = vpack.c.bf16 %v2743, %v2742
      %v2770 = vpack.c.bf16 %v2745, %v2744
      %v2771 = vpack.c.bf16 %v2747, %v2746
      %v2772 = vpack.c.bf16 %v2749, %v2748
      %v2773 = vpack.c.bf16 %v2751, %v2750
      %v2774 = vpack.c.bf16 %v2753, %v2752
      %v2775 = vpack.c.bf16 %v2755, %v2754
      %v2776 = vpack.c.bf16 %v2757, %v2756
      %v2777 = vpack.c.bf16 %v2759, %v2758
      %v2778 = vpack.c.bf16 %v2761, %v2760
      %v2779 = vpack.c.bf16 %v2763, %v2762
      %2796 = vrot.lane.b32.xlu0 %v2764, 40
      %v2797 = vpop.permute.xlu0 %2796
      %2798 = vrot.lane.b32.xlu0 %v2765, 40
      %v2799 = vpop.permute.xlu0 %2798
      %2800 = vrot.lane.b32.xlu0 %v2766, 40
      %v2801 = vpop.permute.xlu0 %2800
      %2802 = vrot.lane.b32.xlu0 %v2767, 40
      %v2803 = vpop.permute.xlu0 %2802
      %2804 = vrot.lane.b32.xlu0 %v2768, 40
      %v2805 = vpop.permute.xlu0 %2804
      %2806 = vrot.lane.b32.xlu0 %v2769, 40
      %v2807 = vpop.permute.xlu0 %2806
      %2808 = vrot.lane.b32.xlu0 %v2770, 40
      %v2809 = vpop.permute.xlu0 %2808
      %2810 = vrot.lane.b32.xlu0 %v2771, 40
      %v2811 = vpop.permute.xlu0 %2810
      %2812 = vrot.lane.b32.xlu0 %v2772, 40
      %v2813 = vpop.permute.xlu0 %2812
      %2814 = vrot.lane.b32.xlu0 %v2773, 40
      %v2815 = vpop.permute.xlu0 %2814
      %2816 = vrot.lane.b32.xlu0 %v2774, 40
      %v2817 = vpop.permute.xlu0 %2816
      %2818 = vrot.lane.b32.xlu0 %v2775, 40
      %v2819 = vpop.permute.xlu0 %2818
      %2820 = vrot.lane.b32.xlu0 %v2776, 40
      %v2821 = vpop.permute.xlu0 %2820
      %2822 = vrot.lane.b32.xlu0 %v2777, 40
      %v2823 = vpop.permute.xlu0 %2822
      %2824 = vrot.lane.b32.xlu0 %v2778, 40
      %v2825 = vpop.permute.xlu0 %2824
      %2826 = vrot.lane.b32.xlu0 %v2779, 40
      %v2827 = vpop.permute.xlu0 %2826
      %vm2844 = vcmask 392512
      %2845 = vst.msk [vmem:[#allocation5] sm:$0xff] %vm2844, %v2797
      %2846 = vst.msk [vmem:[#allocation5 + $0x8] sm:$0xff] %vm2844, %v2799
      %2847 = vst.msk [vmem:[#allocation5 + $0x10] sm:$0xff] %vm2844, %v2801
      %2848 = vst.msk [vmem:[#allocation5 + $0x18] sm:$0xff] %vm2844, %v2803
      %2849 = vst.msk [vmem:[#allocation5 + $0x20] sm:$0xff] %vm2844, %v2805
      %2850 = vst.msk [vmem:[#allocation5 + $0x28] sm:$0xff] %vm2844, %v2807
      %2851 = vst.msk [vmem:[#allocation5 + $0x30] sm:$0xff] %vm2844, %v2809
      %2852 = vst.msk [vmem:[#allocation5 + $0x38] sm:$0xff] %vm2844, %v2811
      %2853 = vst.msk [vmem:[#allocation5 + $0x40] sm:$0xff] %vm2844, %v2813
      %2854 = vst.msk [vmem:[#allocation5 + $0x48] sm:$0xff] %vm2844, %v2815
      %2855 = vst.msk [vmem:[#allocation5 + $0x50] sm:$0xff] %vm2844, %v2817
      %2856 = vst.msk [vmem:[#allocation5 + $0x58] sm:$0xff] %vm2844, %v2819
      %2857 = vst.msk [vmem:[#allocation5 + $0x60] sm:$0xff] %vm2844, %v2821
      %2858 = vst.msk [vmem:[#allocation5 + $0x68] sm:$0xff] %vm2844, %v2823
      %2859 = vst.msk [vmem:[#allocation5 + $0x70] sm:$0xff] %vm2844, %v2825
      %2860 = vst.msk [vmem:[#allocation5 + $0x78] sm:$0xff] %vm2844, %v2827
      %s2861 = scalar_lea.vmem [#allocation4], 48
      %v2862 = vld [vmem:[%s2861] sm:$0xff]
      %v2863 = vld [vmem:[%s2861 + $0x8] sm:$0xff]
      %v2864 = vld [vmem:[%s2861 + $0x18] sm:$0xff]
      %v2865 = vld [vmem:[%s2861 + $0x20] sm:$0xff]
      %v2866 = vld [vmem:[%s2861 + $0x30] sm:$0xff]
      %v2867 = vld [vmem:[%s2861 + $0x38] sm:$0xff]
      %v2868 = vld [vmem:[%s2861 + $0x48] sm:$0xff]
      %v2869 = vld [vmem:[%s2861 + $0x50] sm:$0xff]
      %v2870 = vld [vmem:[%s2861 + $0x60] sm:$0xff]
      %v2871 = vld [vmem:[%s2861 + $0x68] sm:$0xff]
      %v2872 = vld [vmem:[%s2861 + $0x78] sm:$0xff]
      %v2873 = vld [vmem:[%s2861 + $0x80] sm:$0xff]
      %v2874 = vld [vmem:[%s2861 + $0x90] sm:$0xff]
      %v2875 = vld [vmem:[%s2861 + $0x98] sm:$0xff]
      %v2876 = vld [vmem:[%s2861 + $0xa8] sm:$0xff]
      %v2877 = vld [vmem:[%s2861 + $0xb0] sm:$0xff]
      %v2878 = vld [vmem:[%s2861 + $0xc0] sm:$0xff]
      %v2879 = vld [vmem:[%s2861 + $0xc8] sm:$0xff]
      %v2880 = vld [vmem:[%s2861 + $0xd8] sm:$0xff]
      %v2881 = vld [vmem:[%s2861 + $0xe0] sm:$0xff]
      %v2882 = vld [vmem:[%s2861 + $0xf0] sm:$0xff]
      %v2883 = vld [vmem:[%s2861 + $0xf8] sm:$0xff]
      %v2884 = vld [vmem:[%s2861 + $0x108] sm:$0xff]
      %v2885 = vld [vmem:[%s2861 + $0x110] sm:$0xff]
      %v2886 = vld [vmem:[%s2861 + $0x120] sm:$0xff]
      %v2887 = vld [vmem:[%s2861 + $0x128] sm:$0xff]
      %v2888 = vld [vmem:[%s2861 + $0x138] sm:$0xff]
      %v2889 = vld [vmem:[%s2861 + $0x140] sm:$0xff]
      %v2890 = vld [vmem:[%s2861 + $0x150] sm:$0xff]
      %v2891 = vld [vmem:[%s2861 + $0x158] sm:$0xff]
      %v2892 = vld [vmem:[%s2861 + $0x168] sm:$0xff]
      %v2893 = vld [vmem:[%s2861 + $0x170] sm:$0xff]
      %v2894 = vpack.c.bf16 %v2863, %v2862
      %v2895 = vpack.c.bf16 %v2865, %v2864
      %v2896 = vpack.c.bf16 %v2867, %v2866
      %v2897 = vpack.c.bf16 %v2869, %v2868
      %v2898 = vpack.c.bf16 %v2871, %v2870
      %v2899 = vpack.c.bf16 %v2873, %v2872
      %v2900 = vpack.c.bf16 %v2875, %v2874
      %v2901 = vpack.c.bf16 %v2877, %v2876
      %v2902 = vpack.c.bf16 %v2879, %v2878
      %v2903 = vpack.c.bf16 %v2881, %v2880
      %v2904 = vpack.c.bf16 %v2883, %v2882
      %v2905 = vpack.c.bf16 %v2885, %v2884
      %v2906 = vpack.c.bf16 %v2887, %v2886
      %v2907 = vpack.c.bf16 %v2889, %v2888
      %v2908 = vpack.c.bf16 %v2891, %v2890
      %v2909 = vpack.c.bf16 %v2893, %v2892
      %2926 = vrot.lane.b32.xlu0 %v2894, 48
      %v2927 = vpop.permute.xlu0 %2926
      %2928 = vrot.lane.b32.xlu0 %v2895, 48
      %v2929 = vpop.permute.xlu0 %2928
      %2930 = vrot.lane.b32.xlu0 %v2896, 48
      %v2931 = vpop.permute.xlu0 %2930
      %2932 = vrot.lane.b32.xlu0 %v2897, 48
      %v2933 = vpop.permute.xlu0 %2932
      %2934 = vrot.lane.b32.xlu0 %v2898, 48
      %v2935 = vpop.permute.xlu0 %2934
      %2936 = vrot.lane.b32.xlu0 %v2899, 48
      %v2937 = vpop.permute.xlu0 %2936
      %2938 = vrot.lane.b32.xlu0 %v2900, 48
      %v2939 = vpop.permute.xlu0 %2938
      %2940 = vrot.lane.b32.xlu0 %v2901, 48
      %v2941 = vpop.permute.xlu0 %2940
      %2942 = vrot.lane.b32.xlu0 %v2902, 48
      %v2943 = vpop.permute.xlu0 %2942
      %2944 = vrot.lane.b32.xlu0 %v2903, 48
      %v2945 = vpop.permute.xlu0 %2944
      %2946 = vrot.lane.b32.xlu0 %v2904, 48
      %v2947 = vpop.permute.xlu0 %2946
      %2948 = vrot.lane.b32.xlu0 %v2905, 48
      %v2949 = vpop.permute.xlu0 %2948
      %2950 = vrot.lane.b32.xlu0 %v2906, 48
      %v2951 = vpop.permute.xlu0 %2950
      %2952 = vrot.lane.b32.xlu0 %v2907, 48
      %v2953 = vpop.permute.xlu0 %2952
      %2954 = vrot.lane.b32.xlu0 %v2908, 48
      %v2955 = vpop.permute.xlu0 %2954
      %2956 = vrot.lane.b32.xlu0 %v2909, 48
      %v2957 = vpop.permute.xlu0 %2956
      %vm2974 = vcmask 458112
      %2975 = vst.msk [vmem:[#allocation5] sm:$0xff] %vm2974, %v2927
      %2976 = vst.msk [vmem:[#allocation5 + $0x8] sm:$0xff] %vm2974, %v2929
      %2977 = vst.msk [vmem:[#allocation5 + $0x10] sm:$0xff] %vm2974, %v2931
      %2978 = vst.msk [vmem:[#allocation5 + $0x18] sm:$0xff] %vm2974, %v2933
      %2979 = vst.msk [vmem:[#allocation5 + $0x20] sm:$0xff] %vm2974, %v2935
      %2980 = vst.msk [vmem:[#allocation5 + $0x28] sm:$0xff] %vm2974, %v2937
      %2981 = vst.msk [vmem:[#allocation5 + $0x30] sm:$0xff] %vm2974, %v2939
      %2982 = vst.msk [vmem:[#allocation5 + $0x38] sm:$0xff] %vm2974, %v2941
      %2983 = vst.msk [vmem:[#allocation5 + $0x40] sm:$0xff] %vm2974, %v2943
      %2984 = vst.msk [vmem:[#allocation5 + $0x48] sm:$0xff] %vm2974, %v2945
      %2985 = vst.msk [vmem:[#allocation5 + $0x50] sm:$0xff] %vm2974, %v2947
      %2986 = vst.msk [vmem:[#allocation5 + $0x58] sm:$0xff] %vm2974, %v2949
      %2987 = vst.msk [vmem:[#allocation5 + $0x60] sm:$0xff] %vm2974, %v2951
      %2988 = vst.msk [vmem:[#allocation5 + $0x68] sm:$0xff] %vm2974, %v2953
      %2989 = vst.msk [vmem:[#allocation5 + $0x70] sm:$0xff] %vm2974, %v2955
      %2990 = vst.msk [vmem:[#allocation5 + $0x78] sm:$0xff] %vm2974, %v2957
      %v2991 = vld [vmem:[%s2861 + $0x1] sm:$0xff]
      %v2992 = vld [vmem:[%s2861 + $0x9] sm:$0xff]
      %v2993 = vld [vmem:[%s2861 + $0x19] sm:$0xff]
      %v2994 = vld [vmem:[%s2861 + $0x21] sm:$0xff]
      %v2995 = vld [vmem:[%s2861 + $0x31] sm:$0xff]
      %v2996 = vld [vmem:[%s2861 + $0x39] sm:$0xff]
      %v2997 = vld [vmem:[%s2861 + $0x49] sm:$0xff]
      %v2998 = vld [vmem:[%s2861 + $0x51] sm:$0xff]
      %v2999 = vld [vmem:[%s2861 + $0x61] sm:$0xff]
      %v3000 = vld [vmem:[%s2861 + $0x69] sm:$0xff]
      %v3001 = vld [vmem:[%s2861 + $0x79] sm:$0xff]
      %v3002 = vld [vmem:[%s2861 + $0x81] sm:$0xff]
      %v3003 = vld [vmem:[%s2861 + $0x91] sm:$0xff]
      %v3004 = vld [vmem:[%s2861 + $0x99] sm:$0xff]
      %v3005 = vld [vmem:[%s2861 + $0xa9] sm:$0xff]
      %v3006 = vld [vmem:[%s2861 + $0xb1] sm:$0xff]
      %v3007 = vld [vmem:[%s2861 + $0xc1] sm:$0xff]
      %v3008 = vld [vmem:[%s2861 + $0xc9] sm:$0xff]
      %v3009 = vld [vmem:[%s2861 + $0xd9] sm:$0xff]
      %v3010 = vld [vmem:[%s2861 + $0xe1] sm:$0xff]
      %v3011 = vld [vmem:[%s2861 + $0xf1] sm:$0xff]
      %v3012 = vld [vmem:[%s2861 + $0xf9] sm:$0xff]
      %v3013 = vld [vmem:[%s2861 + $0x109] sm:$0xff]
      %v3014 = vld [vmem:[%s2861 + $0x111] sm:$0xff]
      %v3015 = vld [vmem:[%s2861 + $0x121] sm:$0xff]
      %v3016 = vld [vmem:[%s2861 + $0x129] sm:$0xff]
      %v3017 = vld [vmem:[%s2861 + $0x139] sm:$0xff]
      %v3018 = vld [vmem:[%s2861 + $0x141] sm:$0xff]
      %v3019 = vld [vmem:[%s2861 + $0x151] sm:$0xff]
      %v3020 = vld [vmem:[%s2861 + $0x159] sm:$0xff]
      %v3021 = vld [vmem:[%s2861 + $0x169] sm:$0xff]
      %v3022 = vld [vmem:[%s2861 + $0x171] sm:$0xff]
      %v3023 = vpack.c.bf16 %v2992, %v2991
      %v3024 = vpack.c.bf16 %v2994, %v2993
      %v3025 = vpack.c.bf16 %v2996, %v2995
      %v3026 = vpack.c.bf16 %v2998, %v2997
      %v3027 = vpack.c.bf16 %v3000, %v2999
      %v3028 = vpack.c.bf16 %v3002, %v3001
      %v3029 = vpack.c.bf16 %v3004, %v3003
      %v3030 = vpack.c.bf16 %v3006, %v3005
      %v3031 = vpack.c.bf16 %v3008, %v3007
      %v3032 = vpack.c.bf16 %v3010, %v3009
      %v3033 = vpack.c.bf16 %v3012, %v3011
      %v3034 = vpack.c.bf16 %v3014, %v3013
      %v3035 = vpack.c.bf16 %v3016, %v3015
      %v3036 = vpack.c.bf16 %v3018, %v3017
      %v3037 = vpack.c.bf16 %v3020, %v3019
      %v3038 = vpack.c.bf16 %v3022, %v3021
      %3055 = vrot.lane.b32.xlu0 %v3023, 56
      %v3056 = vpop.permute.xlu0 %3055
      %3057 = vrot.lane.b32.xlu0 %v3024, 56
      %v3058 = vpop.permute.xlu0 %3057
      %3059 = vrot.lane.b32.xlu0 %v3025, 56
      %v3060 = vpop.permute.xlu0 %3059
      %3061 = vrot.lane.b32.xlu0 %v3026, 56
      %v3062 = vpop.permute.xlu0 %3061
      %3063 = vrot.lane.b32.xlu0 %v3027, 56
      %v3064 = vpop.permute.xlu0 %3063
      %3065 = vrot.lane.b32.xlu0 %v3028, 56
      %v3066 = vpop.permute.xlu0 %3065
      %3067 = vrot.lane.b32.xlu0 %v3029, 56
      %v3068 = vpop.permute.xlu0 %3067
      %3069 = vrot.lane.b32.xlu0 %v3030, 56
      %v3070 = vpop.permute.xlu0 %3069
      %3071 = vrot.lane.b32.xlu0 %v3031, 56
      %v3072 = vpop.permute.xlu0 %3071
      %3073 = vrot.lane.b32.xlu0 %v3032, 56
      %v3074 = vpop.permute.xlu0 %3073
      %3075 = vrot.lane.b32.xlu0 %v3033, 56
      %v3076 = vpop.permute.xlu0 %3075
      %3077 = vrot.lane.b32.xlu0 %v3034, 56
      %v3078 = vpop.permute.xlu0 %3077
      %3079 = vrot.lane.b32.xlu0 %v3035, 56
      %v3080 = vpop.permute.xlu0 %3079
      %3081 = vrot.lane.b32.xlu0 %v3036, 56
      %v3082 = vpop.permute.xlu0 %3081
      %3083 = vrot.lane.b32.xlu0 %v3037, 56
      %v3084 = vpop.permute.xlu0 %3083
      %3085 = vrot.lane.b32.xlu0 %v3038, 56
      %v3086 = vpop.permute.xlu0 %3085
      %vm3103 = vcmask 523712
      %3104 = vst.msk [vmem:[#allocation5] sm:$0xff] %vm3103, %v3056
      %3105 = vst.msk [vmem:[#allocation5 + $0x8] sm:$0xff] %vm3103, %v3058
      %3106 = vst.msk [vmem:[#allocation5 + $0x10] sm:$0xff] %vm3103, %v3060
      %3107 = vst.msk [vmem:[#allocation5 + $0x18] sm:$0xff] %vm3103, %v3062
      %3108 = vst.msk [vmem:[#allocation5 + $0x20] sm:$0xff] %vm3103, %v3064
      %3109 = vst.msk [vmem:[#allocation5 + $0x28] sm:$0xff] %vm3103, %v3066
      %3110 = vst.msk [vmem:[#allocation5 + $0x30] sm:$0xff] %vm3103, %v3068
      %3111 = vst.msk [vmem:[#allocation5 + $0x38] sm:$0xff] %vm3103, %v3070
      %3112 = vst.msk [vmem:[#allocation5 + $0x40] sm:$0xff] %vm3103, %v3072
      %3113 = vst.msk [vmem:[#allocation5 + $0x48] sm:$0xff] %vm3103, %v3074
      %3114 = vst.msk [vmem:[#allocation5 + $0x50] sm:$0xff] %vm3103, %v3076
      %3115 = vst.msk [vmem:[#allocation5 + $0x58] sm:$0xff] %vm3103, %v3078
      %3116 = vst.msk [vmem:[#allocation5 + $0x60] sm:$0xff] %vm3103, %v3080
      %3117 = vst.msk [vmem:[#allocation5 + $0x68] sm:$0xff] %vm3103, %v3082
      %3118 = vst.msk [vmem:[#allocation5 + $0x70] sm:$0xff] %vm3103, %v3084
      %3119 = vst.msk [vmem:[#allocation5 + $0x78] sm:$0xff] %vm3103, %v3086
      %v3120 = vld [vmem:[%s2861 + $0x2] sm:$0xff]
      %v3121 = vld [vmem:[%s2861 + $0xa] sm:$0xff]
      %v3122 = vld [vmem:[%s2861 + $0x1a] sm:$0xff]
      %v3123 = vld [vmem:[%s2861 + $0x22] sm:$0xff]
      %v3124 = vld [vmem:[%s2861 + $0x32] sm:$0xff]
      %v3125 = vld [vmem:[%s2861 + $0x3a] sm:$0xff]
      %v3126 = vld [vmem:[%s2861 + $0x4a] sm:$0xff]
      %v3127 = vld [vmem:[%s2861 + $0x52] sm:$0xff]
      %v3128 = vld [vmem:[%s2861 + $0x62] sm:$0xff]
      %v3129 = vld [vmem:[%s2861 + $0x6a] sm:$0xff]
      %v3130 = vld [vmem:[%s2861 + $0x7a] sm:$0xff]
      %v3131 = vld [vmem:[%s2861 + $0x82] sm:$0xff]
      %v3132 = vld [vmem:[%s2861 + $0x92] sm:$0xff]
      %v3133 = vld [vmem:[%s2861 + $0x9a] sm:$0xff]
      %v3134 = vld [vmem:[%s2861 + $0xaa] sm:$0xff]
      %v3135 = vld [vmem:[%s2861 + $0xb2] sm:$0xff]
      %v3136 = vld [vmem:[%s2861 + $0xc2] sm:$0xff]
      %v3137 = vld [vmem:[%s2861 + $0xca] sm:$0xff]
      %v3138 = vld [vmem:[%s2861 + $0xda] sm:$0xff]
      %v3139 = vld [vmem:[%s2861 + $0xe2] sm:$0xff]
      %v3140 = vld [vmem:[%s2861 + $0xf2] sm:$0xff]
      %v3141 = vld [vmem:[%s2861 + $0xfa] sm:$0xff]
      %v3142 = vld [vmem:[%s2861 + $0x10a] sm:$0xff]
      %v3143 = vld [vmem:[%s2861 + $0x112] sm:$0xff]
      %v3144 = vld [vmem:[%s2861 + $0x122] sm:$0xff]
      %v3145 = vld [vmem:[%s2861 + $0x12a] sm:$0xff]
      %v3146 = vld [vmem:[%s2861 + $0x13a] sm:$0xff]
      %v3147 = vld [vmem:[%s2861 + $0x142] sm:$0xff]
      %v3148 = vld [vmem:[%s2861 + $0x152] sm:$0xff]
      %v3149 = vld [vmem:[%s2861 + $0x15a] sm:$0xff]
      %v3150 = vld [vmem:[%s2861 + $0x16a] sm:$0xff]
      %v3151 = vld [vmem:[%s2861 + $0x172] sm:$0xff]
      %v3152 = vpack.c.bf16 %v3121, %v3120
      %v3153 = vpack.c.bf16 %v3123, %v3122
      %v3154 = vpack.c.bf16 %v3125, %v3124
      %v3155 = vpack.c.bf16 %v3127, %v3126
      %v3156 = vpack.c.bf16 %v3129, %v3128
      %v3157 = vpack.c.bf16 %v3131, %v3130
      %v3158 = vpack.c.bf16 %v3133, %v3132
      %v3159 = vpack.c.bf16 %v3135, %v3134
      %v3160 = vpack.c.bf16 %v3137, %v3136
      %v3161 = vpack.c.bf16 %v3139, %v3138
      %v3162 = vpack.c.bf16 %v3141, %v3140
      %v3163 = vpack.c.bf16 %v3143, %v3142
      %v3164 = vpack.c.bf16 %v3145, %v3144
      %v3165 = vpack.c.bf16 %v3147, %v3146
      %v3166 = vpack.c.bf16 %v3149, %v3148
      %v3167 = vpack.c.bf16 %v3151, %v3150
      %3184 = vrot.lane.b32.xlu0 %v3152, 64
      %v3185 = vpop.permute.xlu0 %3184
      %3186 = vrot.lane.b32.xlu0 %v3153, 64
      %v3187 = vpop.permute.xlu0 %3186
      %3188 = vrot.lane.b32.xlu0 %v3154, 64
      %v3189 = vpop.permute.xlu0 %3188
      %3190 = vrot.lane.b32.xlu0 %v3155, 64
      %v3191 = vpop.permute.xlu0 %3190
      %3192 = vrot.lane.b32.xlu0 %v3156, 64
      %v3193 = vpop.permute.xlu0 %3192
      %3194 = vrot.lane.b32.xlu0 %v3157, 64
      %v3195 = vpop.permute.xlu0 %3194
      %3196 = vrot.lane.b32.xlu0 %v3158, 64
      %v3197 = vpop.permute.xlu0 %3196
      %3198 = vrot.lane.b32.xlu0 %v3159, 64
      %v3199 = vpop.permute.xlu0 %3198
      %3200 = vrot.lane.b32.xlu0 %v3160, 64
      %v3201 = vpop.permute.xlu0 %3200
      %3202 = vrot.lane.b32.xlu0 %v3161, 64
      %v3203 = vpop.permute.xlu0 %3202
      %3204 = vrot.lane.b32.xlu0 %v3162, 64
      %v3205 = vpop.permute.xlu0 %3204
      %3206 = vrot.lane.b32.xlu0 %v3163, 64
      %v3207 = vpop.permute.xlu0 %3206
      %3208 = vrot.lane.b32.xlu0 %v3164, 64
      %v3209 = vpop.permute.xlu0 %3208
      %3210 = vrot.lane.b32.xlu0 %v3165, 64
      %v3211 = vpop.permute.xlu0 %3210
      %3212 = vrot.lane.b32.xlu0 %v3166, 64
      %v3213 = vpop.permute.xlu0 %3212
      %3214 = vrot.lane.b32.xlu0 %v3167, 64
      %v3215 = vpop.permute.xlu0 %3214
      %vm3232 = vcmask 589312
      %3233 = vst.msk [vmem:[#allocation5] sm:$0xff] %vm3232, %v3185
      %3234 = vst.msk [vmem:[#allocation5 + $0x8] sm:$0xff] %vm3232, %v3187
      %3235 = vst.msk [vmem:[#allocation5 + $0x10] sm:$0xff] %vm3232, %v3189
      %3236 = vst.msk [vmem:[#allocation5 + $0x18] sm:$0xff] %vm3232, %v3191
      %3237 = vst.msk [vmem:[#allocation5 + $0x20] sm:$0xff] %vm3232, %v3193
      %3238 = vst.msk [vmem:[#allocation5 + $0x28] sm:$0xff] %vm3232, %v3195
      %3239 = vst.msk [vmem:[#allocation5 + $0x30] sm:$0xff] %vm3232, %v3197
      %3240 = vst.msk [vmem:[#allocation5 + $0x38] sm:$0xff] %vm3232, %v3199
      %3241 = vst.msk [vmem:[#allocation5 + $0x40] sm:$0xff] %vm3232, %v3201
      %3242 = vst.msk [vmem:[#allocation5 + $0x48] sm:$0xff] %vm3232, %v3203
      %3243 = vst.msk [vmem:[#allocation5 + $0x50] sm:$0xff] %vm3232, %v3205
      %3244 = vst.msk [vmem:[#allocation5 + $0x58] sm:$0xff] %vm3232, %v3207
      %3245 = vst.msk [vmem:[#allocation5 + $0x60] sm:$0xff] %vm3232, %v3209
      %3246 = vst.msk [vmem:[#allocation5 + $0x68] sm:$0xff] %vm3232, %v3211
      %3247 = vst.msk [vmem:[#allocation5 + $0x70] sm:$0xff] %vm3232, %v3213
      %3248 = vst.msk [vmem:[#allocation5 + $0x78] sm:$0xff] %vm3232, %v3215
      %v3249 = vld [vmem:[#allocation5] sm:$0xff]
      %v3250 = vld [vmem:[#allocation5 + $0x8] sm:$0xff]
      %v3251 = vld [vmem:[#allocation5 + $0x10] sm:$0xff]
      %v3252 = vld [vmem:[#allocation5 + $0x18] sm:$0xff]
      %v3253 = vld [vmem:[#allocation5 + $0x20] sm:$0xff]
      %v3254 = vld [vmem:[#allocation5 + $0x28] sm:$0xff]
      %v3255 = vld [vmem:[#allocation5 + $0x30] sm:$0xff]
      %v3256 = vld [vmem:[#allocation5 + $0x38] sm:$0xff]
      %v3257 = vld [vmem:[#allocation5 + $0x40] sm:$0xff]
      %v3258 = vld [vmem:[#allocation5 + $0x48] sm:$0xff]
      %v3259 = vld [vmem:[#allocation5 + $0x50] sm:$0xff]
      %v3260 = vld [vmem:[#allocation5 + $0x58] sm:$0xff]
      %v3261 = vld [vmem:[#allocation5 + $0x60] sm:$0xff]
      %v3262 = vld [vmem:[#allocation5 + $0x68] sm:$0xff]
      %v3263 = vld [vmem:[#allocation5 + $0x70] sm:$0xff]
      %v3264 = vld [vmem:[#allocation5 + $0x78] sm:$0xff]
      %v3265 = vld [vmem:[%s7] sm:$0xf]
      %v3266 = vld [vmem:[%s7 + $0x4] sm:$0xf]
      %v3267 = vld [vmem:[%s7 + $0x8] sm:$0xf]
      %v3268 = vld [vmem:[%s7 + $0xc] sm:$0xf]
      %v3269 = vld [vmem:[%s7 + $0x10] sm:$0xf]
      %v3270 = vld [vmem:[%s7 + $0x14] sm:$0xf]
      %v3271 = vld [vmem:[%s7 + $0x18] sm:$0xf]
      %v3272 = vld [vmem:[%s7 + $0x1c] sm:$0xf]
      %v3273 = vld [vmem:[%s7 + $0x20] sm:$0xf]
      %v3274 = vld [vmem:[%s8] sm:$0x1]
      %v3276 = vlaneseq
      %v3277 = vshrl.u32 %v3276, 7
      %v3278 = vsub.s32 0, %v3277
      %v3279 = vrot.slane %v3274, %v3278
      %v3290 = vunpack.c.l.b16 %v3265
      %v3291 = vunpack.c.l.b16 %v3266
      %v3292 = vunpack.c.l.b16 %v3267
      %v3293 = vunpack.c.l.b16 %v3268
      %v3294 = vunpack.c.l.b16 %v3269
      %v3295 = vunpack.c.l.b16 %v3270
      %v3296 = vunpack.c.l.b16 %v3271
      %v3297 = vunpack.c.l.b16 %v3272
      %v3298 = vunpack.c.l.b16 %v3273
      %v3299 = vpack.c.b16 %v3291, %v3290
      %v3300 = vpack.c.b16 %v3293, %v3292
      %v3301 = vpack.c.b16 %v3295, %v3294
      %v3302 = vpack.c.b16 %v3297, %v3296
      %v3303 = vpack.c.b16 %v3298, %v3298
      %vm3308 = vcmask 588800
      %v3310 = vsel %vm3308, %v3249, 0
      %v3313 = vsel %vm3308, %v3250, 0
      %v3316 = vsel %vm3308, %v3251, 0
      %v3319 = vsel %vm3308, %v3252, 0
      %v3322 = vsel %vm3308, %v3253, 0
      %v3325 = vsel %vm3308, %v3254, 0
      %v3328 = vsel %vm3308, %v3255, 0
      %v3331 = vsel %vm3308, %v3256, 0
      %v3334 = vsel %vm3308, %v3257, 0
      %v3337 = vsel %vm3308, %v3258, 0
      %v3340 = vsel %vm3308, %v3259, 0
      %v3343 = vsel %vm3308, %v3260, 0
      %v3346 = vsel %vm3308, %v3261, 0
      %v3349 = vsel %vm3308, %v3262, 0
      %v3352 = vsel %vm3308, %v3263, 0
      %v3355 = vsel %vm3308, %v3264, 0
      %vm3357 = vcmask 1043456
      %v3359 = vsel %vm3357, %v3303, 0
      %3361 = vmatprep.subr.bf16.mxu0 0
      %3362 = vmatpush1.bf16.msra.mxu0 %v3299
      %3363 = vmatprep.subr.bf16.mxu0 0
      %3364 = vmatpush1.bf16.msra.mxu0 %v3300
      %3365 = vmatprep.subr.bf16.mxu0 0
      %3366 = vmatpush1.bf16.msra.mxu0 %v3301
      %3367 = vmatprep.subr.bf16.mxu0 0
      %3368 = vmatpush1.bf16.msra.mxu0 %v3302
      %3369 = vmatprep.subr.bf16.mxu0 0
      %3370 = vmatpush1.bf16.msra.mxu0 %v3359
      %3371 = vmatprep.subr.bf16.mxu0 0
      %3372 = vmatpush1.bf16.msra.mxu0 0
      %3373 = vmatprep.subr.bf16.mxu0 0
      %3374 = vmatpush1.bf16.msra.mxu0 0
      %3375 = vmatprep.subr.bf16.mxu0 0
      %3376 = vmatpush1.bf16.msra.mxu0 0
      %3377 = vmatprep.subr.bf16.mxu0 0
      %3378 = vmatpush1.bf16.msra.mxu0 0
      %3379 = vmatprep.subr.bf16.mxu0 0
      %3380 = vmatpush1.bf16.msra.mxu0 0
      %3381 = vmatprep.subr.bf16.mxu0 0
      %3382 = vmatpush1.bf16.msra.mxu0 0
      %3383 = vmatprep.subr.bf16.mxu0 0
      %3384 = vmatpush1.bf16.msra.mxu0 0
      %3385 = vmatprep.subr.bf16.mxu0 0
      %3386 = vmatpush1.bf16.msra.mxu0 0
      %3387 = vmatprep.subr.bf16.mxu0 0
      %3388 = vmatpush1.bf16.msra.mxu0 0
      %3389 = vmatprep.subr.bf16.mxu0 0
      %3390 = vmatpush1.bf16.msra.mxu0 0
      %3391 = vmatprep.subr.bf16.mxu0 0
      %3392 = vmatpush1.bf16.msra.mxu0 0
      %3393 = vmatprep.mubr.bf16.mxu0 0
      %3394 = vmatmul.mubr.bf16.gmra.mrb[0].mxu0 %v3310
      %v3395 = vpop.f32.mrb[0].mxu0
      %v3396 = vadd.f32 %v3279, %v3395
      %v3397 = vpop.f32.mrb[0].mxu0
      %v3398 = vpop.f32.mrb[0].mxu0
      %v3399 = vadd.f32 %v3279, %v3398
      %v3400 = vpop.f32.mrb[0].mxu0
      %3401 = vmatprep.mubr.bf16.mxu0 0
      %3402 = vmatmul.mubr.bf16.gmra.mrb[0].mxu0 %v3313
      %v3403 = vpop.f32.mrb[0].mxu0
      %v3404 = vadd.f32 %v3279, %v3403
      %v3405 = vpop.f32.mrb[0].mxu0
      %v3406 = vpop.f32.mrb[0].mxu0
      %v3407 = vadd.f32 %v3279, %v3406
      %v3408 = vpop.f32.mrb[0].mxu0
      %3409 = vmatprep.mubr.bf16.mxu0 0
      %3410 = vmatmul.mubr.bf16.gmra.mrb[0].mxu0 %v3316
      %v3411 = vpop.f32.mrb[0].mxu0
      %v3412 = vadd.f32 %v3279, %v3411
      %v3413 = vpop.f32.mrb[0].mxu0
      %v3414 = vpop.f32.mrb[0].mxu0
      %v3415 = vadd.f32 %v3279, %v3414
      %v3416 = vpop.f32.mrb[0].mxu0
      %3417 = vmatprep.mubr.bf16.mxu0 0
      %3418 = vmatmul.mubr.bf16.gmra.mrb[0].mxu0 %v3319
      %v3419 = vpop.f32.mrb[0].mxu0
      %v3420 = vadd.f32 %v3279, %v3419
      %v3421 = vpop.f32.mrb[0].mxu0
      %v3422 = vpop.f32.mrb[0].mxu0
      %v3423 = vadd.f32 %v3279, %v3422
      %v3424 = vpop.f32.mrb[0].mxu0
      %3425 = vmatprep.mubr.bf16.mxu0 0
      %3426 = vmatmul.mubr.bf16.gmra.mrb[0].mxu0 %v3322
      %v3427 = vpop.f32.mrb[0].mxu0
      %v3428 = vadd.f32 %v3279, %v3427
      %v3429 = vpop.f32.mrb[0].mxu0
      %v3430 = vpop.f32.mrb[0].mxu0
      %v3431 = vadd.f32 %v3279, %v3430
      %v3432 = vpop.f32.mrb[0].mxu0
      %3433 = vmatprep.mubr.bf16.mxu0 0
      %3434 = vmatmul.mubr.bf16.gmra.mrb[0].mxu0 %v3325
      %v3435 = vpop.f32.mrb[0].mxu0
      %v3436 = vadd.f32 %v3279, %v3435
      %v3437 = vpop.f32.mrb[0].mxu0
      %v3438 = vpop.f32.mrb[0].mxu0
      %v3439 = vadd.f32 %v3279, %v3438
      %v3440 = vpop.f32.mrb[0].mxu0
      %3441 = vmatprep.mubr.bf16.mxu0 0
      %3442 = vmatmul.mubr.bf16.gmra.mrb[0].mxu0 %v3328
      %v3443 = vpop.f32.mrb[0].mxu0
      %v3444 = vadd.f32 %v3279, %v3443
      %v3445 = vpop.f32.mrb[0].mxu0
      %v3446 = vpop.f32.mrb[0].mxu0
      %v3447 = vadd.f32 %v3279, %v3446
      %v3448 = vpop.f32.mrb[0].mxu0
      %3449 = vmatprep.mubr.bf16.mxu0 0
      %3450 = vmatmul.mubr.bf16.gmra.mrb[0].mxu0 %v3331
      %v3451 = vpop.f32.mrb[0].mxu0
      %v3452 = vadd.f32 %v3279, %v3451
      %v3453 = vpop.f32.mrb[0].mxu0
      %v3454 = vpop.f32.mrb[0].mxu0
      %v3455 = vadd.f32 %v3279, %v3454
      %v3456 = vpop.f32.mrb[0].mxu0
      %3457 = vmatprep.mubr.bf16.mxu0 0
      %3458 = vmatmul.mubr.bf16.gmra.mrb[0].mxu0 %v3334
      %v3459 = vpop.f32.mrb[0].mxu0
      %v3460 = vadd.f32 %v3279, %v3459
      %v3461 = vpop.f32.mrb[0].mxu0
      %v3462 = vpop.f32.mrb[0].mxu0
      %v3463 = vadd.f32 %v3279, %v3462
      %v3464 = vpop.f32.mrb[0].mxu0
      %3465 = vmatprep.mubr.bf16.mxu0 0
      %3466 = vmatmul.mubr.bf16.gmra.mrb[0].mxu0 %v3337
      %v3467 = vpop.f32.mrb[0].mxu0
      %v3468 = vadd.f32 %v3279, %v3467
      %v3469 = vpop.f32.mrb[0].mxu0
      %v3470 = vpop.f32.mrb[0].mxu0
      %v3471 = vadd.f32 %v3279, %v3470
      %v3472 = vpop.f32.mrb[0].mxu0
      %3473 = vmatprep.mubr.bf16.mxu0 0
      %3474 = vmatmul.mubr.bf16.gmra.mrb[0].mxu0 %v3340
      %v3475 = vpop.f32.mrb[0].mxu0
      %v3476 = vadd.f32 %v3279, %v3475
      %v3477 = vpop.f32.mrb[0].mxu0
      %v3478 = vpop.f32.mrb[0].mxu0
      %v3479 = vadd.f32 %v3279, %v3478
      %v3480 = vpop.f32.mrb[0].mxu0
      %3481 = vmatprep.mubr.bf16.mxu0 0
      %3482 = vmatmul.mubr.bf16.gmra.mrb[0].mxu0 %v3343
      %v3483 = vpop.f32.mrb[0].mxu0
      %v3484 = vadd.f32 %v3279, %v3483
      %v3485 = vpop.f32.mrb[0].mxu0
      %v3486 = vpop.f32.mrb[0].mxu0
      %v3487 = vadd.f32 %v3279, %v3486
      %v3488 = vpop.f32.mrb[0].mxu0
      %3489 = vmatprep.mubr.bf16.mxu0 0
      %3490 = vmatmul.mubr.bf16.gmra.mrb[0].mxu0 %v3346
      %v3491 = vpop.f32.mrb[0].mxu0
      %v3492 = vadd.f32 %v3279, %v3491
      %v3493 = vpop.f32.mrb[0].mxu0
      %v3494 = vpop.f32.mrb[0].mxu0
      %v3495 = vadd.f32 %v3279, %v3494
      %v3496 = vpop.f32.mrb[0].mxu0
      %3497 = vmatprep.mubr.bf16.mxu0 0
      %3498 = vmatmul.mubr.bf16.gmra.mrb[0].mxu0 %v3349
      %v3499 = vpop.f32.mrb[0].mxu0
      %v3500 = vadd.f32 %v3279, %v3499
      %v3501 = vpop.f32.mrb[0].mxu0
      %v3502 = vpop.f32.mrb[0].mxu0
      %v3503 = vadd.f32 %v3279, %v3502
      %v3504 = vpop.f32.mrb[0].mxu0
      %3505 = vmatprep.mubr.bf16.mxu0 0
      %3506 = vmatmul.mubr.bf16.gmra.mrb[0].mxu0 %v3352
      %v3507 = vpop.f32.mrb[0].mxu0
      %v3508 = vadd.f32 %v3279, %v3507
      %v3509 = vpop.f32.mrb[0].mxu0
      %v3510 = vpop.f32.mrb[0].mxu0
      %v3511 = vadd.f32 %v3279, %v3510
      %v3512 = vpop.f32.mrb[0].mxu0
      %3513 = vmatprep.mubr.bf16.mxu0 0
      %3514 = vmatmul.mubr.bf16.gmra.mrb[0].mxu0 %v3355
      %v3515 = vpop.f32.mrb[0].mxu0
      %v3516 = vadd.f32 %v3279, %v3515
      %v3517 = vpop.f32.mrb[0].mxu0
      %v3518 = vpop.f32.mrb[0].mxu0
      %v3519 = vadd.f32 %v3279, %v3518
      %v3520 = vpop.f32.mrb[0].mxu0
      %3521 = vdwg.mxu0
      %v3522 = vpack.c.bf16 %v389, %v388
      %v3523 = vpack.c.bf16 %v391, %v390
      %v3524 = vpack.c.bf16 %v393, %v392
      %v3525 = vpack.c.bf16 %v395, %v394
      %v3526 = vpack.c.bf16 %v397, %v396
      %v3527 = vpack.c.bf16 %v399, %v398
      %v3528 = vpack.c.bf16 %v401, %v400
      %v3529 = vpack.c.bf16 %v403, %v402
      %v3530 = vpack.c.bf16 %v405, %v404
      %v3531 = vpack.c.bf16 %v407, %v406
      %v3532 = vpack.c.bf16 %v409, %v408
      %v3533 = vpack.c.bf16 %v411, %v410
      %v3534 = vpack.c.bf16 %v413, %v412
      %v3535 = vpack.c.bf16 %v415, %v414
      %v3536 = vpack.c.bf16 %v417, %v416
      %v3537 = vpack.c.bf16 %v419, %v418
      %v3538 = vld [vmem:[%s9] sm:$0x3]
      %v3539 = vld [vmem:[%s10] sm:$0x1]
      %v3541 = vlaneseq
      %v3542 = vshrl.u32 %v3541, 7
      %v3543 = vsub.s32 0, %v3542
      %v3544 = vrot.slane %v3539, %v3543
      %v3547 = vsel %vm530, %v3522, 0
      %v3550 = vsel %vm530, %v3523, 0
      %v3553 = vsel %vm530, %v3524, 0
      %v3556 = vsel %vm530, %v3525, 0
      %v3559 = vsel %vm530, %v3526, 0
      %v3562 = vsel %vm530, %v3527, 0
      %v3565 = vsel %vm530, %v3528, 0
      %v3568 = vsel %vm530, %v3529, 0
      %v3571 = vsel %vm530, %v3530, 0
      %v3574 = vsel %vm530, %v3531, 0
      %v3577 = vsel %vm530, %v3532, 0
      %v3580 = vsel %vm530, %v3533, 0
      %v3583 = vsel %vm530, %v3534, 0
      %v3586 = vsel %vm530, %v3535, 0
      %v3589 = vsel %vm530, %v3536, 0
      %v3592 = vsel %vm530, %v3537, 0
      %v3595 = vsel %vm1798, %v3538, 0
      %3597 = vmatprep.subr.bf16.mxu0 0
      %3598 = vmatpush1.bf16.msra.mxu0 %v3595
      %3599 = vmatprep.subr.bf16.mxu0 0
      %3600 = vmatpush1.bf16.msra.mxu0 0
      %3601 = vmatprep.subr.bf16.mxu0 0
      %3602 = vmatpush1.bf16.msra.mxu0 0
      %3603 = vmatprep.subr.bf16.mxu0 0
      %3604 = vmatpush1.bf16.msra.mxu0 0
      %3605 = vmatprep.subr.bf16.mxu0 0
      %3606 = vmatpush1.bf16.msra.mxu0 0
      %3607 = vmatprep.subr.bf16.mxu0 0
      %3608 = vmatpush1.bf16.msra.mxu0 0
      %3609 = vmatprep.subr.bf16.mxu0 0
      %3610 = vmatpush1.bf16.msra.mxu0 0
      %3611 = vmatprep.subr.bf16.mxu0 0
      %3612 = vmatpush1.bf16.msra.mxu0 0
      %3613 = vmatprep.subr.bf16.mxu0 0
      %3614 = vmatpush1.bf16.msra.mxu0 0
      %3615 = vmatprep.subr.bf16.mxu0 0
      %3616 = vmatpush1.bf16.msra.mxu0 0
      %3617 = vmatprep.subr.bf16.mxu0 0
      %3618 = vmatpush1.bf16.msra.mxu0 0
      %3619 = vmatprep.subr.bf16.mxu0 0
      %3620 = vmatpush1.bf16.msra.mxu0 0
      %3621 = vmatprep.subr.bf16.mxu0 0
      %3622 = vmatpush1.bf16.msra.mxu0 0
      %3623 = vmatprep.subr.bf16.mxu0 0
      %3624 = vmatpush1.bf16.msra.mxu0 0
      %3625 = vmatprep.subr.bf16.mxu0 0
      %3626 = vmatpush1.bf16.msra.mxu0 0
      %3627 = vmatprep.subr.bf16.mxu0 0
      %3628 = vmatpush1.bf16.msra.mxu0 0
      %3629 = vmatprep.mubr.bf16.mxu0 0
      %3630 = vmatmul.mubr.bf16.gmra.mrb[0].mxu0 %v3547
      %v3631 = vpop.f32.mrb[0].mxu0
      %v3632 = vadd.f32 %v3544, %v3631
      %v3633 = vpop.f32.mrb[0].mxu0
      %v3634 = vpop.f32.mrb[0].mxu0
      %v3635 = vadd.f32 %v3544, %v3634
      %v3636 = vpop.f32.mrb[0].mxu0
      %3637 = vmatprep.mubr.bf16.mxu0 0
      %3638 = vmatmul.mubr.bf16.gmra.mrb[0].mxu0 %v3550
      %v3639 = vpop.f32.mrb[0].mxu0
      %v3640 = vadd.f32 %v3544, %v3639
      %v3641 = vpop.f32.mrb[0].mxu0
      %v3642 = vpop.f32.mrb[0].mxu0
      %v3643 = vadd.f32 %v3544, %v3642
      %v3644 = vpop.f32.mrb[0].mxu0
      %3645 = vmatprep.mubr.bf16.mxu0 0
      %3646 = vmatmul.mubr.bf16.gmra.mrb[0].mxu0 %v3553
      %v3647 = vpop.f32.mrb[0].mxu0
      %v3648 = vadd.f32 %v3544, %v3647
      %v3649 = vpop.f32.mrb[0].mxu0
      %v3650 = vpop.f32.mrb[0].mxu0
      %v3651 = vadd.f32 %v3544, %v3650
      %v3652 = vpop.f32.mrb[0].mxu0
      %3653 = vmatprep.mubr.bf16.mxu0 0
      %3654 = vmatmul.mubr.bf16.gmra.mrb[0].mxu0 %v3556
      %v3655 = vpop.f32.mrb[0].mxu0
      %v3656 = vadd.f32 %v3544, %v3655
      %v3657 = vpop.f32.mrb[0].mxu0
      %v3658 = vpop.f32.mrb[0].mxu0
      %v3659 = vadd.f32 %v3544, %v3658
      %v3660 = vpop.f32.mrb[0].mxu0
      %3661 = vmatprep.mubr.bf16.mxu0 0
      %3662 = vmatmul.mubr.bf16.gmra.mrb[0].mxu0 %v3559
      %v3663 = vpop.f32.mrb[0].mxu0
      %v3664 = vadd.f32 %v3544, %v3663
      %v3665 = vpop.f32.mrb[0].mxu0
      %v3666 = vpop.f32.mrb[0].mxu0
      %v3667 = vadd.f32 %v3544, %v3666
      %v3668 = vpop.f32.mrb[0].mxu0
      %3669 = vmatprep.mubr.bf16.mxu0 0
      %3670 = vmatmul.mubr.bf16.gmra.mrb[0].mxu0 %v3562
      %v3671 = vpop.f32.mrb[0].mxu0
      %v3672 = vadd.f32 %v3544, %v3671
      %v3673 = vpop.f32.mrb[0].mxu0
      %v3674 = vpop.f32.mrb[0].mxu0
      %v3675 = vadd.f32 %v3544, %v3674
      %v3676 = vpop.f32.mrb[0].mxu0
      %3677 = vmatprep.mubr.bf16.mxu0 0
      %3678 = vmatmul.mubr.bf16.gmra.mrb[0].mxu0 %v3565
      %v3679 = vpop.f32.mrb[0].mxu0
      %v3680 = vadd.f32 %v3544, %v3679
      %v3681 = vpop.f32.mrb[0].mxu0
      %v3682 = vpop.f32.mrb[0].mxu0
      %v3683 = vadd.f32 %v3544, %v3682
      %v3684 = vpop.f32.mrb[0].mxu0
      %3685 = vmatprep.mubr.bf16.mxu0 0
      %3686 = vmatmul.mubr.bf16.gmra.mrb[0].mxu0 %v3568
      %v3687 = vpop.f32.mrb[0].mxu0
      %v3688 = vadd.f32 %v3544, %v3687
      %v3689 = vpop.f32.mrb[0].mxu0
      %v3690 = vpop.f32.mrb[0].mxu0
      %v3691 = vadd.f32 %v3544, %v3690
      %v3692 = vpop.f32.mrb[0].mxu0
      %3693 = vmatprep.mubr.bf16.mxu0 0
      %3694 = vmatmul.mubr.bf16.gmra.mrb[0].mxu0 %v3571
      %v3695 = vpop.f32.mrb[0].mxu0
      %v3696 = vadd.f32 %v3544, %v3695
      %v3697 = vpop.f32.mrb[0].mxu0
      %v3698 = vpop.f32.mrb[0].mxu0
      %v3699 = vadd.f32 %v3544, %v3698
      %v3700 = vpop.f32.mrb[0].mxu0
      %3701 = vmatprep.mubr.bf16.mxu0 0
      %3702 = vmatmul.mubr.bf16.gmra.mrb[0].mxu0 %v3574
      %v3703 = vpop.f32.mrb[0].mxu0
      %v3704 = vadd.f32 %v3544, %v3703
      %v3705 = vpop.f32.mrb[0].mxu0
      %v3706 = vpop.f32.mrb[0].mxu0
      %v3707 = vadd.f32 %v3544, %v3706
      %v3708 = vpop.f32.mrb[0].mxu0
      %3709 = vmatprep.mubr.bf16.mxu0 0
      %3710 = vmatmul.mubr.bf16.gmra.mrb[0].mxu0 %v3577
      %v3711 = vpop.f32.mrb[0].mxu0
      %v3712 = vadd.f32 %v3544, %v3711
      %v3713 = vpop.f32.mrb[0].mxu0
      %v3714 = vpop.f32.mrb[0].mxu0
      %v3715 = vadd.f32 %v3544, %v3714
      %v3716 = vpop.f32.mrb[0].mxu0
      %3717 = vmatprep.mubr.bf16.mxu0 0
      %3718 = vmatmul.mubr.bf16.gmra.mrb[0].mxu0 %v3580
      %v3719 = vpop.f32.mrb[0].mxu0
      %v3720 = vadd.f32 %v3544, %v3719
      %v3721 = vpop.f32.mrb[0].mxu0
      %v3722 = vpop.f32.mrb[0].mxu0
      %v3723 = vadd.f32 %v3544, %v3722
      %v3724 = vpop.f32.mrb[0].mxu0
      %3725 = vmatprep.mubr.bf16.mxu0 0
      %3726 = vmatmul.mubr.bf16.gmra.mrb[0].mxu0 %v3583
      %v3727 = vpop.f32.mrb[0].mxu0
      %v3728 = vadd.f32 %v3544, %v3727
      %v3729 = vpop.f32.mrb[0].mxu0
      %v3730 = vpop.f32.mrb[0].mxu0
      %v3731 = vadd.f32 %v3544, %v3730
      %v3732 = vpop.f32.mrb[0].mxu0
      %3733 = vmatprep.mubr.bf16.mxu0 0
      %3734 = vmatmul.mubr.bf16.gmra.mrb[0].mxu0 %v3586
      %v3735 = vpop.f32.mrb[0].mxu0
      %v3736 = vadd.f32 %v3544, %v3735
      %v3737 = vpop.f32.mrb[0].mxu0
      %v3738 = vpop.f32.mrb[0].mxu0
      %v3739 = vadd.f32 %v3544, %v3738
      %v3740 = vpop.f32.mrb[0].mxu0
      %3741 = vmatprep.mubr.bf16.mxu0 0
      %3742 = vmatmul.mubr.bf16.gmra.mrb[0].mxu0 %v3589
      %v3743 = vpop.f32.mrb[0].mxu0
      %v3744 = vadd.f32 %v3544, %v3743
      %v3745 = vpop.f32.mrb[0].mxu0
      %v3746 = vpop.f32.mrb[0].mxu0
      %v3747 = vadd.f32 %v3544, %v3746
      %v3748 = vpop.f32.mrb[0].mxu0
      %3749 = vmatprep.mubr.bf16.mxu0 0
      %3750 = vmatmul.mubr.bf16.gmra.mrb[0].mxu0 %v3592
      %v3751 = vpop.f32.mrb[0].mxu0
      %v3752 = vadd.f32 %v3544, %v3751
      %v3753 = vpop.f32.mrb[0].mxu0
      %v3754 = vpop.f32.mrb[0].mxu0
      %v3755 = vadd.f32 %v3544, %v3754
      %v3756 = vpop.f32.mrb[0].mxu0
      %3757 = vdwg.mxu0
      %v3758 = vadd.f32 %v3396, %v3632
      %v3759 = vadd.f32 %v3399, %v3635
      %v3760 = vadd.f32 %v3404, %v3640
      %v3761 = vadd.f32 %v3407, %v3643
      %v3762 = vadd.f32 %v3412, %v3648
      %v3763 = vadd.f32 %v3415, %v3651
      %v3764 = vadd.f32 %v3420, %v3656
      %v3765 = vadd.f32 %v3423, %v3659
      %v3766 = vadd.f32 %v3428, %v3664
      %v3767 = vadd.f32 %v3431, %v3667
      %v3768 = vadd.f32 %v3436, %v3672
      %v3769 = vadd.f32 %v3439, %v3675
      %v3770 = vadd.f32 %v3444, %v3680
      %v3771 = vadd.f32 %v3447, %v3683
      %v3772 = vadd.f32 %v3452, %v3688
      %v3773 = vadd.f32 %v3455, %v3691
      %v3774 = vadd.f32 %v3460, %v3696
      %v3775 = vadd.f32 %v3463, %v3699
      %v3776 = vadd.f32 %v3468, %v3704
      %v3777 = vadd.f32 %v3471, %v3707
      %v3778 = vadd.f32 %v3476, %v3712
      %v3779 = vadd.f32 %v3479, %v3715
      %v3780 = vadd.f32 %v3484, %v3720
      %v3781 = vadd.f32 %v3487, %v3723
      %v3782 = vadd.f32 %v3492, %v3728
      %v3783 = vadd.f32 %v3495, %v3731
      %v3784 = vadd.f32 %v3500, %v3736
      %v3785 = vadd.f32 %v3503, %v3739
      %v3786 = vadd.f32 %v3508, %v3744
      %v3787 = vadd.f32 %v3511, %v3747
      %v3788 = vadd.f32 %v3516, %v3752
      %v3789 = vadd.f32 %v3519, %v3755
      %3790 = vst.msk [vmem:[%s386] sm:$0xff] %vm2073, %v3758
      %3791 = vst.msk [vmem:[%s386 + $0x8] sm:$0xff] %vm2073, %v3759
      %3792 = vst.msk [vmem:[%s386 + $0x10] sm:$0xff] %vm2073, %v3760
      %3793 = vst.msk [vmem:[%s386 + $0x18] sm:$0xff] %vm2073, %v3761
      %3794 = vst.msk [vmem:[%s386 + $0x20] sm:$0xff] %vm2073, %v3762
      %3795 = vst.msk [vmem:[%s386 + $0x28] sm:$0xff] %vm2073, %v3763
      %3796 = vst.msk [vmem:[%s386 + $0x30] sm:$0xff] %vm2073, %v3764
      %3797 = vst.msk [vmem:[%s386 + $0x38] sm:$0xff] %vm2073, %v3765
      %3798 = vst.msk [vmem:[%s386 + $0x40] sm:$0xff] %vm2073, %v3766
      %3799 = vst.msk [vmem:[%s386 + $0x48] sm:$0xff] %vm2073, %v3767
      %3800 = vst.msk [vmem:[%s386 + $0x50] sm:$0xff] %vm2073, %v3768
      %3801 = vst.msk [vmem:[%s386 + $0x58] sm:$0xff] %vm2073, %v3769
      %3802 = vst.msk [vmem:[%s386 + $0x60] sm:$0xff] %vm2073, %v3770
      %3803 = vst.msk [vmem:[%s386 + $0x68] sm:$0xff] %vm2073, %v3771
      %3804 = vst.msk [vmem:[%s386 + $0x70] sm:$0xff] %vm2073, %v3772
      %3805 = vst.msk [vmem:[%s386 + $0x78] sm:$0xff] %vm2073, %v3773
      %3806 = vst.msk [vmem:[%s386 + $0x80] sm:$0xff] %vm2073, %v3774
      %3807 = vst.msk [vmem:[%s386 + $0x88] sm:$0xff] %vm2073, %v3775
      %3808 = vst.msk [vmem:[%s386 + $0x90] sm:$0xff] %vm2073, %v3776
      %3809 = vst.msk [vmem:[%s386 + $0x98] sm:$0xff] %vm2073, %v3777
      %3810 = vst.msk [vmem:[%s386 + $0xa0] sm:$0xff] %vm2073, %v3778
      %3811 = vst.msk [vmem:[%s386 + $0xa8] sm:$0xff] %vm2073, %v3779
      %3812 = vst.msk [vmem:[%s386 + $0xb0] sm:$0xff] %vm2073, %v3780
      %3813 = vst.msk [vmem:[%s386 + $0xb8] sm:$0xff] %vm2073, %v3781
      %3814 = vst.msk [vmem:[%s386 + $0xc0] sm:$0xff] %vm2073, %v3782
      %3815 = vst.msk [vmem:[%s386 + $0xc8] sm:$0xff] %vm2073, %v3783
      %3816 = vst.msk [vmem:[%s386 + $0xd0] sm:$0xff] %vm2073, %v3784
      %3817 = vst.msk [vmem:[%s386 + $0xd8] sm:$0xff] %vm2073, %v3785
      %3818 = vst.msk [vmem:[%s386 + $0xe0] sm:$0xff] %vm2073, %v3786
      %3819 = vst.msk [vmem:[%s386 + $0xe8] sm:$0xff] %vm2073, %v3787
      %3820 = vst.msk [vmem:[%s386 + $0xf0] sm:$0xff] %vm2073, %v3788
      %3821 = vst.msk [vmem:[%s386 + $0xf8] sm:$0xff] %vm2073, %v3789
      %p3822 = scmp.lt.s32.totalorder %s22, 1
      %s3823 = scalar_select %p3822, %s22, 1
      %s3824 = smul.addr %s3823, 32
      %s3825 = smul.addr %s3824, 8
      %s3826 = scalar_lea.vmem %s11, %s3825
      // Predicated region
      $region65: #{tpu_custom_call.1} parent=63 // pred_check
        %p3827 = pneg %p276
      $region66: #{tpu_custom_call.1} parent=63 // pred_check_branch
        %3829 = sbr.rel (%p3827) target = $region68
      $region67: #{tpu_custom_call.1} parent=63 // pred_region
        _
      $region68: #{tpu_custom_call.1} parent=63 // pred_fallthru
        _
    $region64: #{tpu_custom_call.1} parent=5 // pred_fallthru
      _
    %p3830 = scmp.le.s32.totalorder 2, %s17
    // Predicated region
    $region69: #{tpu_custom_call.1} parent=5 // pred_check
      %p3831 = pneg %p3830
    $region70: #{tpu_custom_call.1} parent=5 // pred_check_branch
      %3833 = sbr.rel (%p3831) target = $region72
    $region71: #{tpu_custom_call.1} parent=5 // pred_region
      %s3834 = ssub.s32 %s17, 2
      // Predicated region
      $region73: #{tpu_custom_call.1} parent=71 // pred_check
        %p3835 = pneg %p282
      $region74: #{tpu_custom_call.1} parent=71 // pred_check_branch
        %3837 = sbr.rel (%p3835) target = $region76
      $region75: #{tpu_custom_call.1} parent=71 // pred_region
        %p3838 = scmp.lt.s32.totalorder %s23, 1
        %s3839 = scalar_select %p3838, %s23, 1
        %s3840 = smul.addr %s3839, 32
        %s3841 = smul.addr %s3840, 8
        %s3842 = scalar_lea.vmem %s11, %s3841
      $region76: #{tpu_custom_call.1} parent=71 // pred_fallthru
        _
    $region72: #{tpu_custom_call.1} parent=5 // pred_fallthru
      _
  $region6: #{tpu_custom_call.1} parent=0 // loop_footer
    %s21 = sadd.s32 1, %s17
  $region7: #{tpu_custom_call.1} parent=0 // loop_footer_branch
    %16 = sbr.rel target = $region3
  $region8: #{tpu_custom_call.1} parent=0 // loop_exit
    _

</llo_original>
